<compile_context>
chip_gen: v7x
topology: tpu7x:2x2x1
jax: 0.10.0
libtpu: 0.0.40
codegen_flags: <defaults>
</compile_context>

<pallas_src>
import math
from functools import partial

import jax
import jax.numpy as jnp
from jax.experimental import pallas as pl
from jax.experimental.pallas import tpu as pltpu

LN_EPS = 1e-5          # PyTorch LayerNorm default
MASK_VALUE = -1e30     # finite "-inf" for masked attention scores
_STAT_LANES = 128      # lane-broadcast width for online-softmax stats


# ----------------------------------------------------------------------------
# Generation-aware tiling / VMEM configuration.
# ----------------------------------------------------------------------------
def _vmem_capacity_bytes():
    try:
        cap = getattr(pltpu.get_tpu_info(), "vmem_capacity_bytes", None)
        if cap:
            return int(cap)
    except Exception:
        pass
    return 64 * 1024 * 1024          # conservative fallback (v7x-sized)


_VMEM_CAP = _vmem_capacity_bytes()
_SMALL_VMEM = _VMEM_CAP < 96 * 1024 * 1024           # v7x-class (64 MiB/core)
_VMEM_LIMIT = min(int(0.75 * _VMEM_CAP), 100 * 1024 * 1024)
_Q_TILE = 256 if _SMALL_VMEM else 512
_KV_TILE = 256 if _SMALL_VMEM else 512
_ROW_TILE = 256 if _SMALL_VMEM else 512
_F_TILE = 1024 if _SMALL_VMEM else 2048


# ----------------------------------------------------------------------------
# Fused multi-head attention + residual + LayerNorm kernel.
# Grid: (batch, q_tiles, kv_tiles); batch/q are "parallel", KV tiles are
# "arbitrary" (online-softmax state lives in VMEM scratch across KV steps).
# ----------------------------------------------------------------------------
def _mha_ln_kernel(xq_ref, xkv_ref, wq_ref, bq_ref, wkv_ref, bkv_ref,
                   wo_ref, bo_ref, g_ref, beta_ref, o_ref,
                   q_scr, acc_scr, m_scr, l_scr, *, nhead, seq_kv):
    TQ, D = xq_ref.shape
    TS = xkv_ref.shape[0]
    hd = D // nhead
    scale = 1.0 / math.sqrt(hd)      # PyTorch scales q by 1/sqrt(head_dim)
    kv_idx = pl.program_id(2)

    # ---- init (first KV tile): Q projection + online-softmax state ---------
    @pl.when(kv_idx == 0)
    def _():
        q = jnp.dot(xq_ref[...], wq_ref[...],
                    preferred_element_type=jnp.float32) + bq_ref[...]
        q = (q * scale).astype(jnp.bfloat16)                         # (TQ, D)
        # head-major layout so the KV loop never slices sub-128-lane columns
        q_scr[...] = jnp.stack(
            [q[:, h * hd:(h + 1) * hd] for h in range(nhead)], axis=0)
        acc_scr[...] = jnp.zeros(acc_scr.shape, acc_scr.dtype)
        m_scr[...] = jnp.full(m_scr.shape, -jnp.inf, m_scr.dtype)
        l_scr[...] = jnp.zeros(l_scr.shape, l_scr.dtype)

    # ---- fused K/V projection for this KV tile (one wide matmul) -----------
    kvp = jnp.dot(xkv_ref[...], wkv_ref[...],
                  preferred_element_type=jnp.float32) + bkv_ref[...]  # (TS, 2D)
    if seq_kv % TS != 0:
        # zero padded rows so garbage past the logical end can't create NaNs
        kv_pos = kv_idx * TS + jax.lax.broadcasted_iota(jnp.int32, (TS, 1), 0)
        kvp = jnp.where(kv_pos < seq_kv, kvp, 0.0)
    kvb = kvp.astype(jnp.bfloat16)                    # cast once per KV tile

    kh = jnp.stack([kvb[:, h * hd:(h + 1) * hd]
                    for h in range(nhead)], axis=0)               # (H, TS, hd)
    vh = jnp.stack([kvb[:, D + h * hd:D + (h + 1) * hd]
                    for h in range(nhead)], axis=0)               # (H, TS, hd)

    # ---- head-batched scores + online softmax -------------------------------
    s = jnp.einsum('hqd,hkd->hqk', q_scr[...], kh,
                   preferred_element_type=jnp.float32)            # (H, TQ, TS)
    if seq_kv % TS != 0:
        col = kv_idx * TS + jax.lax.broadcasted_iota(jnp.int32, (1, 1, TS), 2)
        s = jnp.where(col < seq_kv, s, MASK_VALUE)

    m_prev = m_scr[...]                                   # (H, TQ, 128) bcast
    m_new = jnp.maximum(m_prev, jnp.max(s, axis=-1, keepdims=True))
    m_cur = m_new[:, :, :1]                               # (H, TQ, 1)
    alpha = jnp.exp(m_prev[:, :, :1] - m_cur)             # (H, TQ, 1)
    p = jnp.exp(s - m_cur)                                # (H, TQ, TS) f32
    l_scr[...] = alpha * l_scr[...] + jnp.sum(p, axis=-1, keepdims=True)
    m_scr[...] = m_new

    pv = jnp.einsum('hqk,hkd->hqd', p.astype(jnp.bfloat16), vh,
                    preferred_element_type=jnp.float32)           # (H, TQ, hd)
    acc_scr[...] = alpha * acc_scr[...] + pv      # ONE whole-array update/step

    # ---- epilogue (last KV tile): normalize, out-proj, +residual, LayerNorm -
    @pl.when(kv_idx == pl.num_programs(2) - 1)
    def _():
        attn = (acc_scr[...] / l_scr[...][:, :, :1]).astype(jnp.bfloat16)
        attn2d = jnp.concatenate([attn[h] for h in range(nhead)], axis=-1)
        out = jnp.dot(attn2d, wo_ref[...],
                      preferred_element_type=jnp.float32) + bo_ref[...]
        z = xq_ref[...].astype(jnp.float32) + out          # residual add (f32)
        mean = jnp.mean(z, axis=-1, keepdims=True)
        var = jnp.mean(jnp.square(z - mean), axis=-1, keepdims=True)
        y = (z - mean) * jax.lax.rsqrt(var + LN_EPS) * g_ref[...] + beta_ref[...]
        o_ref[...] = y.astype(o_ref.dtype)


def mha_add_ln(xq, xkv, p, ln_g, ln_b, nhead, *, q_tile=None, kv_tile=None):
    """LayerNorm(xq + MultiheadAttention(xq, xkv, xkv)) over (B, T, D) bf16."""
    B, T, D = xq.shape
    S = xkv.shape[1]
    assert D % nhead == 0
    hd = D // nhead
    TQ = min(T, q_tile or _Q_TILE)
    TS = min(S, kv_tile or _KV_TILE)
    nq = pl.cdiv(T, TQ)
    nkv = pl.cdiv(S, TS)

    full = lambda shape: pl.BlockSpec(shape, lambda b, q, kv: (0, 0))
    flops = int(4 * B * T * D * D                 # Q + output projections
                + 4 * B * nq * S * D * D          # fused K/V projection
                + 4 * B * T * S * D)              # QK^T and P@V
    bytes_accessed = int(2 * (2 * B * T * D + B * nq * S * D)
                         + 2 * 4 * D * D + 4 * 8 * D)

    return pl.pallas_call(
        partial(_mha_ln_kernel, nhead=nhead, seq_kv=S),
        out_shape=jax.ShapeDtypeStruct((B, T, D), xq.dtype),
        grid_spec=pltpu.PrefetchScalarGridSpec(
            num_scalar_prefetch=0,
            grid=(B, nq, nkv),
            in_specs=[
                pl.BlockSpec((None, TQ, D), lambda b, q, kv: (b, q, 0)),   # queries / residual
                pl.BlockSpec((None, TS, D), lambda b, q, kv: (b, kv, 0)),  # KV tile
                full((D, D)), full((1, D)),           # wq, bq
                full((D, 2 * D)), full((1, 2 * D)),   # fused wkv, bkv
                full((D, D)), full((1, D)),           # wo, bo
                full((1, D)), full((1, D)),           # LayerNorm gamma, beta
            ],
            out_specs=pl.BlockSpec((None, TQ, D), lambda b, q, kv: (b, q, 0)),
            scratch_shapes=[
                pltpu.VMEM((nhead, TQ, hd), jnp.bfloat16),        # scaled Q (head-major)
                pltpu.VMEM((nhead, TQ, hd), jnp.float32),         # attention accumulator
                pltpu.VMEM((nhead, TQ, _STAT_LANES), jnp.float32),  # running max (lane-bcast)
                pltpu.VMEM((nhead, TQ, _STAT_LANES), jnp.float32),  # running sum (lane-bcast)
            ]),
        compiler_params=pltpu.CompilerParams(
            dimension_semantics=("parallel", "parallel", "arbitrary"),
            vmem_limit_bytes=_VMEM_LIMIT),
        cost_estimate=pl.CostEstimate(flops=flops,
                                      transcendentals=int(B * nhead * T * S),
                                      bytes_accessed=bytes_accessed),
    )(xq, xkv, p["wq"], p["bq"], p["wkv"], p["bkv"], p["wo"], p["bo"],
      ln_g, ln_b)


# ----------------------------------------------------------------------------
# Fused feed-forward + residual + LayerNorm kernel, tiled over rows and over
# the hidden dimension F (reduction axis, accumulated in VMEM scratch).
# ----------------------------------------------------------------------------
def _ffn_ln_kernel(x_ref, w1_ref, b1_ref, w2_ref, b2_ref, g_ref, beta_ref,
                   o_ref, acc_ref):
    f_idx = pl.program_id(1)

    @pl.when(f_idx == 0)
    def _():
        acc_ref[...] = jnp.zeros(acc_ref.shape, acc_ref.dtype)

    h = jnp.dot(x_ref[...], w1_ref[...],
                preferred_element_type=jnp.float32) + b1_ref[...]   # (TN, TF)
    h = jnp.maximum(h, 0.0).astype(jnp.bfloat16)    # relu, single cast for MXU
    acc_ref[...] += jnp.dot(h, w2_ref[...],
                            preferred_element_type=jnp.float32)     # (TN, D)

    @pl.when(f_idx == pl.num_programs(1) - 1)
    def _():
        z = x_ref[...].astype(jnp.float32) + acc_ref[...] + b2_ref[...]
        mean = jnp.mean(z, axis=-1, keepdims=True)
        var = jnp.mean(jnp.square(z - mean), axis=-1, keepdims=True)
        o_ref[...] = ((z - mean) * jax.lax.rsqrt(var + LN_EPS) * g_ref[...]
                      + beta_ref[...]).astype(o_ref.dtype)


def ffn_add_ln(x, p, ln_g, ln_b, *, out_dtype=None, row_tile=None, f_tile=None):
    """LayerNorm(x + linear2(relu(linear1(x)))) over (N, D) bf16 rows."""
    N, D = x.shape
    F = p["w1"].shape[1]
    TN = min(N, row_tile or _ROW_TILE)
    TF = min(F, f_tile or _F_TILE)
    out_dtype = out_dtype or x.dtype

    return pl.pallas_call(
        _ffn_ln_kernel,
        out_shape=jax.ShapeDtypeStruct((N, D), out_dtype),
        grid_spec=pltpu.PrefetchScalarGridSpec(
            num_scalar_prefetch=0,
            grid=(pl.cdiv(N, TN), pl.cdiv(F, TF)),
            in_specs=[pl.BlockSpec((TN, D), lambda i, f: (i, 0)),
                      pl.BlockSpec((D, TF), lambda i, f: (0, f)),    # w1 chunk
                      pl.BlockSpec((1, TF), lambda i, f: (0, f)),    # b1 chunk
                      pl.BlockSpec((TF, D), lambda i, f: (f, 0)),    # w2 chunk
                      pl.BlockSpec((1, D), lambda i, f: (0, 0)),     # b2
                      pl.BlockSpec((1, D), lambda i, f: (0, 0)),     # gamma
                      pl.BlockSpec((1, D), lambda i, f: (0, 0))],    # beta
            out_specs=pl.BlockSpec((TN, D), lambda i, f: (i, 0)),
            scratch_shapes=[pltpu.VMEM((TN, D), jnp.float32)]),
        compiler_params=pltpu.CompilerParams(
            dimension_semantics=("parallel", "arbitrary"),
            vmem_limit_bytes=_VMEM_LIMIT),
        cost_estimate=pl.CostEstimate(
            flops=int(4 * N * D * F),
            transcendentals=0,
            bytes_accessed=int(2 * N * D + 4 * D * F + 4 * N * D + 4 * (F + 3 * D))),
    )(x, p["w1"], p["b1"], p["w2"], p["b2"], ln_g, ln_b)


# ----------------------------------------------------------------------------
# Full decoder-layer forward
# ----------------------------------------------------------------------------
def transformer_decoder_layer(tgt, memory, params, nhead):
    # tgt: (T, B, D); memory: (S, B, D)   (PyTorch seq-first convention)
    T, B, D = tgt.shape
    out_dtype = tgt.dtype
    # bf16 activation streaming; transpose fuses with the cast in XLA.
    x = jnp.transpose(tgt, (1, 0, 2)).astype(jnp.bfloat16)        # (B, T, D)
    mem = jnp.transpose(memory, (1, 0, 2)).astype(jnp.bfloat16)   # (B, S, D)

    # self-attention  + residual + norm1 (one fused kernel)
    x = mha_add_ln(x, x, params["self_attn"],
                   params["ln1_g"], params["ln1_b"], nhead)
    # cross-attention + residual + norm2 (one fused kernel)
    x = mha_add_ln(x, mem, params["cross_attn"],
                   params["ln2_g"], params["ln2_b"], nhead)
    # feed-forward    + residual + norm3 (one fused kernel, f32 output)
    y = ffn_add_ln(x.reshape(B * T, D), params["ffn"],
                   params["ln3_g"], params["ln3_b"],
                   out_dtype=out_dtype).reshape(B, T, D)

    return jnp.transpose(y, (1, 0, 2))       # back to (T, B, D)


# ----------------------------------------------------------------------------
# Deterministic parameter construction (weights bf16 for the MXU, biases/LN f32)
# ----------------------------------------------------------------------------
def make_params(key, d_model, nhead, dim_feedforward):
    ctr = [0]

    def w(shape, scale=0.05):
        ctr[0] += 1
        k = jax.random.fold_in(key, ctr[0])
        return (scale * jax.random.normal(k, shape)).astype(jnp.float32)

    def attn_params():
        wq = w((d_model, d_model))
        wk = w((d_model, d_model))
        wv = w((d_model, d_model))
        bq = w((1, d_model))
        bk = w((1, d_model))
        bv = w((1, d_model))
        return {
            "wq": wq.astype(jnp.bfloat16),
            "bq": bq,
            # K and V projections fused into one (D, 2D) matmul weight
            "wkv": jnp.concatenate([wk, wv], axis=1).astype(jnp.bfloat16),
            "bkv": jnp.concatenate([bk, bv], axis=1),
            "wo": w((d_model, d_model)).astype(jnp.bfloat16),
            "bo": w((1, d_model)),
        }

    return {
        "self_attn": attn_params(),
        "cross_attn": attn_params(),
        "ffn": {
            "w1": w((d_model, dim_feedforward)).astype(jnp.bfloat16),
            "b1": w((1, dim_feedforward)),
            "w2": w((dim_feedforward, d_model)).astype(jnp.bfloat16),
            "b2": w((1, d_model)),
        },
        "ln1_g": jnp.ones((1, d_model), jnp.float32),
        "ln1_b": jnp.zeros((1, d_model), jnp.float32),
        "ln2_g": jnp.ones((1, d_model), jnp.float32),
        "ln2_b": jnp.zeros((1, d_model), jnp.float32),
        "ln3_g": jnp.ones((1, d_model), jnp.float32),
        "ln3_b": jnp.zeros((1, d_model), jnp.float32),
    }


if __name__ == "__main__":
    d_model = 32
    nhead = 4
    dim_feedforward = 64
    T, S, B = 8, 16, 2

    key = jax.random.PRNGKey(0)
    k_tgt, k_mem, k_par = jax.random.split(key, 3)
    tgt = jax.random.normal(k_tgt, (T, B, d_model), dtype=jnp.float32)
    memory = jax.random.normal(k_mem, (S, B, d_model), dtype=jnp.float32)
    params = make_params(k_par, d_model, nhead, dim_feedforward)

    fwd = jax.jit(partial(transformer_decoder_layer, nhead=nhead))
    out = fwd(tgt, memory, params)
    out = jax.block_until_ready(out)
    assert out.shape == (T, B, d_model)
    assert bool(jnp.all(jnp.isfinite(out)))
    print("KERNEL_OK")
</pallas_src>

<mosaic_0001>
module attributes {stable_mosaic.version = 11 : i64} {
  func.func @_mha_ln_kernel(%arg0: i32, %arg1: i32, %arg2: i32, %arg3: memref<1x8x32xbf16, #tpu.memory_space<vmem>>, %arg4: memref<1x16x32xbf16, #tpu.memory_space<vmem>>, %arg5: memref<32x32xbf16, #tpu.memory_space<vmem>>, %arg6: memref<1x32xf32, #tpu.memory_space<vmem>>, %arg7: memref<32x64xbf16, #tpu.memory_space<vmem>>, %arg8: memref<1x64xf32, #tpu.memory_space<vmem>>, %arg9: memref<32x32xbf16, #tpu.memory_space<vmem>>, %arg10: memref<1x32xf32, #tpu.memory_space<vmem>>, %arg11: memref<1x32xf32, #tpu.memory_space<vmem>>, %arg12: memref<1x32xf32, #tpu.memory_space<vmem>>, %arg13: memref<1x8x32xbf16, #tpu.memory_space<vmem>>, %arg14: memref<4x8x8xbf16, #tpu.memory_space<vmem>>, %arg15: memref<4x8x8xf32, #tpu.memory_space<vmem>>, %arg16: memref<4x8x128xf32, #tpu.memory_space<vmem>>, %arg17: memref<4x8x128xf32, #tpu.memory_space<vmem>>) attributes {dimension_semantics = [#tpu.dimension_semantics<parallel>, #tpu.dimension_semantics<parallel>, #tpu.dimension_semantics<arbitrary>], iteration_bounds = array<i64: 2, 1, 1>, scalar_prefetch = 0 : i64, scratch_operands = 4 : i64, tpu.core_type = #tpu.core_type<tc>, window_params = [{transform_indices = @transform_0, window_bounds = array<i64: 1, 8, 32>}, {transform_indices = @transform_1, window_bounds = array<i64: 1, 16, 32>}, {pipeline_mode = #tpu.pipeline_mode<synchronous>, transform_indices = @transform_2, window_bounds = array<i64: 32, 32>}, {pipeline_mode = #tpu.pipeline_mode<synchronous>, transform_indices = @transform_3, window_bounds = array<i64: 1, 32>}, {pipeline_mode = #tpu.pipeline_mode<synchronous>, transform_indices = @transform_4, window_bounds = array<i64: 32, 64>}, {pipeline_mode = #tpu.pipeline_mode<synchronous>, transform_indices = @transform_5, window_bounds = array<i64: 1, 64>}, {pipeline_mode = #tpu.pipeline_mode<synchronous>, transform_indices = @transform_6, window_bounds = array<i64: 32, 32>}, {pipeline_mode = #tpu.pipeline_mode<synchronous>, transform_indices = @transform_7, window_bounds = array<i64: 1, 32>}, {pipeline_mode = #tpu.pipeline_mode<synchronous>, transform_indices = @transform_8, window_bounds = array<i64: 1, 32>}, {pipeline_mode = #tpu.pipeline_mode<synchronous>, transform_indices = @transform_9, window_bounds = array<i64: 1, 32>}, {transform_indices = @transform_10, window_bounds = array<i64: 1, 8, 32>}]} {
    %c0_i32 = arith.constant 0 : i32
    %0 = arith.cmpi eq, %arg2, %c0_i32 : i32
    %1 = arith.extui %0 : i1 to i32
    %c0_i32_0 = arith.constant 0 : i32
    %2 = arith.cmpi ne, %1, %c0_i32_0 : i32
    scf.if %2 {
      %c0_34 = arith.constant 0 : index
      %c0_35 = arith.constant 0 : index
      %c0_36 = arith.constant 0 : index
      %62 = vector.load %arg3[%c0_34, %c0_35, %c0_36] : memref<1x8x32xbf16, #tpu.memory_space<vmem>>, vector<1x8x32xbf16>
      %63 = vector.shape_cast %62 : vector<1x8x32xbf16> to vector<8x32xbf16>
      %c0_37 = arith.constant 0 : index
      %c0_38 = arith.constant 0 : index
      %64 = vector.load %arg5[%c0_37, %c0_38] : memref<32x32xbf16, #tpu.memory_space<vmem>>, vector<32x32xbf16>
      %cst_39 = arith.constant dense<0.000000e+00> : vector<8x32xf32>
      %65 = tpu.matmul %63, %64, %cst_39 {dimension_numbers = #tpu.dot_dimension_numbers<[1], [0], [0], [1], [0, 0, 1, 1], [], []>} : vector<8x32xbf16>, vector<32x32xbf16>, vector<8x32xf32> -> vector<8x32xf32>
      %c0_40 = arith.constant 0 : index
      %c0_41 = arith.constant 0 : index
      %66 = vector.load %arg6[%c0_40, %c0_41] : memref<1x32xf32, #tpu.memory_space<vmem>>, vector<1x32xf32>
      %67 = vector.broadcast %66 : vector<1x32xf32> to vector<8x32xf32>
      %68 = arith.addf %65, %67 : vector<8x32xf32>
      %cst_42 = arith.constant 0.353553385 : f32
      %69 = vector.broadcast %cst_42 : f32 to vector<8x32xf32>
      %70 = arith.mulf %68, %69 : vector<8x32xf32>
      %71 = arith.truncf %70 : vector<8x32xf32> to vector<8x32xbf16>
      %72 = vector.extract_strided_slice %71 {offsets = [0, 0], sizes = [8, 8], strides = [1, 1]} : vector<8x32xbf16> to vector<8x8xbf16>
      %73 = vector.extract_strided_slice %71 {offsets = [0, 8], sizes = [8, 8], strides = [1, 1]} : vector<8x32xbf16> to vector<8x8xbf16>
      %74 = vector.extract_strided_slice %71 {offsets = [0, 16], sizes = [8, 8], strides = [1, 1]} : vector<8x32xbf16> to vector<8x8xbf16>
      %75 = vector.extract_strided_slice %71 {offsets = [0, 24], sizes = [8, 8], strides = [1, 1]} : vector<8x32xbf16> to vector<8x8xbf16>
      %76 = vector.shape_cast %72 : vector<8x8xbf16> to vector<1x8x8xbf16>
      %77 = vector.shape_cast %73 : vector<8x8xbf16> to vector<1x8x8xbf16>
      %78 = vector.shape_cast %74 : vector<8x8xbf16> to vector<1x8x8xbf16>
      %79 = vector.shape_cast %75 : vector<8x8xbf16> to vector<1x8x8xbf16>
      %80 = tpu.concatenate %76, %77, %78, %79 in 0 : vector<1x8x8xbf16>, vector<1x8x8xbf16>, vector<1x8x8xbf16>, vector<1x8x8xbf16> -> vector<4x8x8xbf16>
      %c0_43 = arith.constant 0 : index
      %c0_44 = arith.constant 0 : index
      %c0_45 = arith.constant 0 : index
      %81 = vector.load %arg14[%c0_43, %c0_44, %c0_45] : memref<4x8x8xbf16, #tpu.memory_space<vmem>>, vector<4x8x8xbf16>
      tpu.vector_store %arg14[%c0_43, %c0_44, %c0_45], %80 {strides = array<i32>} : memref<4x8x8xbf16, #tpu.memory_space<vmem>>, vector<4x8x8xbf16>,
      %cst_46 = arith.constant 0.000000e+00 : f32
      %82 = vector.broadcast %cst_46 : f32 to vector<4x8x8xf32>
      %c0_47 = arith.constant 0 : index
      %c0_48 = arith.constant 0 : index
      %c0_49 = arith.constant 0 : index
      %83 = vector.load %arg15[%c0_47, %c0_48, %c0_49] : memref<4x8x8xf32, #tpu.memory_space<vmem>>, vector<4x8x8xf32>
      tpu.vector_store %arg15[%c0_47, %c0_48, %c0_49], %82 {strides = array<i32>} : memref<4x8x8xf32, #tpu.memory_space<vmem>>, vector<4x8x8xf32>,
      %cst_50 = arith.constant 0xFF800000 : f32
      %84 = vector.broadcast %cst_50 : f32 to vector<4x8x128xf32>
      %c0_51 = arith.constant 0 : index
      %c0_52 = arith.constant 0 : index
      %c0_53 = arith.constant 0 : index
      %85 = vector.load %arg16[%c0_51, %c0_52, %c0_53] : memref<4x8x128xf32, #tpu.memory_space<vmem>>, vector<4x8x128xf32>
      tpu.vector_store %arg16[%c0_51, %c0_52, %c0_53], %84 {strides = array<i32>} : memref<4x8x128xf32, #tpu.memory_space<vmem>>, vector<4x8x128xf32>,
      %cst_54 = arith.constant 0.000000e+00 : f32
      %86 = vector.broadcast %cst_54 : f32 to vector<4x8x128xf32>
      %c0_55 = arith.constant 0 : index
      %c0_56 = arith.constant 0 : index
      %c0_57 = arith.constant 0 : index
      %87 = vector.load %arg17[%c0_55, %c0_56, %c0_57] : memref<4x8x128xf32, #tpu.memory_space<vmem>>, vector<4x8x128xf32>
      tpu.vector_store %arg17[%c0_55, %c0_56, %c0_57], %86 {strides = array<i32>} : memref<4x8x128xf32, #tpu.memory_space<vmem>>, vector<4x8x128xf32>,
    } else {
    }
    %c0 = arith.constant 0 : index
    %c0_1 = arith.constant 0 : index
    %c0_2 = arith.constant 0 : index
    %3 = vector.load %arg4[%c0, %c0_1, %c0_2] : memref<1x16x32xbf16, #tpu.memory_space<vmem>>, vector<1x16x32xbf16>
    %4 = vector.shape_cast %3 : vector<1x16x32xbf16> to vector<16x32xbf16>
    %c0_3 = arith.constant 0 : index
    %c0_4 = arith.constant 0 : index
    %5 = vector.load %arg7[%c0_3, %c0_4] : memref<32x64xbf16, #tpu.memory_space<vmem>>, vector<32x64xbf16>
    %cst = arith.constant dense<0.000000e+00> : vector<16x64xf32>
    %6 = tpu.matmul %4, %5, %cst {dimension_numbers = #tpu.dot_dimension_numbers<[1], [0], [0], [1], [0, 0, 1, 1], [], []>} : vector<16x32xbf16>, vector<32x64xbf16>, vector<16x64xf32> -> vector<16x64xf32>
    %c0_5 = arith.constant 0 : index
    %c0_6 = arith.constant 0 : index
    %7 = vector.load %arg8[%c0_5, %c0_6] : memref<1x64xf32, #tpu.memory_space<vmem>>, vector<1x64xf32>
    %8 = vector.broadcast %7 : vector<1x64xf32> to vector<16x64xf32>
    %9 = arith.addf %6, %8 : vector<16x64xf32>
    %10 = arith.truncf %9 : vector<16x64xf32> to vector<16x64xbf16>
    %11 = vector.extract_strided_slice %10 {offsets = [0, 0], sizes = [16, 8], strides = [1, 1]} : vector<16x64xbf16> to vector<16x8xbf16>
    %12 = vector.extract_strided_slice %10 {offsets = [0, 8], sizes = [16, 8], strides = [1, 1]} : vector<16x64xbf16> to vector<16x8xbf16>
    %13 = vector.extract_strided_slice %10 {offsets = [0, 16], sizes = [16, 8], strides = [1, 1]} : vector<16x64xbf16> to vector<16x8xbf16>
    %14 = vector.extract_strided_slice %10 {offsets = [0, 24], sizes = [16, 8], strides = [1, 1]} : vector<16x64xbf16> to vector<16x8xbf16>
    %15 = vector.shape_cast %11 : vector<16x8xbf16> to vector<1x16x8xbf16>
    %16 = vector.shape_cast %12 : vector<16x8xbf16> to vector<1x16x8xbf16>
    %17 = vector.shape_cast %13 : vector<16x8xbf16> to vector<1x16x8xbf16>
    %18 = vector.shape_cast %14 : vector<16x8xbf16> to vector<1x16x8xbf16>
    %19 = tpu.concatenate %15, %16, %17, %18 in 0 : vector<1x16x8xbf16>, vector<1x16x8xbf16>, vector<1x16x8xbf16>, vector<1x16x8xbf16> -> vector<4x16x8xbf16>
    %20 = vector.extract_strided_slice %10 {offsets = [0, 32], sizes = [16, 8], strides = [1, 1]} : vector<16x64xbf16> to vector<16x8xbf16>
    %21 = vector.extract_strided_slice %10 {offsets = [0, 40], sizes = [16, 8], strides = [1, 1]} : vector<16x64xbf16> to vector<16x8xbf16>
    %22 = vector.extract_strided_slice %10 {offsets = [0, 48], sizes = [16, 8], strides = [1, 1]} : vector<16x64xbf16> to vector<16x8xbf16>
    %23 = vector.extract_strided_slice %10 {offsets = [0, 56], sizes = [16, 8], strides = [1, 1]} : vector<16x64xbf16> to vector<16x8xbf16>
    %24 = vector.shape_cast %20 : vector<16x8xbf16> to vector<1x16x8xbf16>
    %25 = vector.shape_cast %21 : vector<16x8xbf16> to vector<1x16x8xbf16>
    %26 = vector.shape_cast %22 : vector<16x8xbf16> to vector<1x16x8xbf16>
    %27 = vector.shape_cast %23 : vector<16x8xbf16> to vector<1x16x8xbf16>
    %28 = tpu.concatenate %24, %25, %26, %27 in 0 : vector<1x16x8xbf16>, vector<1x16x8xbf16>, vector<1x16x8xbf16>, vector<1x16x8xbf16> -> vector<4x16x8xbf16>
    %c0_7 = arith.constant 0 : index
    %c0_8 = arith.constant 0 : index
    %c0_9 = arith.constant 0 : index
    %29 = vector.load %arg14[%c0_7, %c0_8, %c0_9] : memref<4x8x8xbf16, #tpu.memory_space<vmem>>, vector<4x8x8xbf16>
    "tpu.trace_start"() <{level = 10 : i32, message = "hqd,hkd->hqk"}> : () -> ()
    %cst_10 = arith.constant dense<0.000000e+00> : vector<4x8x16xf32>
    %30 = tpu.matmul %29, %19, %cst_10 {dimension_numbers = #tpu.dot_dimension_numbers<[2], [2], [1], [1], [0, 0, 0, 1, 1, 1], [0], [0]>} : vector<4x8x8xbf16>, vector<4x16x8xbf16>, vector<4x8x16xf32> -> vector<4x8x16xf32>
    "tpu.trace_stop"() : () -> ()
    %c0_11 = arith.constant 0 : index
    %c0_12 = arith.constant 0 : index
    %c0_13 = arith.constant 0 : index
    %31 = vector.load %arg16[%c0_11, %c0_12, %c0_13] : memref<4x8x128xf32, #tpu.memory_space<vmem>>, vector<4x8x128xf32>
    %cst_14 = arith.constant dense<0xFF800000> : vector<4x8xf32>
    %32 = vector.multi_reduction <maximumf>, %30, %cst_14 [2] : vector<4x8x16xf32> to vector<4x8xf32>
    %33 = vector.shape_cast %32 : vector<4x8xf32> to vector<4x8x1xf32>
    %34 = vector.broadcast %33 : vector<4x8x1xf32> to vector<4x8x128xf32>
    %35 = arith.maximumf %31, %34 : vector<4x8x128xf32>
    %36 = vector.extract_strided_slice %35 {offsets = [0, 0, 0], sizes = [4, 8, 1], strides = [1, 1, 1]} : vector<4x8x128xf32> to vector<4x8x1xf32>
    %37 = vector.extract_strided_slice %31 {offsets = [0, 0, 0], sizes = [4, 8, 1], strides = [1, 1, 1]} : vector<4x8x128xf32> to vector<4x8x1xf32>
    %38 = arith.subf %37, %36 : vector<4x8x1xf32>
    %39 = math.exp %38 : vector<4x8x1xf32>
    %40 = vector.broadcast %36 : vector<4x8x1xf32> to vector<4x8x16xf32>
    %41 = arith.subf %30, %40 : vector<4x8x16xf32>
    %42 = math.exp %41 : vector<4x8x16xf32>
    %c0_15 = arith.constant 0 : index
    %c0_16 = arith.constant 0 : index
    %c0_17 = arith.constant 0 : index
    %43 = vector.load %arg17[%c0_15, %c0_16, %c0_17] : memref<4x8x128xf32, #tpu.memory_space<vmem>>, vector<4x8x128xf32>
    %44 = vector.broadcast %39 : vector<4x8x1xf32> to vector<4x8x128xf32>
    %45 = arith.mulf %44, %43 : vector<4x8x128xf32>
    %cst_18 = arith.constant dense<0.000000e+00> : vector<4x8xf32>
    %46 = vector.multi_reduction <add>, %42, %cst_18 [2] : vector<4x8x16xf32> to vector<4x8xf32>
    %47 = vector.shape_cast %46 : vector<4x8xf32> to vector<4x8x1xf32>
    %48 = vector.broadcast %47 : vector<4x8x1xf32> to vector<4x8x128xf32>
    %49 = arith.addf %45, %48 : vector<4x8x128xf32>
    %c0_19 = arith.constant 0 : index
    %c0_20 = arith.constant 0 : index
    %c0_21 = arith.constant 0 : index
    %50 = vector.load %arg17[%c0_19, %c0_20, %c0_21] : memref<4x8x128xf32, #tpu.memory_space<vmem>>, vector<4x8x128xf32>
    tpu.vector_store %arg17[%c0_19, %c0_20, %c0_21], %49 {strides = array<i32>} : memref<4x8x128xf32, #tpu.memory_space<vmem>>, vector<4x8x128xf32>,
    %c0_22 = arith.constant 0 : index
    %c0_23 = arith.constant 0 : index
    %c0_24 = arith.constant 0 : index
    %51 = vector.load %arg16[%c0_22, %c0_23, %c0_24] : memref<4x8x128xf32, #tpu.memory_space<vmem>>, vector<4x8x128xf32>
    tpu.vector_store %arg16[%c0_22, %c0_23, %c0_24], %35 {strides = array<i32>} : memref<4x8x128xf32, #tpu.memory_space<vmem>>, vector<4x8x128xf32>,
    %52 = arith.truncf %42 : vector<4x8x16xf32> to vector<4x8x16xbf16>
    "tpu.trace_start"() <{level = 10 : i32, message = "hqk,hkd->hqd"}> : () -> ()
    %cst_25 = arith.constant dense<0.000000e+00> : vector<4x8x8xf32>
    %53 = tpu.matmul %52, %28, %cst_25 {dimension_numbers = #tpu.dot_dimension_numbers<[2], [1], [1], [2], [0, 0, 0, 1, 1, 2], [0], [0]>} : vector<4x8x16xbf16>, vector<4x16x8xbf16>, vector<4x8x8xf32> -> vector<4x8x8xf32>
    "tpu.trace_stop"() : () -> ()
    %c0_26 = arith.constant 0 : index
    %c0_27 = arith.constant 0 : index
    %c0_28 = arith.constant 0 : index
    %54 = vector.load %arg15[%c0_26, %c0_27, %c0_28] : memref<4x8x8xf32, #tpu.memory_space<vmem>>, vector<4x8x8xf32>
    %55 = vector.broadcast %39 : vector<4x8x1xf32> to vector<4x8x8xf32>
    %56 = arith.mulf %55, %54 : vector<4x8x8xf32>
    %57 = arith.addf %56, %53 : vector<4x8x8xf32>
    %c0_29 = arith.constant 0 : index
    %c0_30 = arith.constant 0 : index
    %c0_31 = arith.constant 0 : index
    %58 = vector.load %arg15[%c0_29, %c0_30, %c0_31] : memref<4x8x8xf32, #tpu.memory_space<vmem>>, vector<4x8x8xf32>
    tpu.vector_store %arg15[%c0_29, %c0_30, %c0_31], %57 {strides = array<i32>} : memref<4x8x8xf32, #tpu.memory_space<vmem>>, vector<4x8x8xf32>,
    %c0_i32_32 = arith.constant 0 : i32
    %59 = arith.cmpi eq, %arg2, %c0_i32_32 : i32
    %60 = arith.extui %59 : i1 to i32
    %c0_i32_33 = arith.constant 0 : i32
    %61 = arith.cmpi ne, %60, %c0_i32_33 : i32
    scf.if %61 {
      %c0_34 = arith.constant 0 : index
      %c0_35 = arith.constant 0 : index
      %c0_36 = arith.constant 0 : index
      %62 = vector.load %arg15[%c0_34, %c0_35, %c0_36] : memref<4x8x8xf32, #tpu.memory_space<vmem>>, vector<4x8x8xf32>
      %c0_37 = arith.constant 0 : index
      %c0_38 = arith.constant 0 : index
      %c0_39 = arith.constant 0 : index
      %63 = vector.load %arg17[%c0_37, %c0_38, %c0_39] : memref<4x8x128xf32, #tpu.memory_space<vmem>>, vector<4x8x128xf32>
      %64 = vector.extract_strided_slice %63 {offsets = [0, 0, 0], sizes = [4, 8, 1], strides = [1, 1, 1]} : vector<4x8x128xf32> to vector<4x8x1xf32>
      %65 = vector.broadcast %64 : vector<4x8x1xf32> to vector<4x8x8xf32>
      %66 = arith.divf %62, %65 : vector<4x8x8xf32>
      %67 = arith.truncf %66 : vector<4x8x8xf32> to vector<4x8x8xbf16>
      %68 = vector.extract_strided_slice %67 {offsets = [0, 0, 0], sizes = [1, 8, 8], strides = [1, 1, 1]} : vector<4x8x8xbf16> to vector<1x8x8xbf16>
      %69 = vector.shape_cast %68 : vector<1x8x8xbf16> to vector<8x8xbf16>
      %70 = vector.extract_strided_slice %67 {offsets = [1, 0, 0], sizes = [1, 8, 8], strides = [1, 1, 1]} : vector<4x8x8xbf16> to vector<1x8x8xbf16>
      %71 = vector.shape_cast %70 : vector<1x8x8xbf16> to vector<8x8xbf16>
      %72 = vector.extract_strided_slice %67 {offsets = [2, 0, 0], sizes = [1, 8, 8], strides = [1, 1, 1]} : vector<4x8x8xbf16> to vector<1x8x8xbf16>
      %73 = vector.shape_cast %72 : vector<1x8x8xbf16> to vector<8x8xbf16>
      %74 = vector.extract_strided_slice %67 {offsets = [3, 0, 0], sizes = [1, 8, 8], strides = [1, 1, 1]} : vector<4x8x8xbf16> to vector<1x8x8xbf16>
      %75 = vector.shape_cast %74 : vector<1x8x8xbf16> to vector<8x8xbf16>
      %76 = tpu.concatenate %69, %71, %73, %75 in 1 : vector<8x8xbf16>, vector<8x8xbf16>, vector<8x8xbf16>, vector<8x8xbf16> -> vector<8x32xbf16>
      %c0_40 = arith.constant 0 : index
      %c0_41 = arith.constant 0 : index
      %77 = vector.load %arg9[%c0_40, %c0_41] : memref<32x32xbf16, #tpu.memory_space<vmem>>, vector<32x32xbf16>
      %cst_42 = arith.constant dense<0.000000e+00> : vector<8x32xf32>
      %78 = tpu.matmul %76, %77, %cst_42 {dimension_numbers = #tpu.dot_dimension_numbers<[1], [0], [0], [1], [0, 0, 1, 1], [], []>} : vector<8x32xbf16>, vector<32x32xbf16>, vector<8x32xf32> -> vector<8x32xf32>
      %c0_43 = arith.constant 0 : index
      %c0_44 = arith.constant 0 : index
      %79 = vector.load %arg10[%c0_43, %c0_44] : memref<1x32xf32, #tpu.memory_space<vmem>>, vector<1x32xf32>
      %80 = vector.broadcast %79 : vector<1x32xf32> to vector<8x32xf32>
      %81 = arith.addf %78, %80 : vector<8x32xf32>
      %c0_45 = arith.constant 0 : index
      %c0_46 = arith.constant 0 : index
      %c0_47 = arith.constant 0 : index
      %82 = vector.load %arg3[%c0_45, %c0_46, %c0_47] : memref<1x8x32xbf16, #tpu.memory_space<vmem>>, vector<1x8x32xbf16>
      %83 = vector.shape_cast %82 : vector<1x8x32xbf16> to vector<8x32xbf16>
      %84 = arith.extf %83 : vector<8x32xbf16> to vector<8x32xf32>
      %85 = arith.addf %84, %81 : vector<8x32xf32>
      %cst_48 = arith.constant dense<0.000000e+00> : vector<8xf32>
      %86 = vector.multi_reduction <add>, %85, %cst_48 [1] : vector<8x32xf32> to vector<8xf32>
      %87 = vector.shape_cast %86 : vector<8xf32> to vector<8x1xf32>
      %cst_49 = arith.constant 3.200000e+01 : f32
      %88 = vector.broadcast %cst_49 : f32 to vector<8x1xf32>
      %89 = arith.divf %87, %88 : vector<8x1xf32>
      %90 = vector.broadcast %89 : vector<8x1xf32> to vector<8x32xf32>
      %91 = arith.subf %85, %90 : vector<8x32xf32>
      %92 = arith.mulf %91, %91 : vector<8x32xf32>
      %cst_50 = arith.constant dense<0.000000e+00> : vector<8xf32>
      %93 = vector.multi_reduction <add>, %92, %cst_50 [1] : vector<8x32xf32> to vector<8xf32>
      %94 = vector.shape_cast %93 : vector<8xf32> to vector<8x1xf32>
      %cst_51 = arith.constant 3.200000e+01 : f32
      %95 = vector.broadcast %cst_51 : f32 to vector<8x1xf32>
      %96 = arith.divf %94, %95 : vector<8x1xf32>
      %97 = vector.broadcast %89 : vector<8x1xf32> to vector<8x32xf32>
      %98 = arith.subf %85, %97 : vector<8x32xf32>
      %cst_52 = arith.constant 9.99999974E-6 : f32
      %99 = vector.broadcast %cst_52 : f32 to vector<8x1xf32>
      %100 = arith.addf %96, %99 : vector<8x1xf32>
      %101 = math.rsqrt %100 : vector<8x1xf32>
      %102 = vector.broadcast %101 : vector<8x1xf32> to vector<8x32xf32>
      %103 = arith.mulf %98, %102 : vector<8x32xf32>
      %c0_53 = arith.constant 0 : index
      %c0_54 = arith.constant 0 : index
      %104 = vector.load %arg11[%c0_53, %c0_54] : memref<1x32xf32, #tpu.memory_space<vmem>>, vector<1x32xf32>
      %105 = vector.broadcast %104 : vector<1x32xf32> to vector<8x32xf32>
      %106 = arith.mulf %103, %105 : vector<8x32xf32>
      %c0_55 = arith.constant 0 : index
      %c0_56 = arith.constant 0 : index
      %107 = vector.load %arg12[%c0_55, %c0_56] : memref<1x32xf32, #tpu.memory_space<vmem>>, vector<1x32xf32>
      %108 = vector.broadcast %107 : vector<1x32xf32> to vector<8x32xf32>
      %109 = arith.addf %106, %108 : vector<8x32xf32>
      %110 = arith.truncf %109 : vector<8x32xf32> to vector<8x32xbf16>
      %c0_57 = arith.constant 0 : index
      %c0_58 = arith.constant 0 : index
      %c0_59 = arith.constant 0 : index
      %111 = vector.load %arg13[%c0_57, %c0_58, %c0_59] : memref<1x8x32xbf16, #tpu.memory_space<vmem>>, vector<1x8x32xbf16>
      %112 = vector.shape_cast %111 : vector<1x8x32xbf16> to vector<8x32xbf16>
      %113 = vector.shape_cast %110 : vector<8x32xbf16> to vector<1x8x32xbf16>
      tpu.vector_store %arg13[%c0_57, %c0_58, %c0_59], %113 {strides = array<i32>} : memref<1x8x32xbf16, #tpu.memory_space<vmem>>, vector<1x8x32xbf16>,
    } else {
    }
    return
  }
  func.func @transform_0(%arg0: i32, %arg1: i32, %arg2: i32) -> (i32, i32, i32) {
    %c0_i32 = arith.constant 0 : i32
    %c0_i32_0 = arith.constant 0 : i32
    return %arg0, %arg1, %c0_i32 : i32, i32, i32
  }
  func.func @transform_1(%arg0: i32, %arg1: i32, %arg2: i32) -> (i32, i32, i32) {
    %c0_i32 = arith.constant 0 : i32
    %c0_i32_0 = arith.constant 0 : i32
    return %arg0, %arg2, %c0_i32 : i32, i32, i32
  }
  func.func @transform_2(%arg0: i32, %arg1: i32, %arg2: i32) -> (i32, i32) {
    %c0_i32 = arith.constant 0 : i32
    %c0_i32_0 = arith.constant 0 : i32
    %c0_i32_1 = arith.constant 0 : i32
    return %c0_i32, %c0_i32_0 : i32, i32
  }
  func.func @transform_3(%arg0: i32, %arg1: i32, %arg2: i32) -> (i32, i32) {
    %c0_i32 = arith.constant 0 : i32
    %c0_i32_0 = arith.constant 0 : i32
    %c0_i32_1 = arith.constant 0 : i32
    return %c0_i32, %c0_i32_0 : i32, i32
  }
  func.func @transform_4(%arg0: i32, %arg1: i32, %arg2: i32) -> (i32, i32) {
    %c0_i32 = arith.constant 0 : i32
    %c0_i32_0 = arith.constant 0 : i32
    %c0_i32_1 = arith.constant 0 : i32
    return %c0_i32, %c0_i32_0 : i32, i32
  }
  func.func @transform_5(%arg0: i32, %arg1: i32, %arg2: i32) -> (i32, i32) {
    %c0_i32 = arith.constant 0 : i32
    %c0_i32_0 = arith.constant 0 : i32
    %c0_i32_1 = arith.constant 0 : i32
    return %c0_i32, %c0_i32_0 : i32, i32
  }
  func.func @transform_6(%arg0: i32, %arg1: i32, %arg2: i32) -> (i32, i32) {
    %c0_i32 = arith.constant 0 : i32
    %c0_i32_0 = arith.constant 0 : i32
    %c0_i32_1 = arith.constant 0 : i32
    return %c0_i32, %c0_i32_0 : i32, i32
  }
  func.func @transform_7(%arg0: i32, %arg1: i32, %arg2: i32) -> (i32, i32) {
    %c0_i32 = arith.constant 0 : i32
    %c0_i32_0 = arith.constant 0 : i32
    %c0_i32_1 = arith.constant 0 : i32
    return %c0_i32, %c0_i32_0 : i32, i32
  }
  func.func @transform_8(%arg0: i32, %arg1: i32, %arg2: i32) -> (i32, i32) {
    %c0_i32 = arith.constant 0 : i32
    %c0_i32_0 = arith.constant 0 : i32
    %c0_i32_1 = arith.constant 0 : i32
    return %c0_i32, %c0_i32_0 : i32, i32
  }
  func.func @transform_9(%arg0: i32, %arg1: i32, %arg2: i32) -> (i32, i32) {
    %c0_i32 = arith.constant 0 : i32
    %c0_i32_0 = arith.constant 0 : i32
    %c0_i32_1 = arith.constant 0 : i32
    return %c0_i32, %c0_i32_0 : i32, i32
  }
  func.func @transform_10(%arg0: i32, %arg1: i32, %arg2: i32) -> (i32, i32, i32) {
    %c0_i32 = arith.constant 0 : i32
    %c0_i32_0 = arith.constant 0 : i32
    return %arg0, %arg1, %c0_i32 : i32, i32, i32
  }
}

module attributes {stable_mosaic.version = 11 : i64} {
  func.func @_mha_ln_kernel(%arg0: i32, %arg1: i32, %arg2: i32, %arg3: memref<1x8x32xbf16, #tpu.memory_space<vmem>>, %arg4: memref<1x8x32xbf16, #tpu.memory_space<vmem>>, %arg5: memref<32x32xbf16, #tpu.memory_space<vmem>>, %arg6: memref<1x32xf32, #tpu.memory_space<vmem>>, %arg7: memref<32x64xbf16, #tpu.memory_space<vmem>>, %arg8: memref<1x64xf32, #tpu.memory_space<vmem>>, %arg9: memref<32x32xbf16, #tpu.memory_space<vmem>>, %arg10: memref<1x32xf32, #tpu.memory_space<vmem>>, %arg11: memref<1x32xf32, #tpu.memory_space<vmem>>, %arg12: memref<1x32xf32, #tpu.memory_space<vmem>>, %arg13: memref<1x8x32xbf16, #tpu.memory_space<vmem>>, %arg14: memref<4x8x8xbf16, #tpu.memory_space<vmem>>, %arg15: memref<4x8x8xf32, #tpu.memory_space<vmem>>, %arg16: memref<4x8x128xf32, #tpu.memory_space<vmem>>, %arg17: memref<4x8x128xf32, #tpu.memory_space<vmem>>) attributes {dimension_semantics = [#tpu.dimension_semantics<parallel>, #tpu.dimension_semantics<parallel>, #tpu.dimension_semantics<arbitrary>], iteration_bounds = array<i64: 2, 1, 1>, scalar_prefetch = 0 : i64, scratch_operands = 4 : i64, tpu.core_type = #tpu.core_type<tc>, window_params = [{transform_indices = @transform_0, window_bounds = array<i64: 1, 8, 32>}, {transform_indices = @transform_1, window_bounds = array<i64: 1, 8, 32>}, {pipeline_mode = #tpu.pipeline_mode<synchronous>, transform_indices = @transform_2, window_bounds = array<i64: 32, 32>}, {pipeline_mode = #tpu.pipeline_mode<synchronous>, transform_indices = @transform_3, window_bounds = array<i64: 1, 32>}, {pipeline_mode = #tpu.pipeline_mode<synchronous>, transform_indices = @transform_4, window_bounds = array<i64: 32, 64>}, {pipeline_mode = #tpu.pipeline_mode<synchronous>, transform_indices = @transform_5, window_bounds = array<i64: 1, 64>}, {pipeline_mode = #tpu.pipeline_mode<synchronous>, transform_indices = @transform_6, window_bounds = array<i64: 32, 32>}, {pipeline_mode = #tpu.pipeline_mode<synchronous>, transform_indices = @transform_7, window_bounds = array<i64: 1, 32>}, {pipeline_mode = #tpu.pipeline_mode<synchronous>, transform_indices = @transform_8, window_bounds = array<i64: 1, 32>}, {pipeline_mode = #tpu.pipeline_mode<synchronous>, transform_indices = @transform_9, window_bounds = array<i64: 1, 32>}, {transform_indices = @transform_10, window_bounds = array<i64: 1, 8, 32>}]} {
    %c0_i32 = arith.constant 0 : i32
    %0 = arith.cmpi eq, %arg2, %c0_i32 : i32
    %1 = arith.extui %0 : i1 to i32
    %c0_i32_0 = arith.constant 0 : i32
    %2 = arith.cmpi ne, %1, %c0_i32_0 : i32
    scf.if %2 {
      %c0_34 = arith.constant 0 : index
      %c0_35 = arith.constant 0 : index
      %c0_36 = arith.constant 0 : index
      %62 = vector.load %arg3[%c0_34, %c0_35, %c0_36] : memref<1x8x32xbf16, #tpu.memory_space<vmem>>, vector<1x8x32xbf16>
      %63 = vector.shape_cast %62 : vector<1x8x32xbf16> to vector<8x32xbf16>
      %c0_37 = arith.constant 0 : index
      %c0_38 = arith.constant 0 : index
      %64 = vector.load %arg5[%c0_37, %c0_38] : memref<32x32xbf16, #tpu.memory_space<vmem>>, vector<32x32xbf16>
      %cst_39 = arith.constant dense<0.000000e+00> : vector<8x32xf32>
      %65 = tpu.matmul %63, %64, %cst_39 {dimension_numbers = #tpu.dot_dimension_numbers<[1], [0], [0], [1], [0, 0, 1, 1], [], []>} : vector<8x32xbf16>, vector<32x32xbf16>, vector<8x32xf32> -> vector<8x32xf32>
      %c0_40 = arith.constant 0 : index
      %c0_41 = arith.constant 0 : index
      %66 = vector.load %arg6[%c0_40, %c0_41] : memref<1x32xf32, #tpu.memory_space<vmem>>, vector<1x32xf32>
      %67 = vector.broadcast %66 : vector<1x32xf32> to vector<8x32xf32>
      %68 = arith.addf %65, %67 : vector<8x32xf32>
      %cst_42 = arith.constant 0.353553385 : f32
      %69 = vector.broadcast %cst_42 : f32 to vector<8x32xf32>
      %70 = arith.mulf %68, %69 : vector<8x32xf32>
      %71 = arith.truncf %70 : vector<8x32xf32> to vector<8x32xbf16>
      %72 = vector.extract_strided_slice %71 {offsets = [0, 0], sizes = [8, 8], strides = [1, 1]} : vector<8x32xbf16> to vector<8x8xbf16>
      %73 = vector.extract_strided_slice %71 {offsets = [0, 8], sizes = [8, 8], strides = [1, 1]} : vector<8x32xbf16> to vector<8x8xbf16>
      %74 = vector.extract_strided_slice %71 {offsets = [0, 16], sizes = [8, 8], strides = [1, 1]} : vector<8x32xbf16> to vector<8x8xbf16>
      %75 = vector.extract_strided_slice %71 {offsets = [0, 24], sizes = [8, 8], strides = [1, 1]} : vector<8x32xbf16> to vector<8x8xbf16>
      %76 = vector.shape_cast %72 : vector<8x8xbf16> to vector<1x8x8xbf16>
      %77 = vector.shape_cast %73 : vector<8x8xbf16> to vector<1x8x8xbf16>
      %78 = vector.shape_cast %74 : vector<8x8xbf16> to vector<1x8x8xbf16>
      %79 = vector.shape_cast %75 : vector<8x8xbf16> to vector<1x8x8xbf16>
      %80 = tpu.concatenate %76, %77, %78, %79 in 0 : vector<1x8x8xbf16>, vector<1x8x8xbf16>, vector<1x8x8xbf16>, vector<1x8x8xbf16> -> vector<4x8x8xbf16>
      %c0_43 = arith.constant 0 : index
      %c0_44 = arith.constant 0 : index
      %c0_45 = arith.constant 0 : index
      %81 = vector.load %arg14[%c0_43, %c0_44, %c0_45] : memref<4x8x8xbf16, #tpu.memory_space<vmem>>, vector<4x8x8xbf16>
      tpu.vector_store %arg14[%c0_43, %c0_44, %c0_45], %80 {strides = array<i32>} : memref<4x8x8xbf16, #tpu.memory_space<vmem>>, vector<4x8x8xbf16>,
      %cst_46 = arith.constant 0.000000e+00 : f32
      %82 = vector.broadcast %cst_46 : f32 to vector<4x8x8xf32>
      %c0_47 = arith.constant 0 : index
      %c0_48 = arith.constant 0 : index
      %c0_49 = arith.constant 0 : index
      %83 = vector.load %arg15[%c0_47, %c0_48, %c0_49] : memref<4x8x8xf32, #tpu.memory_space<vmem>>, vector<4x8x8xf32>
      tpu.vector_store %arg15[%c0_47, %c0_48, %c0_49], %82 {strides = array<i32>} : memref<4x8x8xf32, #tpu.memory_space<vmem>>, vector<4x8x8xf32>,
      %cst_50 = arith.constant 0xFF800000 : f32
      %84 = vector.broadcast %cst_50 : f32 to vector<4x8x128xf32>
      %c0_51 = arith.constant 0 : index
      %c0_52 = arith.constant 0 : index
      %c0_53 = arith.constant 0 : index
      %85 = vector.load %arg16[%c0_51, %c0_52, %c0_53] : memref<4x8x128xf32, #tpu.memory_space<vmem>>, vector<4x8x128xf32>
      tpu.vector_store %arg16[%c0_51, %c0_52, %c0_53], %84 {strides = array<i32>} : memref<4x8x128xf32, #tpu.memory_space<vmem>>, vector<4x8x128xf32>,
      %cst_54 = arith.constant 0.000000e+00 : f32
      %86 = vector.broadcast %cst_54 : f32 to vector<4x8x128xf32>
      %c0_55 = arith.constant 0 : index
      %c0_56 = arith.constant 0 : index
      %c0_57 = arith.constant 0 : index
      %87 = vector.load %arg17[%c0_55, %c0_56, %c0_57] : memref<4x8x128xf32, #tpu.memory_space<vmem>>, vector<4x8x128xf32>
      tpu.vector_store %arg17[%c0_55, %c0_56, %c0_57], %86 {strides = array<i32>} : memref<4x8x128xf32, #tpu.memory_space<vmem>>, vector<4x8x128xf32>,
    } else {
    }
    %c0 = arith.constant 0 : index
    %c0_1 = arith.constant 0 : index
    %c0_2 = arith.constant 0 : index
    %3 = vector.load %arg4[%c0, %c0_1, %c0_2] : memref<1x8x32xbf16, #tpu.memory_space<vmem>>, vector<1x8x32xbf16>
    %4 = vector.shape_cast %3 : vector<1x8x32xbf16> to vector<8x32xbf16>
    %c0_3 = arith.constant 0 : index
    %c0_4 = arith.constant 0 : index
    %5 = vector.load %arg7[%c0_3, %c0_4] : memref<32x64xbf16, #tpu.memory_space<vmem>>, vector<32x64xbf16>
    %cst = arith.constant dense<0.000000e+00> : vector<8x64xf32>
    %6 = tpu.matmul %4, %5, %cst {dimension_numbers = #tpu.dot_dimension_numbers<[1], [0], [0], [1], [0, 0, 1, 1], [], []>} : vector<8x32xbf16>, vector<32x64xbf16>, vector<8x64xf32> -> vector<8x64xf32>
    %c0_5 = arith.constant 0 : index
    %c0_6 = arith.constant 0 : index
    %7 = vector.load %arg8[%c0_5, %c0_6] : memref<1x64xf32, #tpu.memory_space<vmem>>, vector<1x64xf32>
    %8 = vector.broadcast %7 : vector<1x64xf32> to vector<8x64xf32>
    %9 = arith.addf %6, %8 : vector<8x64xf32>
    %10 = arith.truncf %9 : vector<8x64xf32> to vector<8x64xbf16>
    %11 = vector.extract_strided_slice %10 {offsets = [0, 0], sizes = [8, 8], strides = [1, 1]} : vector<8x64xbf16> to vector<8x8xbf16>
    %12 = vector.extract_strided_slice %10 {offsets = [0, 8], sizes = [8, 8], strides = [1, 1]} : vector<8x64xbf16> to vector<8x8xbf16>
    %13 = vector.extract_strided_slice %10 {offsets = [0, 16], sizes = [8, 8], strides = [1, 1]} : vector<8x64xbf16> to vector<8x8xbf16>
    %14 = vector.extract_strided_slice %10 {offsets = [0, 24], sizes = [8, 8], strides = [1, 1]} : vector<8x64xbf16> to vector<8x8xbf16>
    %15 = vector.shape_cast %11 : vector<8x8xbf16> to vector<1x8x8xbf16>
    %16 = vector.shape_cast %12 : vector<8x8xbf16> to vector<1x8x8xbf16>
    %17 = vector.shape_cast %13 : vector<8x8xbf16> to vector<1x8x8xbf16>
    %18 = vector.shape_cast %14 : vector<8x8xbf16> to vector<1x8x8xbf16>
    %19 = tpu.concatenate %15, %16, %17, %18 in 0 : vector<1x8x8xbf16>, vector<1x8x8xbf16>, vector<1x8x8xbf16>, vector<1x8x8xbf16> -> vector<4x8x8xbf16>
    %20 = vector.extract_strided_slice %10 {offsets = [0, 32], sizes = [8, 8], strides = [1, 1]} : vector<8x64xbf16> to vector<8x8xbf16>
    %21 = vector.extract_strided_slice %10 {offsets = [0, 40], sizes = [8, 8], strides = [1, 1]} : vector<8x64xbf16> to vector<8x8xbf16>
    %22 = vector.extract_strided_slice %10 {offsets = [0, 48], sizes = [8, 8], strides = [1, 1]} : vector<8x64xbf16> to vector<8x8xbf16>
    %23 = vector.extract_strided_slice %10 {offsets = [0, 56], sizes = [8, 8], strides = [1, 1]} : vector<8x64xbf16> to vector<8x8xbf16>
    %24 = vector.shape_cast %20 : vector<8x8xbf16> to vector<1x8x8xbf16>
    %25 = vector.shape_cast %21 : vector<8x8xbf16> to vector<1x8x8xbf16>
    %26 = vector.shape_cast %22 : vector<8x8xbf16> to vector<1x8x8xbf16>
    %27 = vector.shape_cast %23 : vector<8x8xbf16> to vector<1x8x8xbf16>
    %28 = tpu.concatenate %24, %25, %26, %27 in 0 : vector<1x8x8xbf16>, vector<1x8x8xbf16>, vector<1x8x8xbf16>, vector<1x8x8xbf16> -> vector<4x8x8xbf16>
    %c0_7 = arith.constant 0 : index
    %c0_8 = arith.constant 0 : index
    %c0_9 = arith.constant 0 : index
    %29 = vector.load %arg14[%c0_7, %c0_8, %c0_9] : memref<4x8x8xbf16, #tpu.memory_space<vmem>>, vector<4x8x8xbf16>
    "tpu.trace_start"() <{level = 10 : i32, message = "hqd,hkd->hqk"}> : () -> ()
    %cst_10 = arith.constant dense<0.000000e+00> : vector<4x8x8xf32>
    %30 = tpu.matmul %29, %19, %cst_10 {dimension_numbers = #tpu.dot_dimension_numbers<[2], [2], [1], [1], [0, 0, 0, 1, 1, 1], [0], [0]>} : vector<4x8x8xbf16>, vector<4x8x8xbf16>, vector<4x8x8xf32> -> vector<4x8x8xf32>
    "tpu.trace_stop"() : () -> ()
    %c0_11 = arith.constant 0 : index
    %c0_12 = arith.constant 0 : index
    %c0_13 = arith.constant 0 : index
    %31 = vector.load %arg16[%c0_11, %c0_12, %c0_13] : memref<4x8x128xf32, #tpu.memory_space<vmem>>, vector<4x8x128xf32>
    %cst_14 = arith.constant dense<0xFF800000> : vector<4x8xf32>
    %32 = vector.multi_reduction <maximumf>, %30, %cst_14 [2] : vector<4x8x8xf32> to vector<4x8xf32>
    %33 = vector.shape_cast %32 : vector<4x8xf32> to vector<4x8x1xf32>
    %34 = vector.broadcast %33 : vector<4x8x1xf32> to vector<4x8x128xf32>
    %35 = arith.maximumf %31, %34 : vector<4x8x128xf32>
    %36 = vector.extract_strided_slice %35 {offsets = [0, 0, 0], sizes = [4, 8, 1], strides = [1, 1, 1]} : vector<4x8x128xf32> to vector<4x8x1xf32>
    %37 = vector.extract_strided_slice %31 {offsets = [0, 0, 0], sizes = [4, 8, 1], strides = [1, 1, 1]} : vector<4x8x128xf32> to vector<4x8x1xf32>
    %38 = arith.subf %37, %36 : vector<4x8x1xf32>
    %39 = math.exp %38 : vector<4x8x1xf32>
    %40 = vector.broadcast %36 : vector<4x8x1xf32> to vector<4x8x8xf32>
    %41 = arith.subf %30, %40 : vector<4x8x8xf32>
    %42 = math.exp %41 : vector<4x8x8xf32>
    %c0_15 = arith.constant 0 : index
    %c0_16 = arith.constant 0 : index
    %c0_17 = arith.constant 0 : index
    %43 = vector.load %arg17[%c0_15, %c0_16, %c0_17] : memref<4x8x128xf32, #tpu.memory_space<vmem>>, vector<4x8x128xf32>
    %44 = vector.broadcast %39 : vector<4x8x1xf32> to vector<4x8x128xf32>
    %45 = arith.mulf %44, %43 : vector<4x8x128xf32>
    %cst_18 = arith.constant dense<0.000000e+00> : vector<4x8xf32>
    %46 = vector.multi_reduction <add>, %42, %cst_18 [2] : vector<4x8x8xf32> to vector<4x8xf32>
    %47 = vector.shape_cast %46 : vector<4x8xf32> to vector<4x8x1xf32>
    %48 = vector.broadcast %47 : vector<4x8x1xf32> to vector<4x8x128xf32>
    %49 = arith.addf %45, %48 : vector<4x8x128xf32>
    %c0_19 = arith.constant 0 : index
    %c0_20 = arith.constant 0 : index
    %c0_21 = arith.constant 0 : index
    %50 = vector.load %arg17[%c0_19, %c0_20, %c0_21] : memref<4x8x128xf32, #tpu.memory_space<vmem>>, vector<4x8x128xf32>
    tpu.vector_store %arg17[%c0_19, %c0_20, %c0_21], %49 {strides = array<i32>} : memref<4x8x128xf32, #tpu.memory_space<vmem>>, vector<4x8x128xf32>,
    %c0_22 = arith.constant 0 : index
    %c0_23 = arith.constant 0 : index
    %c0_24 = arith.constant 0 : index
    %51 = vector.load %arg16[%c0_22, %c0_23, %c0_24] : memref<4x8x128xf32, #tpu.memory_space<vmem>>, vector<4x8x128xf32>
    tpu.vector_store %arg16[%c0_22, %c0_23, %c0_24], %35 {strides = array<i32>} : memref<4x8x128xf32, #tpu.memory_space<vmem>>, vector<4x8x128xf32>,
    %52 = arith.truncf %42 : vector<4x8x8xf32> to vector<4x8x8xbf16>
    "tpu.trace_start"() <{level = 10 : i32, message = "hqk,hkd->hqd"}> : () -> ()
    %cst_25 = arith.constant dense<0.000000e+00> : vector<4x8x8xf32>
    %53 = tpu.matmul %52, %28, %cst_25 {dimension_numbers = #tpu.dot_dimension_numbers<[2], [1], [1], [2], [0, 0, 0, 1, 1, 2], [0], [0]>} : vector<4x8x8xbf16>, vector<4x8x8xbf16>, vector<4x8x8xf32> -> vector<4x8x8xf32>
    "tpu.trace_stop"() : () -> ()
    %c0_26 = arith.constant 0 : index
    %c0_27 = arith.constant 0 : index
    %c0_28 = arith.constant 0 : index
    %54 = vector.load %arg15[%c0_26, %c0_27, %c0_28] : memref<4x8x8xf32, #tpu.memory_space<vmem>>, vector<4x8x8xf32>
    %55 = vector.broadcast %39 : vector<4x8x1xf32> to vector<4x8x8xf32>
    %56 = arith.mulf %55, %54 : vector<4x8x8xf32>
    %57 = arith.addf %56, %53 : vector<4x8x8xf32>
    %c0_29 = arith.constant 0 : index
    %c0_30 = arith.constant 0 : index
    %c0_31 = arith.constant 0 : index
    %58 = vector.load %arg15[%c0_29, %c0_30, %c0_31] : memref<4x8x8xf32, #tpu.memory_space<vmem>>, vector<4x8x8xf32>
    tpu.vector_store %arg15[%c0_29, %c0_30, %c0_31], %57 {strides = array<i32>} : memref<4x8x8xf32, #tpu.memory_space<vmem>>, vector<4x8x8xf32>,
    %c0_i32_32 = arith.constant 0 : i32
    %59 = arith.cmpi eq, %arg2, %c0_i32_32 : i32
    %60 = arith.extui %59 : i1 to i32
    %c0_i32_33 = arith.constant 0 : i32
    %61 = arith.cmpi ne, %60, %c0_i32_33 : i32
    scf.if %61 {
      %c0_34 = arith.constant 0 : index
      %c0_35 = arith.constant 0 : index
      %c0_36 = arith.constant 0 : index
      %62 = vector.load %arg15[%c0_34, %c0_35, %c0_36] : memref<4x8x8xf32, #tpu.memory_space<vmem>>, vector<4x8x8xf32>
      %c0_37 = arith.constant 0 : index
      %c0_38 = arith.constant 0 : index
      %c0_39 = arith.constant 0 : index
      %63 = vector.load %arg17[%c0_37, %c0_38, %c0_39] : memref<4x8x128xf32, #tpu.memory_space<vmem>>, vector<4x8x128xf32>
      %64 = vector.extract_strided_slice %63 {offsets = [0, 0, 0], sizes = [4, 8, 1], strides = [1, 1, 1]} : vector<4x8x128xf32> to vector<4x8x1xf32>
      %65 = vector.broadcast %64 : vector<4x8x1xf32> to vector<4x8x8xf32>
      %66 = arith.divf %62, %65 : vector<4x8x8xf32>
      %67 = arith.truncf %66 : vector<4x8x8xf32> to vector<4x8x8xbf16>
      %68 = vector.extract_strided_slice %67 {offsets = [0, 0, 0], sizes = [1, 8, 8], strides = [1, 1, 1]} : vector<4x8x8xbf16> to vector<1x8x8xbf16>
      %69 = vector.shape_cast %68 : vector<1x8x8xbf16> to vector<8x8xbf16>
      %70 = vector.extract_strided_slice %67 {offsets = [1, 0, 0], sizes = [1, 8, 8], strides = [1, 1, 1]} : vector<4x8x8xbf16> to vector<1x8x8xbf16>
      %71 = vector.shape_cast %70 : vector<1x8x8xbf16> to vector<8x8xbf16>
      %72 = vector.extract_strided_slice %67 {offsets = [2, 0, 0], sizes = [1, 8, 8], strides = [1, 1, 1]} : vector<4x8x8xbf16> to vector<1x8x8xbf16>
      %73 = vector.shape_cast %72 : vector<1x8x8xbf16> to vector<8x8xbf16>
      %74 = vector.extract_strided_slice %67 {offsets = [3, 0, 0], sizes = [1, 8, 8], strides = [1, 1, 1]} : vector<4x8x8xbf16> to vector<1x8x8xbf16>
      %75 = vector.shape_cast %74 : vector<1x8x8xbf16> to vector<8x8xbf16>
      %76 = tpu.concatenate %69, %71, %73, %75 in 1 : vector<8x8xbf16>, vector<8x8xbf16>, vector<8x8xbf16>, vector<8x8xbf16> -> vector<8x32xbf16>
      %c0_40 = arith.constant 0 : index
      %c0_41 = arith.constant 0 : index
      %77 = vector.load %arg9[%c0_40, %c0_41] : memref<32x32xbf16, #tpu.memory_space<vmem>>, vector<32x32xbf16>
      %cst_42 = arith.constant dense<0.000000e+00> : vector<8x32xf32>
      %78 = tpu.matmul %76, %77, %cst_42 {dimension_numbers = #tpu.dot_dimension_numbers<[1], [0], [0], [1], [0, 0, 1, 1], [], []>} : vector<8x32xbf16>, vector<32x32xbf16>, vector<8x32xf32> -> vector<8x32xf32>
      %c0_43 = arith.constant 0 : index
      %c0_44 = arith.constant 0 : index
      %79 = vector.load %arg10[%c0_43, %c0_44] : memref<1x32xf32, #tpu.memory_space<vmem>>, vector<1x32xf32>
      %80 = vector.broadcast %79 : vector<1x32xf32> to vector<8x32xf32>
      %81 = arith.addf %78, %80 : vector<8x32xf32>
      %c0_45 = arith.constant 0 : index
      %c0_46 = arith.constant 0 : index
      %c0_47 = arith.constant 0 : index
      %82 = vector.load %arg3[%c0_45, %c0_46, %c0_47] : memref<1x8x32xbf16, #tpu.memory_space<vmem>>, vector<1x8x32xbf16>
      %83 = vector.shape_cast %82 : vector<1x8x32xbf16> to vector<8x32xbf16>
      %84 = arith.extf %83 : vector<8x32xbf16> to vector<8x32xf32>
      %85 = arith.addf %84, %81 : vector<8x32xf32>
      %cst_48 = arith.constant dense<0.000000e+00> : vector<8xf32>
      %86 = vector.multi_reduction <add>, %85, %cst_48 [1] : vector<8x32xf32> to vector<8xf32>
      %87 = vector.shape_cast %86 : vector<8xf32> to vector<8x1xf32>
      %cst_49 = arith.constant 3.200000e+01 : f32
      %88 = vector.broadcast %cst_49 : f32 to vector<8x1xf32>
      %89 = arith.divf %87, %88 : vector<8x1xf32>
      %90 = vector.broadcast %89 : vector<8x1xf32> to vector<8x32xf32>
      %91 = arith.subf %85, %90 : vector<8x32xf32>
      %92 = arith.mulf %91, %91 : vector<8x32xf32>
      %cst_50 = arith.constant dense<0.000000e+00> : vector<8xf32>
      %93 = vector.multi_reduction <add>, %92, %cst_50 [1] : vector<8x32xf32> to vector<8xf32>
      %94 = vector.shape_cast %93 : vector<8xf32> to vector<8x1xf32>
      %cst_51 = arith.constant 3.200000e+01 : f32
      %95 = vector.broadcast %cst_51 : f32 to vector<8x1xf32>
      %96 = arith.divf %94, %95 : vector<8x1xf32>
      %97 = vector.broadcast %89 : vector<8x1xf32> to vector<8x32xf32>
      %98 = arith.subf %85, %97 : vector<8x32xf32>
      %cst_52 = arith.constant 9.99999974E-6 : f32
      %99 = vector.broadcast %cst_52 : f32 to vector<8x1xf32>
      %100 = arith.addf %96, %99 : vector<8x1xf32>
      %101 = math.rsqrt %100 : vector<8x1xf32>
      %102 = vector.broadcast %101 : vector<8x1xf32> to vector<8x32xf32>
      %103 = arith.mulf %98, %102 : vector<8x32xf32>
      %c0_53 = arith.constant 0 : index
      %c0_54 = arith.constant 0 : index
      %104 = vector.load %arg11[%c0_53, %c0_54] : memref<1x32xf32, #tpu.memory_space<vmem>>, vector<1x32xf32>
      %105 = vector.broadcast %104 : vector<1x32xf32> to vector<8x32xf32>
      %106 = arith.mulf %103, %105 : vector<8x32xf32>
      %c0_55 = arith.constant 0 : index
      %c0_56 = arith.constant 0 : index
      %107 = vector.load %arg12[%c0_55, %c0_56] : memref<1x32xf32, #tpu.memory_space<vmem>>, vector<1x32xf32>
      %108 = vector.broadcast %107 : vector<1x32xf32> to vector<8x32xf32>
      %109 = arith.addf %106, %108 : vector<8x32xf32>
      %110 = arith.truncf %109 : vector<8x32xf32> to vector<8x32xbf16>
      %c0_57 = arith.constant 0 : index
      %c0_58 = arith.constant 0 : index
      %c0_59 = arith.constant 0 : index
      %111 = vector.load %arg13[%c0_57, %c0_58, %c0_59] : memref<1x8x32xbf16, #tpu.memory_space<vmem>>, vector<1x8x32xbf16>
      %112 = vector.shape_cast %111 : vector<1x8x32xbf16> to vector<8x32xbf16>
      %113 = vector.shape_cast %110 : vector<8x32xbf16> to vector<1x8x32xbf16>
      tpu.vector_store %arg13[%c0_57, %c0_58, %c0_59], %113 {strides = array<i32>} : memref<1x8x32xbf16, #tpu.memory_space<vmem>>, vector<1x8x32xbf16>,
    } else {
    }
    return
  }
  func.func @transform_0(%arg0: i32, %arg1: i32, %arg2: i32) -> (i32, i32, i32) {
    %c0_i32 = arith.constant 0 : i32
    %c0_i32_0 = arith.constant 0 : i32
    return %arg0, %arg1, %c0_i32 : i32, i32, i32
  }
  func.func @transform_1(%arg0: i32, %arg1: i32, %arg2: i32) -> (i32, i32, i32) {
    %c0_i32 = arith.constant 0 : i32
    %c0_i32_0 = arith.constant 0 : i32
    return %arg0, %arg2, %c0_i32 : i32, i32, i32
  }
  func.func @transform_2(%arg0: i32, %arg1: i32, %arg2: i32) -> (i32, i32) {
    %c0_i32 = arith.constant 0 : i32
    %c0_i32_0 = arith.constant 0 : i32
    %c0_i32_1 = arith.constant 0 : i32
    return %c0_i32, %c0_i32_0 : i32, i32
  }
  func.func @transform_3(%arg0: i32, %arg1: i32, %arg2: i32) -> (i32, i32) {
    %c0_i32 = arith.constant 0 : i32
    %c0_i32_0 = arith.constant 0 : i32
    %c0_i32_1 = arith.constant 0 : i32
    return %c0_i32, %c0_i32_0 : i32, i32
  }
  func.func @transform_4(%arg0: i32, %arg1: i32, %arg2: i32) -> (i32, i32) {
    %c0_i32 = arith.constant 0 : i32
    %c0_i32_0 = arith.constant 0 : i32
    %c0_i32_1 = arith.constant 0 : i32
    return %c0_i32, %c0_i32_0 : i32, i32
  }
  func.func @transform_5(%arg0: i32, %arg1: i32, %arg2: i32) -> (i32, i32) {
    %c0_i32 = arith.constant 0 : i32
    %c0_i32_0 = arith.constant 0 : i32
    %c0_i32_1 = arith.constant 0 : i32
    return %c0_i32, %c0_i32_0 : i32, i32
  }
  func.func @transform_6(%arg0: i32, %arg1: i32, %arg2: i32) -> (i32, i32) {
    %c0_i32 = arith.constant 0 : i32
    %c0_i32_0 = arith.constant 0 : i32
    %c0_i32_1 = arith.constant 0 : i32
    return %c0_i32, %c0_i32_0 : i32, i32
  }
  func.func @transform_7(%arg0: i32, %arg1: i32, %arg2: i32) -> (i32, i32) {
    %c0_i32 = arith.constant 0 : i32
    %c0_i32_0 = arith.constant 0 : i32
    %c0_i32_1 = arith.constant 0 : i32
    return %c0_i32, %c0_i32_0 : i32, i32
  }
  func.func @transform_8(%arg0: i32, %arg1: i32, %arg2: i32) -> (i32, i32) {
    %c0_i32 = arith.constant 0 : i32
    %c0_i32_0 = arith.constant 0 : i32
    %c0_i32_1 = arith.constant 0 : i32
    return %c0_i32, %c0_i32_0 : i32, i32
  }
  func.func @transform_9(%arg0: i32, %arg1: i32, %arg2: i32) -> (i32, i32) {
    %c0_i32 = arith.constant 0 : i32
    %c0_i32_0 = arith.constant 0 : i32
    %c0_i32_1 = arith.constant 0 : i32
    return %c0_i32, %c0_i32_0 : i32, i32
  }
  func.func @transform_10(%arg0: i32, %arg1: i32, %arg2: i32) -> (i32, i32, i32) {
    %c0_i32 = arith.constant 0 : i32
    %c0_i32_0 = arith.constant 0 : i32
    return %arg0, %arg1, %c0_i32 : i32, i32, i32
  }
}

module attributes {stable_mosaic.version = 11 : i64} {
  func.func @_ffn_ln_kernel(%arg0: i32, %arg1: i32, %arg2: memref<16x32xbf16, #tpu.memory_space<vmem>>, %arg3: memref<32x64xbf16, #tpu.memory_space<vmem>>, %arg4: memref<1x64xf32, #tpu.memory_space<vmem>>, %arg5: memref<64x32xbf16, #tpu.memory_space<vmem>>, %arg6: memref<1x32xf32, #tpu.memory_space<vmem>>, %arg7: memref<1x32xf32, #tpu.memory_space<vmem>>, %arg8: memref<1x32xf32, #tpu.memory_space<vmem>>, %arg9: memref<16x32xf32, #tpu.memory_space<vmem>>, %arg10: memref<16x32xf32, #tpu.memory_space<vmem>>) attributes {dimension_semantics = [#tpu.dimension_semantics<parallel>, #tpu.dimension_semantics<arbitrary>], iteration_bounds = array<i64: 1, 1>, scalar_prefetch = 0 : i64, scratch_operands = 1 : i64, tpu.core_type = #tpu.core_type<tc>, window_params = [{transform_indices = @transform_0, window_bounds = array<i64: 16, 32>}, {transform_indices = @transform_1, window_bounds = array<i64: 32, 64>}, {transform_indices = @transform_2, window_bounds = array<i64: 1, 64>}, {transform_indices = @transform_3, window_bounds = array<i64: 64, 32>}, {pipeline_mode = #tpu.pipeline_mode<synchronous>, transform_indices = @transform_4, window_bounds = array<i64: 1, 32>}, {pipeline_mode = #tpu.pipeline_mode<synchronous>, transform_indices = @transform_5, window_bounds = array<i64: 1, 32>}, {pipeline_mode = #tpu.pipeline_mode<synchronous>, transform_indices = @transform_6, window_bounds = array<i64: 1, 32>}, {transform_indices = @transform_7, window_bounds = array<i64: 16, 32>}]} {
    %c0_i32 = arith.constant 0 : i32
    %0 = arith.cmpi eq, %arg1, %c0_i32 : i32
    %1 = arith.extui %0 : i1 to i32
    %c0_i32_0 = arith.constant 0 : i32
    %2 = arith.cmpi ne, %1, %c0_i32_0 : i32
    scf.if %2 {
      %cst_16 = arith.constant 0.000000e+00 : f32
      %20 = vector.broadcast %cst_16 : f32 to vector<16x32xf32>
      %c0_17 = arith.constant 0 : index
      %c0_18 = arith.constant 0 : index
      %21 = vector.load %arg10[%c0_17, %c0_18] : memref<16x32xf32, #tpu.memory_space<vmem>>, vector<16x32xf32>
      tpu.vector_store %arg10[%c0_17, %c0_18], %20 {strides = array<i32>} : memref<16x32xf32, #tpu.memory_space<vmem>>, vector<16x32xf32>,
    } else {
    }
    %c0 = arith.constant 0 : index
    %c0_1 = arith.constant 0 : index
    %3 = vector.load %arg2[%c0, %c0_1] : memref<16x32xbf16, #tpu.memory_space<vmem>>, vector<16x32xbf16>
    %c0_2 = arith.constant 0 : index
    %c0_3 = arith.constant 0 : index
    %4 = vector.load %arg3[%c0_2, %c0_3] : memref<32x64xbf16, #tpu.memory_space<vmem>>, vector<32x64xbf16>
    %cst = arith.constant dense<0.000000e+00> : vector<16x64xf32>
    %5 = tpu.matmul %3, %4, %cst {dimension_numbers = #tpu.dot_dimension_numbers<[1], [0], [0], [1], [0, 0, 1, 1], [], []>} : vector<16x32xbf16>, vector<32x64xbf16>, vector<16x64xf32> -> vector<16x64xf32>
    %c0_4 = arith.constant 0 : index
    %c0_5 = arith.constant 0 : index
    %6 = vector.load %arg4[%c0_4, %c0_5] : memref<1x64xf32, #tpu.memory_space<vmem>>, vector<1x64xf32>
    %7 = vector.broadcast %6 : vector<1x64xf32> to vector<16x64xf32>
    %8 = arith.addf %5, %7 : vector<16x64xf32>
    %cst_6 = arith.constant 0.000000e+00 : f32
    %9 = vector.broadcast %cst_6 : f32 to vector<16x64xf32>
    %10 = arith.maximumf %8, %9 : vector<16x64xf32>
    %11 = arith.truncf %10 : vector<16x64xf32> to vector<16x64xbf16>
    %c0_7 = arith.constant 0 : index
    %c0_8 = arith.constant 0 : index
    %12 = vector.load %arg10[%c0_7, %c0_8] : memref<16x32xf32, #tpu.memory_space<vmem>>, vector<16x32xf32>
    %c0_9 = arith.constant 0 : index
    %c0_10 = arith.constant 0 : index
    %13 = vector.load %arg5[%c0_9, %c0_10] : memref<64x32xbf16, #tpu.memory_space<vmem>>, vector<64x32xbf16>
    %cst_11 = arith.constant dense<0.000000e+00> : vector<16x32xf32>
    %14 = tpu.matmul %11, %13, %cst_11 {dimension_numbers = #tpu.dot_dimension_numbers<[1], [0], [0], [1], [0, 0, 1, 1], [], []>} : vector<16x64xbf16>, vector<64x32xbf16>, vector<16x32xf32> -> vector<16x32xf32>
    %15 = arith.addf %12, %14 : vector<16x32xf32>
    %c0_12 = arith.constant 0 : index
    %c0_13 = arith.constant 0 : index
    %16 = vector.load %arg10[%c0_12, %c0_13] : memref<16x32xf32, #tpu.memory_space<vmem>>, vector<16x32xf32>
    tpu.vector_store %arg10[%c0_12, %c0_13], %15 {strides = array<i32>} : memref<16x32xf32, #tpu.memory_space<vmem>>, vector<16x32xf32>,
    %c0_i32_14 = arith.constant 0 : i32
    %17 = arith.cmpi eq, %arg1, %c0_i32_14 : i32
    %18 = arith.extui %17 : i1 to i32
    %c0_i32_15 = arith.constant 0 : i32
    %19 = arith.cmpi ne, %18, %c0_i32_15 : i32
    scf.if %19 {
      %c0_16 = arith.constant 0 : index
      %c0_17 = arith.constant 0 : index
      %20 = vector.load %arg2[%c0_16, %c0_17] : memref<16x32xbf16, #tpu.memory_space<vmem>>, vector<16x32xbf16>
      %21 = arith.extf %20 : vector<16x32xbf16> to vector<16x32xf32>
      %c0_18 = arith.constant 0 : index
      %c0_19 = arith.constant 0 : index
      %22 = vector.load %arg10[%c0_18, %c0_19] : memref<16x32xf32, #tpu.memory_space<vmem>>, vector<16x32xf32>
      %23 = arith.addf %21, %22 : vector<16x32xf32>
      %c0_20 = arith.constant 0 : index
      %c0_21 = arith.constant 0 : index
      %24 = vector.load %arg6[%c0_20, %c0_21] : memref<1x32xf32, #tpu.memory_space<vmem>>, vector<1x32xf32>
      %25 = vector.broadcast %24 : vector<1x32xf32> to vector<16x32xf32>
      %26 = arith.addf %23, %25 : vector<16x32xf32>
      %cst_22 = arith.constant dense<0.000000e+00> : vector<16xf32>
      %27 = vector.multi_reduction <add>, %26, %cst_22 [1] : vector<16x32xf32> to vector<16xf32>
      %28 = vector.shape_cast %27 : vector<16xf32> to vector<16x1xf32>
      %cst_23 = arith.constant 3.200000e+01 : f32
      %29 = vector.broadcast %cst_23 : f32 to vector<16x1xf32>
      %30 = arith.divf %28, %29 : vector<16x1xf32>
      %31 = vector.broadcast %30 : vector<16x1xf32> to vector<16x32xf32>
      %32 = arith.subf %26, %31 : vector<16x32xf32>
      %33 = arith.mulf %32, %32 : vector<16x32xf32>
      %cst_24 = arith.constant dense<0.000000e+00> : vector<16xf32>
      %34 = vector.multi_reduction <add>, %33, %cst_24 [1] : vector<16x32xf32> to vector<16xf32>
      %35 = vector.shape_cast %34 : vector<16xf32> to vector<16x1xf32>
      %cst_25 = arith.constant 3.200000e+01 : f32
      %36 = vector.broadcast %cst_25 : f32 to vector<16x1xf32>
      %37 = arith.divf %35, %36 : vector<16x1xf32>
      %38 = vector.broadcast %30 : vector<16x1xf32> to vector<16x32xf32>
      %39 = arith.subf %26, %38 : vector<16x32xf32>
      %cst_26 = arith.constant 9.99999974E-6 : f32
      %40 = vector.broadcast %cst_26 : f32 to vector<16x1xf32>
      %41 = arith.addf %37, %40 : vector<16x1xf32>
      %42 = math.rsqrt %41 : vector<16x1xf32>
      %43 = vector.broadcast %42 : vector<16x1xf32> to vector<16x32xf32>
      %44 = arith.mulf %39, %43 : vector<16x32xf32>
      %c0_27 = arith.constant 0 : index
      %c0_28 = arith.constant 0 : index
      %45 = vector.load %arg7[%c0_27, %c0_28] : memref<1x32xf32, #tpu.memory_space<vmem>>, vector<1x32xf32>
      %46 = vector.broadcast %45 : vector<1x32xf32> to vector<16x32xf32>
      %47 = arith.mulf %44, %46 : vector<16x32xf32>
      %c0_29 = arith.constant 0 : index
      %c0_30 = arith.constant 0 : index
      %48 = vector.load %arg8[%c0_29, %c0_30] : memref<1x32xf32, #tpu.memory_space<vmem>>, vector<1x32xf32>
      %49 = vector.broadcast %48 : vector<1x32xf32> to vector<16x32xf32>
      %50 = arith.addf %47, %49 : vector<16x32xf32>
      %c0_31 = arith.constant 0 : index
      %c0_32 = arith.constant 0 : index
      %51 = vector.load %arg9[%c0_31, %c0_32] : memref<16x32xf32, #tpu.memory_space<vmem>>, vector<16x32xf32>
      tpu.vector_store %arg9[%c0_31, %c0_32], %50 {strides = array<i32>} : memref<16x32xf32, #tpu.memory_space<vmem>>, vector<16x32xf32>,
    } else {
    }
    return
  }
  func.func @transform_0(%arg0: i32, %arg1: i32) -> (i32, i32) {
    %c0_i32 = arith.constant 0 : i32
    %c0_i32_0 = arith.constant 0 : i32
    return %arg0, %c0_i32 : i32, i32
  }
  func.func @transform_1(%arg0: i32, %arg1: i32) -> (i32, i32) {
    %c0_i32 = arith.constant 0 : i32
    %c0_i32_0 = arith.constant 0 : i32
    return %c0_i32, %arg1 : i32, i32
  }
  func.func @transform_2(%arg0: i32, %arg1: i32) -> (i32, i32) {
    %c0_i32 = arith.constant 0 : i32
    %c0_i32_0 = arith.constant 0 : i32
    return %c0_i32, %arg1 : i32, i32
  }
  func.func @transform_3(%arg0: i32, %arg1: i32) -> (i32, i32) {
    %c0_i32 = arith.constant 0 : i32
    %c0_i32_0 = arith.constant 0 : i32
    return %arg1, %c0_i32 : i32, i32
  }
  func.func @transform_4(%arg0: i32, %arg1: i32) -> (i32, i32) {
    %c0_i32 = arith.constant 0 : i32
    %c0_i32_0 = arith.constant 0 : i32
    %c0_i32_1 = arith.constant 0 : i32
    return %c0_i32, %c0_i32_0 : i32, i32
  }
  func.func @transform_5(%arg0: i32, %arg1: i32) -> (i32, i32) {
    %c0_i32 = arith.constant 0 : i32
    %c0_i32_0 = arith.constant 0 : i32
    %c0_i32_1 = arith.constant 0 : i32
    return %c0_i32, %c0_i32_0 : i32, i32
  }
  func.func @transform_6(%arg0: i32, %arg1: i32) -> (i32, i32) {
    %c0_i32 = arith.constant 0 : i32
    %c0_i32_0 = arith.constant 0 : i32
    %c0_i32_1 = arith.constant 0 : i32
    return %c0_i32, %c0_i32_0 : i32, i32
  }
  func.func @transform_7(%arg0: i32, %arg1: i32) -> (i32, i32) {
    %c0_i32 = arith.constant 0 : i32
    %c0_i32_0 = arith.constant 0 : i32
    return %arg0, %c0_i32 : i32, i32
  }
}

</mosaic_0001>

<llo_original>
// kernel: transformer_decoder_layer.5
$region0: #{transformer_decoder_layer.5}
  #allocation0 [shape = 'u32[]', space=smem, size = 0x4, offset = 0x4, fixed_abs, tag = 'smem constant byte address 0x4 - core index']
  #allocation1 [shape = 'u32[144,128]{1,0:T(1,128)}', space=vmem, size = 0x12000, scoped, tag = 'internal scratch']
  #allocation2 [shape = 'f32[16,32]{1,0:T(8,128)}', space=vmem, size = 0x2000, scoped, tag = 'scratch operand']
  %s0 = inlined_call_operand.vmem [shape: bf16[16,32], index: 0, kind: input, shape index: {}]
  %s1 = inlined_call_operand.vmem [shape: bf16[32,64], index: 1, kind: input, shape index: {}]
  %s2 = inlined_call_operand.vmem [shape: f32[1,64], index: 2, kind: input, shape index: {}]
  %s3 = inlined_call_operand.vmem [shape: bf16[64,32], index: 3, kind: input, shape index: {}]
  %s4 = inlined_call_operand.vmem [shape: f32[1,32], index: 4, kind: input, shape index: {}]
  %s5 = inlined_call_operand.vmem [shape: f32[1,32], index: 5, kind: input, shape index: {}]
  %s6 = inlined_call_operand.vmem [shape: f32[1,32], index: 6, kind: input, shape index: {}]
  %s7 = inlined_call_operand.vmem [shape: f32[16,32], index: 7, kind: output, shape index: {}]
  %s8 = sld [smem:[#allocation0]]
  $region46: #{transformer_decoder_layer.5} parent=0
    _
  %s10 = ssub.s32 1, %s8
  %s11 = scalar_select 0, %s10, %s8
  // Predicated region
  $region2: #{transformer_decoder_layer.5} parent=0 // pred_check
    _
  $region3: #{transformer_decoder_layer.5} parent=0 // pred_check_branch
    %13 = sbr.rel (0) target = $region5
  $region4: #{transformer_decoder_layer.5} parent=0 // pred_region
    _
  $region5: #{transformer_decoder_layer.5} parent=0 // pred_fallthru
    _
  // Predicated region
  $region6: #{transformer_decoder_layer.5} parent=0 // pred_check
    _
  $region7: #{transformer_decoder_layer.5} parent=0 // pred_check_branch
    %15 = sbr.rel (0) target = $region9
  $region8: #{transformer_decoder_layer.5} parent=0 // pred_region
    _
  $region9: #{transformer_decoder_layer.5} parent=0 // pred_fallthru
    _
  // Predicated region
  $region10: #{transformer_decoder_layer.5} parent=0 // pred_check
    _
  $region11: #{transformer_decoder_layer.5} parent=0 // pred_check_branch
    %17 = sbr.rel (0) target = $region13
  $region12: #{transformer_decoder_layer.5} parent=0 // pred_region
    _
  $region13: #{transformer_decoder_layer.5} parent=0 // pred_fallthru
    _
  // Predicated region
  $region14: #{transformer_decoder_layer.5} parent=0 // pred_check
    _
  $region15: #{transformer_decoder_layer.5} parent=0 // pred_check_branch
    %19 = sbr.rel (0) target = $region17
  $region16: #{transformer_decoder_layer.5} parent=0 // pred_region
    _
  $region17: #{transformer_decoder_layer.5} parent=0 // pred_fallthru
    _
  // Predicated region
  $region18: #{transformer_decoder_layer.5} parent=0 // pred_check
    _
  $region19: #{transformer_decoder_layer.5} parent=0 // pred_check_branch
    %21 = sbr.rel (0) target = $region21
  $region20: #{transformer_decoder_layer.5} parent=0 // pred_region
    _
  $region21: #{transformer_decoder_layer.5} parent=0 // pred_fallthru
    _
  // Predicated region
  $region22: #{transformer_decoder_layer.5} parent=0 // pred_check
    _
  $region23: #{transformer_decoder_layer.5} parent=0 // pred_check_branch
    %23 = sbr.rel (0) target = $region25
  $region24: #{transformer_decoder_layer.5} parent=0 // pred_region
    _
  $region25: #{transformer_decoder_layer.5} parent=0 // pred_fallthru
    _
  // Predicated region
  $region26: #{transformer_decoder_layer.5} parent=0 // pred_check
    _
  $region27: #{transformer_decoder_layer.5} parent=0 // pred_check_branch
    %25 = sbr.rel (0) target = $region29
  $region28: #{transformer_decoder_layer.5} parent=0 // pred_region
    _
  $region29: #{transformer_decoder_layer.5} parent=0 // pred_fallthru
    _
  %p27 = scmp.eq.s32.totalorder 0, 0
  // Predicated region
  $region30: #{transformer_decoder_layer.5} parent=0 // pred_check
    %p28 = pneg %p27
  $region31: #{transformer_decoder_layer.5} parent=0 // pred_check_branch
    %30 = sbr.rel (%p28) target = $region33
  $region32: #{transformer_decoder_layer.5} parent=0 // pred_region
    %vm31 = vcmask 261120
    %32 = vst.msk [vmem:[#allocation2] sm:$0xff] %vm31, 0.0
    %33 = vst.msk [vmem:[#allocation2 + $0x8] sm:$0xff] %vm31, 0.0
  $region33: #{transformer_decoder_layer.5} parent=0 // pred_fallthru
    _
  %v34 = vld [vmem:[%s0] sm:$0xf]
  %v35 = vld [vmem:[%s0 + $0x4] sm:$0xf]
  %v36 = vld [vmem:[%s1] sm:$0xf]
  %v37 = vld [vmem:[%s1 + $0x4] sm:$0xf]
  %v38 = vld [vmem:[%s1 + $0x8] sm:$0xf]
  %v39 = vld [vmem:[%s1 + $0xc] sm:$0xf]
  %v40 = vld [vmem:[%s2] sm:$0x1]
  %v42 = vlaneseq
  %v43 = vshrl.u32 %v42, 7
  %v44 = vsub.s32 0, %v43
  %v45 = vrot.slane %v40, %v44
  %v49 = vunpack.c.l.b16 %v34
  %v50 = vunpack.c.l.b16 %v35
  %v51 = vpack.c.b16 %v50, %v49
  %v56 = vunpack.c.l.b16 %v36
  %v57 = vunpack.c.l.b16 %v37
  %v58 = vunpack.c.l.b16 %v38
  %v59 = vunpack.c.l.b16 %v39
  %v60 = vpack.c.b16 %v57, %v56
  %v61 = vpack.c.b16 %v59, %v58
  %vm64 = vcmask 261120
  %v66 = vsel %vm64, %v51, 0
  %68 = vmatprep.subr.bf16.mxu0 0
  %69 = vmatpush1.bf16.msra.mxu0 %v60
  %70 = vmatprep.subr.bf16.mxu0 0
  %71 = vmatpush1.bf16.msra.mxu0 %v61
  %72 = vmatprep.subr.bf16.mxu0 0
  %73 = vmatpush1.bf16.msra.mxu0 0
  %74 = vmatprep.subr.bf16.mxu0 0
  %75 = vmatpush1.bf16.msra.mxu0 0
  %76 = vmatprep.subr.bf16.mxu0 0
  %77 = vmatpush1.bf16.msra.mxu0 0
  %78 = vmatprep.subr.bf16.mxu0 0
  %79 = vmatpush1.bf16.msra.mxu0 0
  %80 = vmatprep.subr.bf16.mxu0 0
  %81 = vmatpush1.bf16.msra.mxu0 0
  %82 = vmatprep.subr.bf16.mxu0 0
  %83 = vmatpush1.bf16.msra.mxu0 0
  %84 = vmatprep.subr.bf16.mxu0 0
  %85 = vmatpush1.bf16.msra.mxu0 0
  %86 = vmatprep.subr.bf16.mxu0 0
  %87 = vmatpush1.bf16.msra.mxu0 0
  %88 = vmatprep.subr.bf16.mxu0 0
  %89 = vmatpush1.bf16.msra.mxu0 0
  %90 = vmatprep.subr.bf16.mxu0 0
  %91 = vmatpush1.bf16.msra.mxu0 0
  %92 = vmatprep.subr.bf16.mxu0 0
  %93 = vmatpush1.bf16.msra.mxu0 0
  %94 = vmatprep.subr.bf16.mxu0 0
  %95 = vmatpush1.bf16.msra.mxu0 0
  %96 = vmatprep.subr.bf16.mxu0 0
  %97 = vmatpush1.bf16.msra.mxu0 0
  %98 = vmatprep.subr.bf16.mxu0 0
  %99 = vmatpush1.bf16.msra.mxu0 0
  %100 = vmatprep.mubr.bf16.mxu0 0
  %101 = vmatmul.mubr.bf16.gmra.mrb[0].mxu0 %v66
  %v102 = vpop.f32.mrb[0].mxu0
  %v103 = vadd.f32 %v45, %v102
  %v104 = vpop.f32.mrb[0].mxu0
  %v105 = vpop.f32.mrb[0].mxu0
  %v106 = vadd.f32 %v45, %v105
  %v107 = vpop.f32.mrb[0].mxu0
  %108 = vdwg.mxu0
  %v109 = vmax.f32 %v103, 0.0
  %v110 = vmax.f32 %v106, 0.0
  %v111 = vpack.c.bf16 %v110, %v109
  %v112 = vld [vmem:[#allocation2] sm:$0xff]
  %v113 = vld [vmem:[#allocation2 + $0x8] sm:$0xff]
  %v114 = vld [vmem:[%s3] sm:$0xf]
  %v115 = vld [vmem:[%s3 + $0x4] sm:$0xf]
  %v116 = vld [vmem:[%s3 + $0x8] sm:$0xf]
  %v117 = vld [vmem:[%s3 + $0xc] sm:$0xf]
  %v118 = vld [vmem:[%s3 + $0x10] sm:$0xf]
  %v119 = vld [vmem:[%s3 + $0x14] sm:$0xf]
  %v120 = vld [vmem:[%s3 + $0x18] sm:$0xf]
  %v121 = vld [vmem:[%s3 + $0x1c] sm:$0xf]
  %v130 = vunpack.c.l.b16 %v114
  %v131 = vunpack.c.l.b16 %v115
  %v132 = vunpack.c.l.b16 %v116
  %v133 = vunpack.c.l.b16 %v117
  %v134 = vunpack.c.l.b16 %v118
  %v135 = vunpack.c.l.b16 %v119
  %v136 = vunpack.c.l.b16 %v120
  %v137 = vunpack.c.l.b16 %v121
  %v138 = vpack.c.b16 %v131, %v130
  %v139 = vpack.c.b16 %v133, %v132
  %v140 = vpack.c.b16 %v135, %v134
  %v141 = vpack.c.b16 %v137, %v136
  %vm146 = vcmask 523264
  %v148 = vsel %vm146, %v111, 0
  %150 = vmatprep.subr.bf16.mxu0 0
  %151 = vmatpush1.bf16.msra.mxu0 %v138
  %152 = vmatprep.subr.bf16.mxu0 0
  %153 = vmatpush1.bf16.msra.mxu0 %v139
  %154 = vmatprep.subr.bf16.mxu0 0
  %155 = vmatpush1.bf16.msra.mxu0 %v140
  %156 = vmatprep.subr.bf16.mxu0 0
  %157 = vmatpush1.bf16.msra.mxu0 %v141
  %158 = vmatprep.subr.bf16.mxu0 0
  %159 = vmatpush1.bf16.msra.mxu0 0
  %160 = vmatprep.subr.bf16.mxu0 0
  %161 = vmatpush1.bf16.msra.mxu0 0
  %162 = vmatprep.subr.bf16.mxu0 0
  %163 = vmatpush1.bf16.msra.mxu0 0
  %164 = vmatprep.subr.bf16.mxu0 0
  %165 = vmatpush1.bf16.msra.mxu0 0
  %166 = vmatprep.subr.bf16.mxu0 0
  %167 = vmatpush1.bf16.msra.mxu0 0
  %168 = vmatprep.subr.bf16.mxu0 0
  %169 = vmatpush1.bf16.msra.mxu0 0
  %170 = vmatprep.subr.bf16.mxu0 0
  %171 = vmatpush1.bf16.msra.mxu0 0
  %172 = vmatprep.subr.bf16.mxu0 0
  %173 = vmatpush1.bf16.msra.mxu0 0
  %174 = vmatprep.subr.bf16.mxu0 0
  %175 = vmatpush1.bf16.msra.mxu0 0
  %176 = vmatprep.subr.bf16.mxu0 0
  %177 = vmatpush1.bf16.msra.mxu0 0
  %178 = vmatprep.subr.bf16.mxu0 0
  %179 = vmatpush1.bf16.msra.mxu0 0
  %180 = vmatprep.subr.bf16.mxu0 0
  %181 = vmatpush1.bf16.msra.mxu0 0
  %182 = vmatprep.mubr.bf16.mxu0 0
  %183 = vmatmul.mubr.bf16.gmra.mrb[0].mxu0 %v148
  %v184 = vpop.f32.mrb[0].mxu0
  %v185 = vadd.f32 0.0, %v184
  %v186 = vpop.f32.mrb[0].mxu0
  %v187 = vpop.f32.mrb[0].mxu0
  %v188 = vadd.f32 0.0, %v187
  %v189 = vpop.f32.mrb[0].mxu0
  %190 = vdwg.mxu0
  %v191 = vadd.f32 %v112, %v185
  %v192 = vadd.f32 %v113, %v188
  %193 = vst.msk [vmem:[#allocation2] sm:$0xff] %vm64, %v191
  %194 = vst.msk [vmem:[#allocation2 + $0x8] sm:$0xff] %vm64, %v192
  // Predicated region
  $region34: #{transformer_decoder_layer.5} parent=0 // pred_check
    %p195 = pneg %p27
  $region35: #{transformer_decoder_layer.5} parent=0 // pred_check_branch
    %197 = sbr.rel (%p195) target = $region37
  $region36: #{transformer_decoder_layer.5} parent=0 // pred_region
    %v198 = vld [vmem:[%s0] sm:$0xf]
    %v199 = vld [vmem:[%s0 + $0x4] sm:$0xf]
    %v200 = vunpack.c.l.bf16 %v198
    %v201 = vunpack.c.l.bf16 %v199
    %v202 = vld [vmem:[#allocation2] sm:$0xff]
    %v203 = vld [vmem:[#allocation2 + $0x8] sm:$0xff]
    %v204 = vadd.f32 %v200, %v202
    %v205 = vadd.f32 %v201, %v203
    %v206 = vld [vmem:[%s4] sm:$0x1]
    %v208 = vlaneseq
    %v209 = vshrl.u32 %v208, 7
    %v210 = vsub.s32 0, %v209
    %v211 = vrot.slane %v206, %v210
    %v213 = vadd.f32 %v204, %v211
    %v214 = vadd.f32 %v205, %v211
    %v215 = vsel %vm64, %v213, 0.0
    %216 = vadd.xlane.f32.xlu0 %v215
    %v217 = vpop.xlane.xlu0 %216
    %v218 = vsel %vm64, %v214, 0.0
    %219 = vadd.xlane.f32.xlu0 %v218
    %v220 = vpop.xlane.xlu0 %219
    %v221 = vrcp.pop 32.0
    %v222 = vmul.f32 %v217, %v221
    %v223 = vmul.f32 %v220, %v221
    %v224 = vsub.f32 %v213, %v222
    %v225 = vsub.f32 %v214, %v223
    %v226 = vmul.f32 %v224, %v224
    %v227 = vmul.f32 %v225, %v225
    %v228 = vsel %vm64, %v226, 0.0
    %229 = vadd.xlane.f32.xlu0 %v228
    %v230 = vpop.xlane.xlu0 %229
    %v231 = vsel %vm64, %v227, 0.0
    %232 = vadd.xlane.f32.xlu0 %v231
    %v233 = vpop.xlane.xlu0 %232
    %v234 = vmul.f32 %v230, %v221
    %v235 = vmul.f32 %v233, %v221
    %v236 = vadd.f32 %v234, 1e-05
    %v237 = vadd.f32 %v235, 1e-05
    %v238 = vrsqrt.pop %v236
    %v239 = vrsqrt.pop %v237
    %v240 = vmul.f32 %v224, %v238
    %v241 = vmul.f32 %v225, %v239
    %v242 = vld [vmem:[%s5] sm:$0x1]
    %v244 = vlaneseq
    %v245 = vshrl.u32 %v244, 7
    %v246 = vsub.s32 0, %v245
    %v247 = vrot.slane %v242, %v246
    %v249 = vmul.f32 %v240, %v247
    %v250 = vmul.f32 %v241, %v247
    %v251 = vld [vmem:[%s6] sm:$0x1]
    %v253 = vlaneseq
    %v254 = vshrl.u32 %v253, 7
    %v255 = vsub.s32 0, %v254
    %v256 = vrot.slane %v251, %v255
    %v258 = vadd.f32 %v249, %v256
    %v259 = vadd.f32 %v250, %v256
    %260 = vst.msk [vmem:[%s7] sm:$0xff] %vm64, %v258
    %261 = vst.msk [vmem:[%s7 + $0x8] sm:$0xff] %vm64, %v259
  $region37: #{transformer_decoder_layer.5} parent=0 // pred_fallthru
    _
  // Predicated region
  $region38: #{transformer_decoder_layer.5} parent=0 // pred_check
    _
  $region39: #{transformer_decoder_layer.5} parent=0 // pred_check_branch
    %263 = sbr.rel (0) target = $region41
  $region40: #{transformer_decoder_layer.5} parent=0 // pred_region
    _
  $region41: #{transformer_decoder_layer.5} parent=0 // pred_fallthru
    _
  // Predicated region
  $region42: #{transformer_decoder_layer.5} parent=0 // pred_check
    _
  $region43: #{transformer_decoder_layer.5} parent=0 // pred_check_branch
    %265 = sbr.rel (0) target = $region45
  $region44: #{transformer_decoder_layer.5} parent=0 // pred_region
    _
  $region45: #{transformer_decoder_layer.5} parent=0 // pred_fallthru
    _

// kernel: transformer_decoder_layer.4
$region0: #{transformer_decoder_layer.4}
  #allocation0 [shape = 'u32[]', space=smem, size = 0x4, offset = 0x4, fixed_abs, tag = 'smem constant byte address 0x4 - core index']
  #allocation1 [shape = 'u32[144,128]{1,0:T(1,128)}', space=vmem, size = 0x12000, scoped, tag = 'internal scratch']
  #allocation2 [shape = 'bf16[4,8,8]{2,1,0:T(8,128)(2,1)}', space=vmem, size = 0x2000, scoped, tag = 'scratch operand']
  #allocation3 [shape = 'f32[4,8,8]{2,1,0:T(8,128)}', space=vmem, size = 0x4000, scoped, tag = 'scratch operand']
  #allocation4 [shape = 'f32[4,8,128]{2,1,0:T(8,128)}', space=vmem, size = 0x4000, scoped, tag = 'scratch operand']
  #allocation5 [shape = 'f32[4,8,128]{2,1,0:T(8,128)}', space=vmem, size = 0x4000, scoped, tag = 'scratch operand']
  %s0 = inlined_call_operand.vmem [shape: bf16[2,8,32], index: 0, kind: input, shape index: {}]
  %s1 = inlined_call_operand.vmem [shape: bf16[2,16,32], index: 1, kind: input, shape index: {}]
  %s2 = inlined_call_operand.vmem [shape: bf16[32,32], index: 2, kind: input, shape index: {}]
  %s3 = inlined_call_operand.vmem [shape: f32[1,32], index: 3, kind: input, shape index: {}]
  %s4 = inlined_call_operand.vmem [shape: bf16[32,64], index: 4, kind: input, shape index: {}]
  %s5 = inlined_call_operand.vmem [shape: f32[1,64], index: 5, kind: input, shape index: {}]
  %s6 = inlined_call_operand.vmem [shape: bf16[32,32], index: 6, kind: input, shape index: {}]
  %s7 = inlined_call_operand.vmem [shape: f32[1,32], index: 7, kind: input, shape index: {}]
  %s8 = inlined_call_operand.vmem [shape: f32[1,32], index: 8, kind: input, shape index: {}]
  %s9 = inlined_call_operand.vmem [shape: f32[1,32], index: 9, kind: input, shape index: {}]
  %s10 = inlined_call_operand.vmem [shape: bf16[2,8,32], index: 10, kind: output, shape index: {}]
  %s11 = sld [smem:[#allocation0]]
  $region81: #{transformer_decoder_layer.4} parent=0
    _
  %s13 = ssub.s32 1, %s11
  %s14 = scalar_select 0, %s13, %s11
  loop: start=0, step=1, limit=4
  $region2: #{transformer_decoder_layer.4} parent=0 // loop_pre_header
    _
  $region3: #{transformer_decoder_layer.4} parent=0 // loop_header
    %s16 = sphi 0, %s20
    %p17 = scmp.ge.s32.totalorder %s16, 4
    %s23 = sphi 0, %s42
    %s24 = sphi 0, %s38
    %s25 = sphi 0, %s34
    %s26 = sphi 0, %s23
    %s27 = sphi 0, %s24
    %s28 = sphi 0, %s25
    %s29 = sphi 0, %s26
    %s30 = sphi 0, %s27
    %s31 = sphi 0, %s28
    %s47 = sphi 0, %s49
    %s50 = sphi 0, %s47
    %s51 = sphi 0, %s50
    %s67 = sphi 0, %s51
    %s75 = sphi 0, %s77
    %s78 = sphi 0, %s75
    %s79 = sphi 0, %s78
    %s95 = sphi 0, %s79
    %s99 = sphi 0, %s99
    %s101 = sphi 0, %s99
    %s102 = sphi 0, %s101
    %s116 = sphi 0, %s102
    %s120 = sphi 0, %s120
    %s122 = sphi 0, %s120
    %s123 = sphi 0, %s122
    %s137 = sphi 0, %s123
    %s141 = sphi 0, %s141
    %s143 = sphi 0, %s141
    %s144 = sphi 0, %s143
    %s158 = sphi 0, %s144
    %s162 = sphi 0, %s162
    %s164 = sphi 0, %s162
    %s165 = sphi 0, %s164
    %s179 = sphi 0, %s165
    %s183 = sphi 0, %s183
    %s185 = sphi 0, %s183
    %s186 = sphi 0, %s185
    %s200 = sphi 0, %s186
    %s204 = sphi 0, %s204
    %s206 = sphi 0, %s204
    %s207 = sphi 0, %s206
    %s221 = sphi 0, %s207
    %s225 = sphi 0, %s225
    %s227 = sphi 0, %s225
    %s228 = sphi 0, %s227
    %s242 = sphi 0, %s228
    %s246 = sphi 0, %s246
    %s248 = sphi 0, %s246
    %s249 = sphi 0, %s248
    %s263 = sphi 0, %s249
    %s271 = sphi 0, %s273
    %s274 = sphi 0, %s271
    %s275 = sphi 0, %s274
    %s291 = sphi 0, %s275
  $region4: #{transformer_decoder_layer.4} parent=0 // loop_header_branch
    %19 = sbr.rel (%p17) target = $region8
  $region5: #{transformer_decoder_layer.4} parent=0 // loop_body
    %s21 = ssub.s32 %s16, 1
    %s22 = ssub.s32 %s16, 2
    %s32 = sadd.s32 1, %s25
    %p33 = scmp.ge.s32.totalorder %s32, 1
    %s34 = scalar_select %p33, 0, %s32
    %s35 = sadd.s32 1, %s24
    %s36 = scalar_select %p33, %s35, %s24
    %p37 = scmp.ge.s32.totalorder %s36, 1
    %s38 = scalar_select %p37, 0, %s36
    %s39 = sadd.s32 1, %s23
    %s40 = scalar_select %p37, %s39, %s23
    %p41 = scmp.ge.s32.totalorder %s40, 2
    %s42 = scalar_select %p41, 0, %s40
    %s43 = ssub.s32 %s23, %s42
    %s44 = ssub.s32 %s24, %s38
    %s45 = sor.u32 %s43, %s44
    %p46 = scmp.eq.s32.totalorder %s45, 0
    %s48 = sadd.s32 %s47, 1
    %s49 = scalar_select %p46, %s47, %s48
    %p52 = pneg %p46
    %p53 = scmp.eq.s32.totalorder %s16, 1
    %p54 = por %p52, %p53
    %p55 = scmp.ne.s32.totalorder %s47, %s50
    %p56 = scmp.eq.s32.totalorder %s16, 0
    %p57 = por %p55, %p56
    %p58 = scmp.ne.s32.totalorder %s47, %s50
    %p59 = scmp.eq.s32.totalorder %s21, 1
    %p60 = por %p58, %p59
    %p61 = scmp.ne.s32.totalorder %s50, %s51
    %p62 = scmp.eq.s32.totalorder %s21, 0
    %p63 = por %p61, %p62
    %p64 = scmp.ne.s32.totalorder %s50, %s51
    %p65 = scmp.eq.s32.totalorder %s22, 1
    %p66 = por %p64, %p65
    %p68 = scmp.ne.s32.totalorder %s51, %s67
    %p69 = scmp.eq.s32.totalorder %s22, 0
    %p70 = por %p68, %p69
    %s71 = ssub.s32 %s23, %s42
    %s72 = ssub.s32 %s25, %s34
    %s73 = sor.u32 %s71, %s72
    %p74 = scmp.eq.s32.totalorder %s73, 0
    %s76 = sadd.s32 %s75, 1
    %s77 = scalar_select %p74, %s75, %s76
    %p80 = pneg %p74
    %p81 = scmp.eq.s32.totalorder %s16, 1
    %p82 = por %p80, %p81
    %p83 = scmp.ne.s32.totalorder %s75, %s78
    %p84 = scmp.eq.s32.totalorder %s16, 0
    %p85 = por %p83, %p84
    %p86 = scmp.ne.s32.totalorder %s75, %s78
    %p87 = scmp.eq.s32.totalorder %s21, 1
    %p88 = por %p86, %p87
    %p89 = scmp.ne.s32.totalorder %s78, %s79
    %p90 = scmp.eq.s32.totalorder %s21, 0
    %p91 = por %p89, %p90
    %p92 = scmp.ne.s32.totalorder %s78, %s79
    %p93 = scmp.eq.s32.totalorder %s22, 1
    %p94 = por %p92, %p93
    %p96 = scmp.ne.s32.totalorder %s79, %s95
    %p97 = scmp.eq.s32.totalorder %s22, 0
    %p98 = por %p96, %p97
    %s100 = sadd.s32 %s99, 1
    %p103 = scmp.eq.s32.totalorder %s16, 1
    %p104 = scmp.ne.s32.totalorder %s99, %s101
    %p105 = scmp.eq.s32.totalorder %s16, 0
    %p106 = por %p104, %p105
    %p107 = scmp.ne.s32.totalorder %s99, %s101
    %p108 = scmp.eq.s32.totalorder %s21, 1
    %p109 = por %p107, %p108
    %p110 = scmp.ne.s32.totalorder %s101, %s102
    %p111 = scmp.eq.s32.totalorder %s21, 0
    %p112 = por %p110, %p111
    %p113 = scmp.ne.s32.totalorder %s101, %s102
    %p114 = scmp.eq.s32.totalorder %s22, 1
    %p115 = por %p113, %p114
    %p117 = scmp.ne.s32.totalorder %s102, %s116
    %p118 = scmp.eq.s32.totalorder %s22, 0
    %p119 = por %p117, %p118
    %s121 = sadd.s32 %s120, 1
    %p124 = scmp.eq.s32.totalorder %s16, 1
    %p125 = scmp.ne.s32.totalorder %s120, %s122
    %p126 = scmp.eq.s32.totalorder %s16, 0
    %p127 = por %p125, %p126
    %p128 = scmp.ne.s32.totalorder %s120, %s122
    %p129 = scmp.eq.s32.totalorder %s21, 1
    %p130 = por %p128, %p129
    %p131 = scmp.ne.s32.totalorder %s122, %s123
    %p132 = scmp.eq.s32.totalorder %s21, 0
    %p133 = por %p131, %p132
    %p134 = scmp.ne.s32.totalorder %s122, %s123
    %p135 = scmp.eq.s32.totalorder %s22, 1
    %p136 = por %p134, %p135
    %p138 = scmp.ne.s32.totalorder %s123, %s137
    %p139 = scmp.eq.s32.totalorder %s22, 0
    %p140 = por %p138, %p139
    %s142 = sadd.s32 %s141, 1
    %p145 = scmp.eq.s32.totalorder %s16, 1
    %p146 = scmp.ne.s32.totalorder %s141, %s143
    %p147 = scmp.eq.s32.totalorder %s16, 0
    %p148 = por %p146, %p147
    %p149 = scmp.ne.s32.totalorder %s141, %s143
    %p150 = scmp.eq.s32.totalorder %s21, 1
    %p151 = por %p149, %p150
    %p152 = scmp.ne.s32.totalorder %s143, %s144
    %p153 = scmp.eq.s32.totalorder %s21, 0
    %p154 = por %p152, %p153
    %p155 = scmp.ne.s32.totalorder %s143, %s144
    %p156 = scmp.eq.s32.totalorder %s22, 1
    %p157 = por %p155, %p156
    %p159 = scmp.ne.s32.totalorder %s144, %s158
    %p160 = scmp.eq.s32.totalorder %s22, 0
    %p161 = por %p159, %p160
    %s163 = sadd.s32 %s162, 1
    %p166 = scmp.eq.s32.totalorder %s16, 1
    %p167 = scmp.ne.s32.totalorder %s162, %s164
    %p168 = scmp.eq.s32.totalorder %s16, 0
    %p169 = por %p167, %p168
    %p170 = scmp.ne.s32.totalorder %s162, %s164
    %p171 = scmp.eq.s32.totalorder %s21, 1
    %p172 = por %p170, %p171
    %p173 = scmp.ne.s32.totalorder %s164, %s165
    %p174 = scmp.eq.s32.totalorder %s21, 0
    %p175 = por %p173, %p174
    %p176 = scmp.ne.s32.totalorder %s164, %s165
    %p177 = scmp.eq.s32.totalorder %s22, 1
    %p178 = por %p176, %p177
    %p180 = scmp.ne.s32.totalorder %s165, %s179
    %p181 = scmp.eq.s32.totalorder %s22, 0
    %p182 = por %p180, %p181
    %s184 = sadd.s32 %s183, 1
    %p187 = scmp.eq.s32.totalorder %s16, 1
    %p188 = scmp.ne.s32.totalorder %s183, %s185
    %p189 = scmp.eq.s32.totalorder %s16, 0
    %p190 = por %p188, %p189
    %p191 = scmp.ne.s32.totalorder %s183, %s185
    %p192 = scmp.eq.s32.totalorder %s21, 1
    %p193 = por %p191, %p192
    %p194 = scmp.ne.s32.totalorder %s185, %s186
    %p195 = scmp.eq.s32.totalorder %s21, 0
    %p196 = por %p194, %p195
    %p197 = scmp.ne.s32.totalorder %s185, %s186
    %p198 = scmp.eq.s32.totalorder %s22, 1
    %p199 = por %p197, %p198
    %p201 = scmp.ne.s32.totalorder %s186, %s200
    %p202 = scmp.eq.s32.totalorder %s22, 0
    %p203 = por %p201, %p202
    %s205 = sadd.s32 %s204, 1
    %p208 = scmp.eq.s32.totalorder %s16, 1
    %p209 = scmp.ne.s32.totalorder %s204, %s206
    %p210 = scmp.eq.s32.totalorder %s16, 0
    %p211 = por %p209, %p210
    %p212 = scmp.ne.s32.totalorder %s204, %s206
    %p213 = scmp.eq.s32.totalorder %s21, 1
    %p214 = por %p212, %p213
    %p215 = scmp.ne.s32.totalorder %s206, %s207
    %p216 = scmp.eq.s32.totalorder %s21, 0
    %p217 = por %p215, %p216
    %p218 = scmp.ne.s32.totalorder %s206, %s207
    %p219 = scmp.eq.s32.totalorder %s22, 1
    %p220 = por %p218, %p219
    %p222 = scmp.ne.s32.totalorder %s207, %s221
    %p223 = scmp.eq.s32.totalorder %s22, 0
    %p224 = por %p222, %p223
    %s226 = sadd.s32 %s225, 1
    %p229 = scmp.eq.s32.totalorder %s16, 1
    %p230 = scmp.ne.s32.totalorder %s225, %s227
    %p231 = scmp.eq.s32.totalorder %s16, 0
    %p232 = por %p230, %p231
    %p233 = scmp.ne.s32.totalorder %s225, %s227
    %p234 = scmp.eq.s32.totalorder %s21, 1
    %p235 = por %p233, %p234
    %p236 = scmp.ne.s32.totalorder %s227, %s228
    %p237 = scmp.eq.s32.totalorder %s21, 0
    %p238 = por %p236, %p237
    %p239 = scmp.ne.s32.totalorder %s227, %s228
    %p240 = scmp.eq.s32.totalorder %s22, 1
    %p241 = por %p239, %p240
    %p243 = scmp.ne.s32.totalorder %s228, %s242
    %p244 = scmp.eq.s32.totalorder %s22, 0
    %p245 = por %p243, %p244
    %s247 = sadd.s32 %s246, 1
    %p250 = scmp.eq.s32.totalorder %s16, 1
    %p251 = scmp.ne.s32.totalorder %s246, %s248
    %p252 = scmp.eq.s32.totalorder %s16, 0
    %p253 = por %p251, %p252
    %p254 = scmp.ne.s32.totalorder %s246, %s248
    %p255 = scmp.eq.s32.totalorder %s21, 1
    %p256 = por %p254, %p255
    %p257 = scmp.ne.s32.totalorder %s248, %s249
    %p258 = scmp.eq.s32.totalorder %s21, 0
    %p259 = por %p257, %p258
    %p260 = scmp.ne.s32.totalorder %s248, %s249
    %p261 = scmp.eq.s32.totalorder %s22, 1
    %p262 = por %p260, %p261
    %p264 = scmp.ne.s32.totalorder %s249, %s263
    %p265 = scmp.eq.s32.totalorder %s22, 0
    %p266 = por %p264, %p265
    %s267 = ssub.s32 %s23, %s42
    %s268 = ssub.s32 %s24, %s38
    %s269 = sor.u32 %s267, %s268
    %p270 = scmp.eq.s32.totalorder %s269, 0
    %s272 = sadd.s32 %s271, 1
    %s273 = scalar_select %p270, %s271, %s272
    %p276 = pneg %p270
    %p277 = scmp.eq.s32.totalorder %s16, 1
    %p278 = por %p276, %p277
    %p279 = scmp.ne.s32.totalorder %s271, %s274
    %p280 = scmp.eq.s32.totalorder %s16, 0
    %p281 = por %p279, %p280
    %p282 = scmp.ne.s32.totalorder %s271, %s274
    %p283 = scmp.eq.s32.totalorder %s21, 1
    %p284 = por %p282, %p283
    %p285 = scmp.ne.s32.totalorder %s274, %s275
    %p286 = scmp.eq.s32.totalorder %s21, 0
    %p287 = por %p285, %p286
    %p288 = scmp.ne.s32.totalorder %s274, %s275
    %p289 = scmp.eq.s32.totalorder %s22, 1
    %p290 = por %p288, %p289
    %p292 = scmp.ne.s32.totalorder %s275, %s291
    %p293 = scmp.eq.s32.totalorder %s22, 0
    %p294 = por %p292, %p293
    %p295 = scmp.le.s32.totalorder 1, %s16
    %p296 = scmp.lt.s32.totalorder %s16, 3
    %p297 = pnand %p295, %p296
    %p298 = pneg %p297
    // Predicated region
    $region9: #{transformer_decoder_layer.4} parent=5 // pred_check
      _
    $region10: #{transformer_decoder_layer.4} parent=5 // pred_check_branch
      %300 = sbr.rel (%p297) target = $region12
    $region11: #{transformer_decoder_layer.4} parent=5 // pred_region
      %s301 = ssub.s32 %s16, 1
      // Predicated region
      $region13: #{transformer_decoder_layer.4} parent=11 // pred_check
        %p302 = pneg %p112
      $region14: #{transformer_decoder_layer.4} parent=11 // pred_check_branch
        %304 = sbr.rel (%p302) target = $region16
      $region15: #{transformer_decoder_layer.4} parent=11 // pred_region
        _
      $region16: #{transformer_decoder_layer.4} parent=11 // pred_fallthru
        _
      // Predicated region
      $region17: #{transformer_decoder_layer.4} parent=11 // pred_check
        %p305 = pneg %p133
      $region18: #{transformer_decoder_layer.4} parent=11 // pred_check_branch
        %307 = sbr.rel (%p305) target = $region20
      $region19: #{transformer_decoder_layer.4} parent=11 // pred_region
        _
      $region20: #{transformer_decoder_layer.4} parent=11 // pred_fallthru
        _
      // Predicated region
      $region21: #{transformer_decoder_layer.4} parent=11 // pred_check
        %p308 = pneg %p154
      $region22: #{transformer_decoder_layer.4} parent=11 // pred_check_branch
        %310 = sbr.rel (%p308) target = $region24
      $region23: #{transformer_decoder_layer.4} parent=11 // pred_region
        _
      $region24: #{transformer_decoder_layer.4} parent=11 // pred_fallthru
        _
      // Predicated region
      $region25: #{transformer_decoder_layer.4} parent=11 // pred_check
        %p311 = pneg %p175
      $region26: #{transformer_decoder_layer.4} parent=11 // pred_check_branch
        %313 = sbr.rel (%p311) target = $region28
      $region27: #{transformer_decoder_layer.4} parent=11 // pred_region
        _
      $region28: #{transformer_decoder_layer.4} parent=11 // pred_fallthru
        _
      // Predicated region
      $region29: #{transformer_decoder_layer.4} parent=11 // pred_check
        %p314 = pneg %p196
      $region30: #{transformer_decoder_layer.4} parent=11 // pred_check_branch
        %316 = sbr.rel (%p314) target = $region32
      $region31: #{transformer_decoder_layer.4} parent=11 // pred_region
        _
      $region32: #{transformer_decoder_layer.4} parent=11 // pred_fallthru
        _
      // Predicated region
      $region33: #{transformer_decoder_layer.4} parent=11 // pred_check
        %p317 = pneg %p217
      $region34: #{transformer_decoder_layer.4} parent=11 // pred_check_branch
        %319 = sbr.rel (%p317) target = $region36
      $region35: #{transformer_decoder_layer.4} parent=11 // pred_region
        _
      $region36: #{transformer_decoder_layer.4} parent=11 // pred_fallthru
        _
      // Predicated region
      $region37: #{transformer_decoder_layer.4} parent=11 // pred_check
        %p320 = pneg %p238
      $region38: #{transformer_decoder_layer.4} parent=11 // pred_check_branch
        %322 = sbr.rel (%p320) target = $region40
      $region39: #{transformer_decoder_layer.4} parent=11 // pred_region
        _
      $region40: #{transformer_decoder_layer.4} parent=11 // pred_fallthru
        _
      // Predicated region
      $region41: #{transformer_decoder_layer.4} parent=11 // pred_check
        %p323 = pneg %p259
      $region42: #{transformer_decoder_layer.4} parent=11 // pred_check_branch
        %325 = sbr.rel (%p323) target = $region44
      $region43: #{transformer_decoder_layer.4} parent=11 // pred_region
        _
      $region44: #{transformer_decoder_layer.4} parent=11 // pred_fallthru
        _
    $region12: #{transformer_decoder_layer.4} parent=5 // pred_fallthru
      _
    %p326 = scmp.lt.s32.totalorder %s16, 2
    // Predicated region
    $region45: #{transformer_decoder_layer.4} parent=5 // pred_check
      %p327 = pneg %p326
    $region46: #{transformer_decoder_layer.4} parent=5 // pred_check_branch
      %329 = sbr.rel (%p327) target = $region48
    $region47: #{transformer_decoder_layer.4} parent=5 // pred_region
      // Predicated region
      $region49: #{transformer_decoder_layer.4} parent=47 // pred_check
        %p330 = pneg %p57
      $region50: #{transformer_decoder_layer.4} parent=47 // pred_check_branch
        %332 = sbr.rel (%p330) target = $region52
      $region51: #{transformer_decoder_layer.4} parent=47 // pred_region
        %p333 = scmp.lt.s32.totalorder %s23, 1
        %s334 = scalar_select %p333, %s23, 1
        %p335 = scmp.lt.s32.totalorder %s24, 0
        %s336 = scalar_select %p335, %s24, 0
        %s337 = sadd.s32 %s336, %s334
        %s338 = smul.addr %s337, 4
        %s339 = scalar_lea.vmem %s0, %s338
      $region52: #{transformer_decoder_layer.4} parent=47 // pred_fallthru
        _
      // Predicated region
      $region53: #{transformer_decoder_layer.4} parent=47 // pred_check
        %p340 = pneg %p85
      $region54: #{transformer_decoder_layer.4} parent=47 // pred_check_branch
        %342 = sbr.rel (%p340) target = $region56
      $region55: #{transformer_decoder_layer.4} parent=47 // pred_region
        %s343 = smul.u32 2, %s25
        %p344 = scmp.lt.s32.totalorder %s23, 1
        %s345 = scalar_select %p344, %s23, 1
        %p346 = scmp.lt.s32.totalorder %s343, 1
        %s347 = scalar_select %p346, %s343, 1
        %s348 = smul.addr %s345, 2
        %s349 = sadd.s32 %s347, %s348
        %s350 = smul.addr %s349, 4
        %s351 = scalar_lea.vmem %s1, %s350
        %s352 = smul.u32 2, %s25
      $region56: #{transformer_decoder_layer.4} parent=47 // pred_fallthru
        _
    $region48: #{transformer_decoder_layer.4} parent=5 // pred_fallthru
      _
    %p353 = scmp.le.s32.totalorder 1, %s16
    %p354 = scmp.lt.s32.totalorder %s16, 3
    %p355 = pnand %p353, %p354
    %p356 = pneg %p355
    // Predicated region
    $region57: #{transformer_decoder_layer.4} parent=5 // pred_check
      _
    $region58: #{transformer_decoder_layer.4} parent=5 // pred_check_branch
      %358 = sbr.rel (%p355) target = $region60
    $region59: #{transformer_decoder_layer.4} parent=5 // pred_region
      %s359 = ssub.s32 %s16, 1
      %p360 = scmp.lt.s32.totalorder %s26, 1
      %s361 = scalar_select %p360, %s26, 1
      %p362 = scmp.lt.s32.totalorder %s27, 0
      %s363 = scalar_select %p362, %s27, 0
      %s364 = sadd.s32 %s363, %s361
      %s365 = smul.addr %s364, 4
      %s366 = scalar_lea.vmem %s0, %s365
      %p367 = pneg %p63
      %p368 = pneg %p60
      %s369 = smul.u32 2, %s28
      %p370 = scmp.lt.s32.totalorder %s26, 1
      %s371 = scalar_select %p370, %s26, 1
      %p372 = scmp.lt.s32.totalorder %s369, 1
      %s373 = scalar_select %p372, %s369, 1
      %s374 = smul.addr %s371, 2
      %s375 = sadd.s32 %s373, %s374
      %s376 = smul.addr %s375, 4
      %s377 = scalar_lea.vmem %s1, %s376
      %p378 = pneg %p91
      %p379 = pneg %p88
      %p380 = pneg %p112
      %p381 = pneg %p109
      %p382 = pneg %p133
      %p383 = pneg %p130
      %p384 = pneg %p154
      %p385 = pneg %p151
      %p386 = pneg %p175
      %p387 = pneg %p172
      %p388 = pneg %p196
      %p389 = pneg %p193
      %p390 = pneg %p217
      %p391 = pneg %p214
      %p392 = pneg %p238
      %p393 = pneg %p235
      %p394 = pneg %p259
      %p395 = pneg %p256
      %p396 = pneg %p287
      %p397 = pneg %p284
      %p398 = scmp.lt.s32.totalorder %s26, 1
      %s399 = scalar_select %p398, %s26, 1
      %p400 = scmp.lt.s32.totalorder %s27, 0
      %s401 = scalar_select %p400, %s27, 0
      %s402 = sadd.s32 %s401, %s399
      %s403 = smul.addr %s402, 4
      %s404 = scalar_lea.vmem %s10, %s403
      %p405 = scmp.lt.s32.totalorder %s26, 1
      %s406 = scalar_select %p405, %s26, 1
      %p407 = scmp.lt.s32.totalorder %s27, 0
      %s408 = scalar_select %p407, %s27, 0
      %s409 = sadd.s32 %s408, %s406
      %s410 = smul.addr %s409, 4
      %s411 = scalar_lea.vmem %s0, %s410
      %s412 = smul.u32 2, %s28
      %p413 = scmp.lt.s32.totalorder %s26, 1
      %s414 = scalar_select %p413, %s26, 1
      %p415 = scmp.lt.s32.totalorder %s412, 1
      %s416 = scalar_select %p415, %s412, 1
      %s417 = smul.addr %s414, 2
      %s418 = sadd.s32 %s416, %s417
      %s419 = smul.addr %s418, 4
      %s420 = scalar_lea.vmem %s1, %s419
      %s421 = smul.u32 2, %s28
      %p422 = scmp.lt.s32.totalorder %s26, 1
      %s423 = scalar_select %p422, %s26, 1
      %p424 = scmp.lt.s32.totalorder %s27, 0
      %s425 = scalar_select %p424, %s27, 0
      %s426 = sadd.s32 %s425, %s423
      %s427 = smul.addr %s426, 4
      %s428 = scalar_lea.vmem %s10, %s427
      %p430 = scmp.eq.s32.totalorder %s28, 0
      // Predicated region
      $region61: #{transformer_decoder_layer.4} parent=59 // pred_check
        %p431 = pneg %p430
      $region62: #{transformer_decoder_layer.4} parent=59 // pred_check_branch
        %433 = sbr.rel (%p431) target = $region64
      $region63: #{transformer_decoder_layer.4} parent=59 // pred_region
        %v434 = vld [vmem:[%s411] sm:$0xf]
        %v435 = vld [vmem:[%s2] sm:$0xf]
        %v436 = vld [vmem:[%s2 + $0x4] sm:$0xf]
        %v437 = vld [vmem:[%s2 + $0x8] sm:$0xf]
        %v438 = vld [vmem:[%s2 + $0xc] sm:$0xf]
        %v439 = vld [vmem:[%s3] sm:$0x1]
        %v441 = vlaneseq
        %v442 = vshrl.u32 %v441, 7
        %v443 = vsub.s32 0, %v442
        %v444 = vrot.slane %v439, %v443
        %v450 = vunpack.c.l.b16 %v435
        %v451 = vunpack.c.l.b16 %v436
        %v452 = vunpack.c.l.b16 %v437
        %v453 = vunpack.c.l.b16 %v438
        %v454 = vpack.c.b16 %v451, %v450
        %v455 = vpack.c.b16 %v453, %v452
        %vm458 = vcmask 261120
        %v460 = vsel %vm458, %v434, 0
        %462 = vmatprep.subr.bf16.mxu0 0
        %463 = vmatpush1.bf16.msra.mxu0 %v454
        %464 = vmatprep.subr.bf16.mxu0 0
        %465 = vmatpush1.bf16.msra.mxu0 %v455
        %466 = vmatprep.subr.bf16.mxu0 0
        %467 = vmatpush1.bf16.msra.mxu0 0
        %468 = vmatprep.subr.bf16.mxu0 0
        %469 = vmatpush1.bf16.msra.mxu0 0
        %470 = vmatprep.subr.bf16.mxu0 0
        %471 = vmatpush1.bf16.msra.mxu0 0
        %472 = vmatprep.subr.bf16.mxu0 0
        %473 = vmatpush1.bf16.msra.mxu0 0
        %474 = vmatprep.subr.bf16.mxu0 0
        %475 = vmatpush1.bf16.msra.mxu0 0
        %476 = vmatprep.subr.bf16.mxu0 0
        %477 = vmatpush1.bf16.msra.mxu0 0
        %478 = vmatprep.subr.bf16.mxu0 0
        %479 = vmatpush1.bf16.msra.mxu0 0
        %480 = vmatprep.subr.bf16.mxu0 0
        %481 = vmatpush1.bf16.msra.mxu0 0
        %482 = vmatprep.subr.bf16.mxu0 0
        %483 = vmatpush1.bf16.msra.mxu0 0
        %484 = vmatprep.subr.bf16.mxu0 0
        %485 = vmatpush1.bf16.msra.mxu0 0
        %486 = vmatprep.subr.bf16.mxu0 0
        %487 = vmatpush1.bf16.msra.mxu0 0
        %488 = vmatprep.subr.bf16.mxu0 0
        %489 = vmatpush1.bf16.msra.mxu0 0
        %490 = vmatprep.subr.bf16.mxu0 0
        %491 = vmatpush1.bf16.msra.mxu0 0
        %492 = vmatprep.subr.bf16.mxu0 0
        %493 = vmatpush1.bf16.msra.mxu0 0
        %494 = vmatprep.mubr.bf16.mxu0 0
        %495 = vmatmul.mubr.bf16.gmra.mrb[0].mxu0 %v460
        %v496 = vpop.f32.mrb[0].mxu0
        %v497 = vadd.f32 %v444, %v496
        %v498 = vpop.f32.mrb[0].mxu0
        %v499 = vpop.f32.mrb[0].mxu0
        %v500 = vpop.f32.mrb[0].mxu0
        %501 = vdwg.mxu0
        %v502 = vmul.f32 %v497, 0.35355338
        %v503 = vpack.c.bf16 %v502, %v502
        %505 = vrot.lane.b32.xlu0 %v503, 120
        %v506 = vpop.permute.xlu0 %505
        %508 = vrot.lane.b32.xlu0 %v503, 112
        %v509 = vpop.permute.xlu0 %508
        %511 = vrot.lane.b32.xlu0 %v503, 104
        %v512 = vpop.permute.xlu0 %511
        %vm514 = vcmask 60416
        %515 = vst.msk [vmem:[#allocation2] sm:$0xf] %vm514, %v503
        %516 = vst.msk [vmem:[#allocation2 + $0x4] sm:$0xf] %vm514, %v506
        %517 = vst.msk [vmem:[#allocation2 + $0x8] sm:$0xf] %vm514, %v509
        %518 = vst.msk [vmem:[#allocation2 + $0xc] sm:$0xf] %vm514, %v512
        %vm519 = vcmask 64512
        %520 = vst.msk [vmem:[#allocation3] sm:$0xff] %vm519, 0.0
        %521 = vst.msk [vmem:[#allocation3 + $0x8] sm:$0xff] %vm519, 0.0
        %522 = vst.msk [vmem:[#allocation3 + $0x10] sm:$0xff] %vm519, 0.0
        %523 = vst.msk [vmem:[#allocation3 + $0x18] sm:$0xff] %vm519, 0.0
        %524 = vst [vmem:[#allocation4] sm:$0xff] -inf
        %525 = vst [vmem:[#allocation4 + $0x8] sm:$0xff] -inf
        %526 = vst [vmem:[#allocation4 + $0x10] sm:$0xff] -inf
        %527 = vst [vmem:[#allocation4 + $0x18] sm:$0xff] -inf
        %528 = vst [vmem:[#allocation5] sm:$0xff] 0.0
        %529 = vst [vmem:[#allocation5 + $0x8] sm:$0xff] 0.0
        %530 = vst [vmem:[#allocation5 + $0x10] sm:$0xff] 0.0
        %531 = vst [vmem:[#allocation5 + $0x18] sm:$0xff] 0.0
      $region64: #{transformer_decoder_layer.4} parent=59 // pred_fallthru
        _
      %v532 = vld [vmem:[%s420] sm:$0xf]
      %v533 = vld [vmem:[%s420 + $0x4] sm:$0xf]
      %v534 = vld [vmem:[%s4] sm:$0xf]
      %v535 = vld [vmem:[%s4 + $0x4] sm:$0xf]
      %v536 = vld [vmem:[%s4 + $0x8] sm:$0xf]
      %v537 = vld [vmem:[%s4 + $0xc] sm:$0xf]
      %v538 = vld [vmem:[%s5] sm:$0x1]
      %v540 = vlaneseq
      %v541 = vshrl.u32 %v540, 7
      %v542 = vsub.s32 0, %v541
      %v543 = vrot.slane %v538, %v542
      %v547 = vunpack.c.l.b16 %v532
      %v548 = vunpack.c.l.b16 %v533
      %v549 = vpack.c.b16 %v548, %v547
      %v554 = vunpack.c.l.b16 %v534
      %v555 = vunpack.c.l.b16 %v535
      %v556 = vunpack.c.l.b16 %v536
      %v557 = vunpack.c.l.b16 %v537
      %v558 = vpack.c.b16 %v555, %v554
      %v559 = vpack.c.b16 %v557, %v556
      %vm562 = vcmask 261120
      %v564 = vsel %vm562, %v549, 0
      %566 = vmatprep.subr.bf16.mxu0 0
      %567 = vmatpush1.bf16.msra.mxu0 %v558
      %568 = vmatprep.subr.bf16.mxu0 0
      %569 = vmatpush1.bf16.msra.mxu0 %v559
      %570 = vmatprep.subr.bf16.mxu0 0
      %571 = vmatpush1.bf16.msra.mxu0 0
      %572 = vmatprep.subr.bf16.mxu0 0
      %573 = vmatpush1.bf16.msra.mxu0 0
      %574 = vmatprep.subr.bf16.mxu0 0
      %575 = vmatpush1.bf16.msra.mxu0 0
      %576 = vmatprep.subr.bf16.mxu0 0
      %577 = vmatpush1.bf16.msra.mxu0 0
      %578 = vmatprep.subr.bf16.mxu0 0
      %579 = vmatpush1.bf16.msra.mxu0 0
      %580 = vmatprep.subr.bf16.mxu0 0
      %581 = vmatpush1.bf16.msra.mxu0 0
      %582 = vmatprep.subr.bf16.mxu0 0
      %583 = vmatpush1.bf16.msra.mxu0 0
      %584 = vmatprep.subr.bf16.mxu0 0
      %585 = vmatpush1.bf16.msra.mxu0 0
      %586 = vmatprep.subr.bf16.mxu0 0
      %587 = vmatpush1.bf16.msra.mxu0 0
      %588 = vmatprep.subr.bf16.mxu0 0
      %589 = vmatpush1.bf16.msra.mxu0 0
      %590 = vmatprep.subr.bf16.mxu0 0
      %591 = vmatpush1.bf16.msra.mxu0 0
      %592 = vmatprep.subr.bf16.mxu0 0
      %593 = vmatpush1.bf16.msra.mxu0 0
      %594 = vmatprep.subr.bf16.mxu0 0
      %595 = vmatpush1.bf16.msra.mxu0 0
      %596 = vmatprep.subr.bf16.mxu0 0
      %597 = vmatpush1.bf16.msra.mxu0 0
      %598 = vmatprep.mubr.bf16.mxu0 0
      %599 = vmatmul.mubr.bf16.gmra.mrb[0].mxu0 %v564
      %v600 = vpop.f32.mrb[0].mxu0
      %v601 = vadd.f32 %v543, %v600
      %v602 = vpop.f32.mrb[0].mxu0
      %v603 = vpop.f32.mrb[0].mxu0
      %v604 = vadd.f32 %v543, %v603
      %v605 = vpop.f32.mrb[0].mxu0
      %606 = vdwg.mxu0
      %v607 = vpack.c.bf16 %v604, %v601
      %609 = vrot.lane.b32.xlu0 %v607, 120
      %v610 = vpop.permute.xlu0 %609
      %611 = vrot.lane.b32.xlu0 %v607, 112
      %v612 = vpop.permute.xlu0 %611
      %613 = vrot.lane.b32.xlu0 %v607, 104
      %v614 = vpop.permute.xlu0 %613
      %v615 = vld [vmem:[#allocation2] sm:$0xf]
      %v616 = vld [vmem:[#allocation2 + $0x4] sm:$0xf]
      %v617 = vld [vmem:[#allocation2 + $0x8] sm:$0xf]
      %v618 = vld [vmem:[#allocation2 + $0xc] sm:$0xf]
      %vm619 = vcmask 64512
      %v621 = vsel %vm619, %v615, 0
      %v624 = vsel %vm619, %v607, 0
      %626 = vmatprep.subr.bf16.mxu0 0
      %627 = vmatpush1.bf16.xpose.msra.mxu0 %v624
      %628 = vmatprep.subr.bf16.mxu0 0
      %629 = vmatpush1.bf16.xpose.msra.mxu0 0
      %630 = vmatprep.subr.bf16.mxu0 0
      %631 = vmatpush1.bf16.xpose.msra.mxu0 0
      %632 = vmatprep.subr.bf16.mxu0 0
      %633 = vmatpush1.bf16.xpose.msra.mxu0 0
      %634 = vmatprep.subr.bf16.mxu0 0
      %635 = vmatpush1.bf16.xpose.msra.mxu0 0
      %636 = vmatprep.subr.bf16.mxu0 0
      %637 = vmatpush1.bf16.xpose.msra.mxu0 0
      %638 = vmatprep.subr.bf16.mxu0 0
      %639 = vmatpush1.bf16.xpose.msra.mxu0 0
      %640 = vmatprep.subr.bf16.mxu0 0
      %641 = vmatpush1.bf16.xpose.msra.mxu0 0
      %642 = vmatprep.subr.bf16.mxu0 0
      %643 = vmatpush1.bf16.xpose.msra.mxu0 0
      %644 = vmatprep.subr.bf16.mxu0 0
      %645 = vmatpush1.bf16.xpose.msra.mxu0 0
      %646 = vmatprep.subr.bf16.mxu0 0
      %647 = vmatpush1.bf16.xpose.msra.mxu0 0
      %648 = vmatprep.subr.bf16.mxu0 0
      %649 = vmatpush1.bf16.xpose.msra.mxu0 0
      %650 = vmatprep.subr.bf16.mxu0 0
      %651 = vmatpush1.bf16.xpose.msra.mxu0 0
      %652 = vmatprep.subr.bf16.mxu0 0
      %653 = vmatpush1.bf16.xpose.msra.mxu0 0
      %654 = vmatprep.subr.bf16.mxu0 0
      %655 = vmatpush1.bf16.xpose.msra.mxu0 0
      %656 = vmatprep.subr.bf16.mxu0 0
      %657 = vmatpush1.bf16.xpose.msra.mxu0 0
      %658 = vmatprep.mubr.bf16.mxu0 0
      %659 = vmatmul.mubr.bf16.gmra.mrb[0].mxu0 %v621
      %v660 = vpop.f32.mrb[0].mxu0
      %v661 = vadd.f32 0.0, %v660
      %v662 = vpop.f32.mrb[0].mxu0
      %v663 = vpop.f32.mrb[0].mxu0
      %v664 = vpop.f32.mrb[0].mxu0
      %665 = vdwg.mxu0
      %v667 = vsel %vm619, %v616, 0
      %v670 = vsel %vm619, %v610, 0
      %672 = vmatprep.subr.bf16.mxu0 0
      %673 = vmatpush1.bf16.xpose.msra.mxu0 %v670
      %674 = vmatprep.subr.bf16.mxu0 0
      %675 = vmatpush1.bf16.xpose.msra.mxu0 0
      %676 = vmatprep.subr.bf16.mxu0 0
      %677 = vmatpush1.bf16.xpose.msra.mxu0 0
      %678 = vmatprep.subr.bf16.mxu0 0
      %679 = vmatpush1.bf16.xpose.msra.mxu0 0
      %680 = vmatprep.subr.bf16.mxu0 0
      %681 = vmatpush1.bf16.xpose.msra.mxu0 0
      %682 = vmatprep.subr.bf16.mxu0 0
      %683 = vmatpush1.bf16.xpose.msra.mxu0 0
      %684 = vmatprep.subr.bf16.mxu0 0
      %685 = vmatpush1.bf16.xpose.msra.mxu0 0
      %686 = vmatprep.subr.bf16.mxu0 0
      %687 = vmatpush1.bf16.xpose.msra.mxu0 0
      %688 = vmatprep.subr.bf16.mxu0 0
      %689 = vmatpush1.bf16.xpose.msra.mxu0 0
      %690 = vmatprep.subr.bf16.mxu0 0
      %691 = vmatpush1.bf16.xpose.msra.mxu0 0
      %692 = vmatprep.subr.bf16.mxu0 0
      %693 = vmatpush1.bf16.xpose.msra.mxu0 0
      %694 = vmatprep.subr.bf16.mxu0 0
      %695 = vmatpush1.bf16.xpose.msra.mxu0 0
      %696 = vmatprep.subr.bf16.mxu0 0
      %697 = vmatpush1.bf16.xpose.msra.mxu0 0
      %698 = vmatprep.subr.bf16.mxu0 0
      %699 = vmatpush1.bf16.xpose.msra.mxu0 0
      %700 = vmatprep.subr.bf16.mxu0 0
      %701 = vmatpush1.bf16.xpose.msra.mxu0 0
      %702 = vmatprep.subr.bf16.mxu0 0
      %703 = vmatpush1.bf16.xpose.msra.mxu0 0
      %704 = vmatprep.mubr.bf16.mxu0 0
      %705 = vmatmul.mubr.bf16.gmra.mrb[0].mxu0 %v667
      %v706 = vpop.f32.mrb[0].mxu0
      %v707 = vadd.f32 0.0, %v706
      %v708 = vpop.f32.mrb[0].mxu0
      %v709 = vpop.f32.mrb[0].mxu0
      %v710 = vpop.f32.mrb[0].mxu0
      %711 = vdwg.mxu0
      %v713 = vsel %vm619, %v617, 0
      %v716 = vsel %vm619, %v612, 0
      %718 = vmatprep.subr.bf16.mxu0 0
      %719 = vmatpush1.bf16.xpose.msra.mxu0 %v716
      %720 = vmatprep.subr.bf16.mxu0 0
      %721 = vmatpush1.bf16.xpose.msra.mxu0 0
      %722 = vmatprep.subr.bf16.mxu0 0
      %723 = vmatpush1.bf16.xpose.msra.mxu0 0
      %724 = vmatprep.subr.bf16.mxu0 0
      %725 = vmatpush1.bf16.xpose.msra.mxu0 0
      %726 = vmatprep.subr.bf16.mxu0 0
      %727 = vmatpush1.bf16.xpose.msra.mxu0 0
      %728 = vmatprep.subr.bf16.mxu0 0
      %729 = vmatpush1.bf16.xpose.msra.mxu0 0
      %730 = vmatprep.subr.bf16.mxu0 0
      %731 = vmatpush1.bf16.xpose.msra.mxu0 0
      %732 = vmatprep.subr.bf16.mxu0 0
      %733 = vmatpush1.bf16.xpose.msra.mxu0 0
      %734 = vmatprep.subr.bf16.mxu0 0
      %735 = vmatpush1.bf16.xpose.msra.mxu0 0
      %736 = vmatprep.subr.bf16.mxu0 0
      %737 = vmatpush1.bf16.xpose.msra.mxu0 0
      %738 = vmatprep.subr.bf16.mxu0 0
      %739 = vmatpush1.bf16.xpose.msra.mxu0 0
      %740 = vmatprep.subr.bf16.mxu0 0
      %741 = vmatpush1.bf16.xpose.msra.mxu0 0
      %742 = vmatprep.subr.bf16.mxu0 0
      %743 = vmatpush1.bf16.xpose.msra.mxu0 0
      %744 = vmatprep.subr.bf16.mxu0 0
      %745 = vmatpush1.bf16.xpose.msra.mxu0 0
      %746 = vmatprep.subr.bf16.mxu0 0
      %747 = vmatpush1.bf16.xpose.msra.mxu0 0
      %748 = vmatprep.subr.bf16.mxu0 0
      %749 = vmatpush1.bf16.xpose.msra.mxu0 0
      %750 = vmatprep.mubr.bf16.mxu0 0
      %751 = vmatmul.mubr.bf16.gmra.mrb[0].mxu0 %v713
      %v752 = vpop.f32.mrb[0].mxu0
      %v753 = vadd.f32 0.0, %v752
      %v754 = vpop.f32.mrb[0].mxu0
      %v755 = vpop.f32.mrb[0].mxu0
      %v756 = vpop.f32.mrb[0].mxu0
      %757 = vdwg.mxu0
      %v759 = vsel %vm619, %v618, 0
      %v762 = vsel %vm619, %v614, 0
      %764 = vmatprep.subr.bf16.mxu0 0
      %765 = vmatpush1.bf16.xpose.msra.mxu0 %v762
      %766 = vmatprep.subr.bf16.mxu0 0
      %767 = vmatpush1.bf16.xpose.msra.mxu0 0
      %768 = vmatprep.subr.bf16.mxu0 0
      %769 = vmatpush1.bf16.xpose.msra.mxu0 0
      %770 = vmatprep.subr.bf16.mxu0 0
      %771 = vmatpush1.bf16.xpose.msra.mxu0 0
      %772 = vmatprep.subr.bf16.mxu0 0
      %773 = vmatpush1.bf16.xpose.msra.mxu0 0
      %774 = vmatprep.subr.bf16.mxu0 0
      %775 = vmatpush1.bf16.xpose.msra.mxu0 0
      %776 = vmatprep.subr.bf16.mxu0 0
      %777 = vmatpush1.bf16.xpose.msra.mxu0 0
      %778 = vmatprep.subr.bf16.mxu0 0
      %779 = vmatpush1.bf16.xpose.msra.mxu0 0
      %780 = vmatprep.subr.bf16.mxu0 0
      %781 = vmatpush1.bf16.xpose.msra.mxu0 0
      %782 = vmatprep.subr.bf16.mxu0 0
      %783 = vmatpush1.bf16.xpose.msra.mxu0 0
      %784 = vmatprep.subr.bf16.mxu0 0
      %785 = vmatpush1.bf16.xpose.msra.mxu0 0
      %786 = vmatprep.subr.bf16.mxu0 0
      %787 = vmatpush1.bf16.xpose.msra.mxu0 0
      %788 = vmatprep.subr.bf16.mxu0 0
      %789 = vmatpush1.bf16.xpose.msra.mxu0 0
      %790 = vmatprep.subr.bf16.mxu0 0
      %791 = vmatpush1.bf16.xpose.msra.mxu0 0
      %792 = vmatprep.subr.bf16.mxu0 0
      %793 = vmatpush1.bf16.xpose.msra.mxu0 0
      %794 = vmatprep.subr.bf16.mxu0 0
      %795 = vmatpush1.bf16.xpose.msra.mxu0 0
      %796 = vmatprep.mubr.bf16.mxu0 0
      %797 = vmatmul.mubr.bf16.gmra.mrb[0].mxu0 %v759
      %v798 = vpop.f32.mrb[0].mxu0
      %v799 = vadd.f32 0.0, %v798
      %v800 = vpop.f32.mrb[0].mxu0
      %v801 = vpop.f32.mrb[0].mxu0
      %v802 = vpop.f32.mrb[0].mxu0
      %803 = vdwg.mxu0
      %v804 = vld [vmem:[#allocation4] sm:$0xff]
      %v805 = vld [vmem:[#allocation4 + $0x8] sm:$0xff]
      %v806 = vld [vmem:[#allocation4 + $0x10] sm:$0xff]
      %v807 = vld [vmem:[#allocation4 + $0x18] sm:$0xff]
      %vm808 = vcmask 130048
      %v809 = vsel %vm808, %v661, -inf
      %810 = vmax.xlane.f32.xlu0 %v809
      %v811 = vpop.xlane.xlu0 %810
      %v812 = vsel %vm808, %v707, -inf
      %813 = vmax.xlane.f32.xlu0 %v812
      %v814 = vpop.xlane.xlu0 %813
      %v815 = vsel %vm808, %v753, -inf
      %816 = vmax.xlane.f32.xlu0 %v815
      %v817 = vpop.xlane.xlu0 %816
      %v818 = vsel %vm808, %v799, -inf
      %819 = vmax.xlane.f32.xlu0 %v818
      %v820 = vpop.xlane.xlu0 %819
      %v821 = vmax.f32 %v804, %v811
      %v822 = vmax.f32 %v805, %v814
      %v823 = vmax.f32 %v806, %v817
      %v824 = vmax.f32 %v807, %v820
      %v825 = vsub.f32 %v804, %v821
      %v826 = vsub.f32 %v805, %v822
      %v827 = vsub.f32 %v806, %v823
      %v828 = vsub.f32 %v807, %v824
      %v829 = vmul.f32 %v825, 1.442695
      %v830 = vpow.pop %v829
      %v831 = vmul.f32 %v826, 1.442695
      %v832 = vpow.pop %v831
      %v833 = vmul.f32 %v827, 1.442695
      %v834 = vpow.pop %v833
      %v835 = vmul.f32 %v828, 1.442695
      %v836 = vpow.pop %v835
      %838 = vset.pattern.permute.xlu0 0
      %839 = vperm.xlu0 %838, %v821
      %v840 = vpop.permute.xlu0 %839
      %843 = vset.pattern.permute.xlu0 0
      %844 = vperm.xlu0 %843, %v822
      %v845 = vpop.permute.xlu0 %844
      %848 = vset.pattern.permute.xlu0 0
      %849 = vperm.xlu0 %848, %v823
      %v850 = vpop.permute.xlu0 %849
      %853 = vset.pattern.permute.xlu0 0
      %854 = vperm.xlu0 %853, %v824
      %v855 = vpop.permute.xlu0 %854
      %v857 = vsub.f32 %v661, %v840
      %v858 = vsub.f32 %v707, %v845
      %v859 = vsub.f32 %v753, %v850
      %v860 = vsub.f32 %v799, %v855
      %v861 = vmul.f32 %v857, 1.442695
      %v862 = vpow.pop %v861
      %v863 = vmul.f32 %v858, 1.442695
      %v864 = vpow.pop %v863
      %v865 = vmul.f32 %v859, 1.442695
      %v866 = vpow.pop %v865
      %v867 = vmul.f32 %v860, 1.442695
      %v868 = vpow.pop %v867
      %v869 = vld [vmem:[#allocation5] sm:$0xff]
      %v870 = vld [vmem:[#allocation5 + $0x8] sm:$0xff]
      %v871 = vld [vmem:[#allocation5 + $0x10] sm:$0xff]
      %v872 = vld [vmem:[#allocation5 + $0x18] sm:$0xff]
      %874 = vset.pattern.permute.xlu0 0
      %875 = vperm.xlu0 %874, %v830
      %v876 = vpop.permute.xlu0 %875
      %879 = vset.pattern.permute.xlu0 0
      %880 = vperm.xlu0 %879, %v832
      %v881 = vpop.permute.xlu0 %880
      %884 = vset.pattern.permute.xlu0 0
      %885 = vperm.xlu0 %884, %v834
      %v886 = vpop.permute.xlu0 %885
      %889 = vset.pattern.permute.xlu0 0
      %890 = vperm.xlu0 %889, %v836
      %v891 = vpop.permute.xlu0 %890
      %v893 = vmul.f32 %v876, %v869
      %v894 = vmul.f32 %v881, %v870
      %v895 = vmul.f32 %v886, %v871
      %v896 = vmul.f32 %v891, %v872
      %v897 = vsel %vm808, %v862, 0.0
      %898 = vadd.xlane.f32.xlu0 %v897
      %v899 = vpop.xlane.xlu0 %898
      %v900 = vsel %vm808, %v864, 0.0
      %901 = vadd.xlane.f32.xlu0 %v900
      %v902 = vpop.xlane.xlu0 %901
      %v903 = vsel %vm808, %v866, 0.0
      %904 = vadd.xlane.f32.xlu0 %v903
      %v905 = vpop.xlane.xlu0 %904
      %v906 = vsel %vm808, %v868, 0.0
      %907 = vadd.xlane.f32.xlu0 %v906
      %v908 = vpop.xlane.xlu0 %907
      %v909 = vadd.f32 %v893, %v899
      %v910 = vadd.f32 %v894, %v902
      %v911 = vadd.f32 %v895, %v905
      %v912 = vadd.f32 %v896, %v908
      %913 = vst [vmem:[#allocation5] sm:$0xff] %v909
      %914 = vst [vmem:[#allocation5 + $0x8] sm:$0xff] %v910
      %915 = vst [vmem:[#allocation5 + $0x10] sm:$0xff] %v911
      %916 = vst [vmem:[#allocation5 + $0x18] sm:$0xff] %v912
      %917 = vst [vmem:[#allocation4] sm:$0xff] %v821
      %918 = vst [vmem:[#allocation4 + $0x8] sm:$0xff] %v822
      %919 = vst [vmem:[#allocation4 + $0x10] sm:$0xff] %v823
      %920 = vst [vmem:[#allocation4 + $0x18] sm:$0xff] %v824
      %v921 = vpack.c.bf16 %v862, %v862
      %v922 = vpack.c.bf16 %v864, %v864
      %v923 = vpack.c.bf16 %v866, %v866
      %v924 = vpack.c.bf16 %v868, %v868
      %925 = vrot.lane.b32.xlu0 %v607, 96
      %v926 = vpop.permute.xlu0 %925
      %v929 = vsel %vm808, %v921, 0
      %931 = vmatprep.subr.bf16.mxu0 0
      %932 = vmatpush1.bf16.msra.mxu0 %v926
      %933 = vmatprep.subr.bf16.mxu0 0
      %934 = vmatpush1.bf16.msra.mxu0 0
      %935 = vmatprep.subr.bf16.mxu0 0
      %936 = vmatpush1.bf16.msra.mxu0 0
      %937 = vmatprep.subr.bf16.mxu0 0
      %938 = vmatpush1.bf16.msra.mxu0 0
      %939 = vmatprep.subr.bf16.mxu0 0
      %940 = vmatpush1.bf16.msra.mxu0 0
      %941 = vmatprep.subr.bf16.mxu0 0
      %942 = vmatpush1.bf16.msra.mxu0 0
      %943 = vmatprep.subr.bf16.mxu0 0
      %944 = vmatpush1.bf16.msra.mxu0 0
      %945 = vmatprep.subr.bf16.mxu0 0
      %946 = vmatpush1.bf16.msra.mxu0 0
      %947 = vmatprep.subr.bf16.mxu0 0
      %948 = vmatpush1.bf16.msra.mxu0 0
      %949 = vmatprep.subr.bf16.mxu0 0
      %950 = vmatpush1.bf16.msra.mxu0 0
      %951 = vmatprep.subr.bf16.mxu0 0
      %952 = vmatpush1.bf16.msra.mxu0 0
      %953 = vmatprep.subr.bf16.mxu0 0
      %954 = vmatpush1.bf16.msra.mxu0 0
      %955 = vmatprep.subr.bf16.mxu0 0
      %956 = vmatpush1.bf16.msra.mxu0 0
      %957 = vmatprep.subr.bf16.mxu0 0
      %958 = vmatpush1.bf16.msra.mxu0 0
      %959 = vmatprep.subr.bf16.mxu0 0
      %960 = vmatpush1.bf16.msra.mxu0 0
      %961 = vmatprep.subr.bf16.mxu0 0
      %962 = vmatpush1.bf16.msra.mxu0 0
      %963 = vmatprep.mubr.bf16.mxu0 0
      %964 = vmatmul.mubr.bf16.gmra.mrb[0].mxu0 %v929
      %v965 = vpop.f32.mrb[0].mxu0
      %v966 = vadd.f32 0.0, %v965
      %v967 = vpop.f32.mrb[0].mxu0
      %v968 = vpop.f32.mrb[0].mxu0
      %v969 = vpop.f32.mrb[0].mxu0
      %970 = vdwg.mxu0
      %971 = vrot.lane.b32.xlu0 %v610, 96
      %v972 = vpop.permute.xlu0 %971
      %v975 = vsel %vm808, %v922, 0
      %977 = vmatprep.subr.bf16.mxu0 0
      %978 = vmatpush1.bf16.msra.mxu0 %v972
      %979 = vmatprep.subr.bf16.mxu0 0
      %980 = vmatpush1.bf16.msra.mxu0 0
      %981 = vmatprep.subr.bf16.mxu0 0
      %982 = vmatpush1.bf16.msra.mxu0 0
      %983 = vmatprep.subr.bf16.mxu0 0
      %984 = vmatpush1.bf16.msra.mxu0 0
      %985 = vmatprep.subr.bf16.mxu0 0
      %986 = vmatpush1.bf16.msra.mxu0 0
      %987 = vmatprep.subr.bf16.mxu0 0
      %988 = vmatpush1.bf16.msra.mxu0 0
      %989 = vmatprep.subr.bf16.mxu0 0
      %990 = vmatpush1.bf16.msra.mxu0 0
      %991 = vmatprep.subr.bf16.mxu0 0
      %992 = vmatpush1.bf16.msra.mxu0 0
      %993 = vmatprep.subr.bf16.mxu0 0
      %994 = vmatpush1.bf16.msra.mxu0 0
      %995 = vmatprep.subr.bf16.mxu0 0
      %996 = vmatpush1.bf16.msra.mxu0 0
      %997 = vmatprep.subr.bf16.mxu0 0
      %998 = vmatpush1.bf16.msra.mxu0 0
      %999 = vmatprep.subr.bf16.mxu0 0
      %1000 = vmatpush1.bf16.msra.mxu0 0
      %1001 = vmatprep.subr.bf16.mxu0 0
      %1002 = vmatpush1.bf16.msra.mxu0 0
      %1003 = vmatprep.subr.bf16.mxu0 0
      %1004 = vmatpush1.bf16.msra.mxu0 0
      %1005 = vmatprep.subr.bf16.mxu0 0
      %1006 = vmatpush1.bf16.msra.mxu0 0
      %1007 = vmatprep.subr.bf16.mxu0 0
      %1008 = vmatpush1.bf16.msra.mxu0 0
      %1009 = vmatprep.mubr.bf16.mxu0 0
      %1010 = vmatmul.mubr.bf16.gmra.mrb[0].mxu0 %v975
      %v1011 = vpop.f32.mrb[0].mxu0
      %v1012 = vadd.f32 0.0, %v1011
      %v1013 = vpop.f32.mrb[0].mxu0
      %v1014 = vpop.f32.mrb[0].mxu0
      %v1015 = vpop.f32.mrb[0].mxu0
      %1016 = vdwg.mxu0
      %1017 = vrot.lane.b32.xlu0 %v612, 96
      %v1018 = vpop.permute.xlu0 %1017
      %v1021 = vsel %vm808, %v923, 0
      %1023 = vmatprep.subr.bf16.mxu0 0
      %1024 = vmatpush1.bf16.msra.mxu0 %v1018
      %1025 = vmatprep.subr.bf16.mxu0 0
      %1026 = vmatpush1.bf16.msra.mxu0 0
      %1027 = vmatprep.subr.bf16.mxu0 0
      %1028 = vmatpush1.bf16.msra.mxu0 0
      %1029 = vmatprep.subr.bf16.mxu0 0
      %1030 = vmatpush1.bf16.msra.mxu0 0
      %1031 = vmatprep.subr.bf16.mxu0 0
      %1032 = vmatpush1.bf16.msra.mxu0 0
      %1033 = vmatprep.subr.bf16.mxu0 0
      %1034 = vmatpush1.bf16.msra.mxu0 0
      %1035 = vmatprep.subr.bf16.mxu0 0
      %1036 = vmatpush1.bf16.msra.mxu0 0
      %1037 = vmatprep.subr.bf16.mxu0 0
      %1038 = vmatpush1.bf16.msra.mxu0 0
      %1039 = vmatprep.subr.bf16.mxu0 0
      %1040 = vmatpush1.bf16.msra.mxu0 0
      %1041 = vmatprep.subr.bf16.mxu0 0
      %1042 = vmatpush1.bf16.msra.mxu0 0
      %1043 = vmatprep.subr.bf16.mxu0 0
      %1044 = vmatpush1.bf16.msra.mxu0 0
      %1045 = vmatprep.subr.bf16.mxu0 0
      %1046 = vmatpush1.bf16.msra.mxu0 0
      %1047 = vmatprep.subr.bf16.mxu0 0
      %1048 = vmatpush1.bf16.msra.mxu0 0
      %1049 = vmatprep.subr.bf16.mxu0 0
      %1050 = vmatpush1.bf16.msra.mxu0 0
      %1051 = vmatprep.subr.bf16.mxu0 0
      %1052 = vmatpush1.bf16.msra.mxu0 0
      %1053 = vmatprep.subr.bf16.mxu0 0
      %1054 = vmatpush1.bf16.msra.mxu0 0
      %1055 = vmatprep.mubr.bf16.mxu0 0
      %1056 = vmatmul.mubr.bf16.gmra.mrb[0].mxu0 %v1021
      %v1057 = vpop.f32.mrb[0].mxu0
      %v1058 = vadd.f32 0.0, %v1057
      %v1059 = vpop.f32.mrb[0].mxu0
      %v1060 = vpop.f32.mrb[0].mxu0
      %v1061 = vpop.f32.mrb[0].mxu0
      %1062 = vdwg.mxu0
      %1063 = vrot.lane.b32.xlu0 %v614, 96
      %v1064 = vpop.permute.xlu0 %1063
      %v1067 = vsel %vm808, %v924, 0
      %1069 = vmatprep.subr.bf16.mxu0 0
      %1070 = vmatpush1.bf16.msra.mxu0 %v1064
      %1071 = vmatprep.subr.bf16.mxu0 0
      %1072 = vmatpush1.bf16.msra.mxu0 0
      %1073 = vmatprep.subr.bf16.mxu0 0
      %1074 = vmatpush1.bf16.msra.mxu0 0
      %1075 = vmatprep.subr.bf16.mxu0 0
      %1076 = vmatpush1.bf16.msra.mxu0 0
      %1077 = vmatprep.subr.bf16.mxu0 0
      %1078 = vmatpush1.bf16.msra.mxu0 0
      %1079 = vmatprep.subr.bf16.mxu0 0
      %1080 = vmatpush1.bf16.msra.mxu0 0
      %1081 = vmatprep.subr.bf16.mxu0 0
      %1082 = vmatpush1.bf16.msra.mxu0 0
      %1083 = vmatprep.subr.bf16.mxu0 0
      %1084 = vmatpush1.bf16.msra.mxu0 0
      %1085 = vmatprep.subr.bf16.mxu0 0
      %1086 = vmatpush1.bf16.msra.mxu0 0
      %1087 = vmatprep.subr.bf16.mxu0 0
      %1088 = vmatpush1.bf16.msra.mxu0 0
      %1089 = vmatprep.subr.bf16.mxu0 0
      %1090 = vmatpush1.bf16.msra.mxu0 0
      %1091 = vmatprep.subr.bf16.mxu0 0
      %1092 = vmatpush1.bf16.msra.mxu0 0
      %1093 = vmatprep.subr.bf16.mxu0 0
      %1094 = vmatpush1.bf16.msra.mxu0 0
      %1095 = vmatprep.subr.bf16.mxu0 0
      %1096 = vmatpush1.bf16.msra.mxu0 0
      %1097 = vmatprep.subr.bf16.mxu0 0
      %1098 = vmatpush1.bf16.msra.mxu0 0
      %1099 = vmatprep.subr.bf16.mxu0 0
      %1100 = vmatpush1.bf16.msra.mxu0 0
      %1101 = vmatprep.mubr.bf16.mxu0 0
      %1102 = vmatmul.mubr.bf16.gmra.mrb[0].mxu0 %v1067
      %v1103 = vpop.f32.mrb[0].mxu0
      %v1104 = vadd.f32 0.0, %v1103
      %v1105 = vpop.f32.mrb[0].mxu0
      %v1106 = vpop.f32.mrb[0].mxu0
      %v1107 = vpop.f32.mrb[0].mxu0
      %1108 = vdwg.mxu0
      %v1109 = vld [vmem:[#allocation3] sm:$0xff]
      %v1110 = vld [vmem:[#allocation3 + $0x8] sm:$0xff]
      %v1111 = vld [vmem:[#allocation3 + $0x10] sm:$0xff]
      %v1112 = vld [vmem:[#allocation3 + $0x18] sm:$0xff]
      %v1113 = vmul.f32 %v876, %v1109
      %v1114 = vmul.f32 %v881, %v1110
      %v1115 = vmul.f32 %v886, %v1111
      %v1116 = vmul.f32 %v891, %v1112
      %v1117 = vadd.f32 %v1113, %v966
      %v1118 = vadd.f32 %v1114, %v1012
      %v1119 = vadd.f32 %v1115, %v1058
      %v1120 = vadd.f32 %v1116, %v1104
      %1121 = vst.msk [vmem:[#allocation3] sm:$0xff] %vm619, %v1117
      %1122 = vst.msk [vmem:[#allocation3 + $0x8] sm:$0xff] %vm619, %v1118
      %1123 = vst.msk [vmem:[#allocation3 + $0x10] sm:$0xff] %vm619, %v1119
      %1124 = vst.msk [vmem:[#allocation3 + $0x18] sm:$0xff] %vm619, %v1120
      // Predicated region
      $region65: #{transformer_decoder_layer.4} parent=59 // pred_check
        %p1125 = pneg %p430
      $region66: #{transformer_decoder_layer.4} parent=59 // pred_check_branch
        %1127 = sbr.rel (%p1125) target = $region68
      $region67: #{transformer_decoder_layer.4} parent=59 // pred_region
        %v1128 = vld [vmem:[#allocation3] sm:$0xff]
        %v1129 = vld [vmem:[#allocation3 + $0x8] sm:$0xff]
        %v1130 = vld [vmem:[#allocation3 + $0x10] sm:$0xff]
        %v1131 = vld [vmem:[#allocation3 + $0x18] sm:$0xff]
        %v1132 = vld [vmem:[#allocation5] sm:$0xff]
        %v1133 = vld [vmem:[#allocation5 + $0x8] sm:$0xff]
        %v1134 = vld [vmem:[#allocation5 + $0x10] sm:$0xff]
        %v1135 = vld [vmem:[#allocation5 + $0x18] sm:$0xff]
        %1137 = vset.pattern.permute.xlu0 0
        %1138 = vperm.xlu0 %1137, %v1132
        %v1139 = vpop.permute.xlu0 %1138
        %1142 = vset.pattern.permute.xlu0 0
        %1143 = vperm.xlu0 %1142, %v1133
        %v1144 = vpop.permute.xlu0 %1143
        %1147 = vset.pattern.permute.xlu0 0
        %1148 = vperm.xlu0 %1147, %v1134
        %v1149 = vpop.permute.xlu0 %1148
        %1152 = vset.pattern.permute.xlu0 0
        %1153 = vperm.xlu0 %1152, %v1135
        %v1154 = vpop.permute.xlu0 %1153
        %v1156 = vrcp.pop %v1139
        %v1157 = vmul.f32 %v1128, %v1156
        %v1158 = vrcp.pop %v1144
        %v1159 = vmul.f32 %v1129, %v1158
        %v1160 = vrcp.pop %v1149
        %v1161 = vmul.f32 %v1130, %v1160
        %v1162 = vrcp.pop %v1154
        %v1163 = vmul.f32 %v1131, %v1162
        %v1164 = vpack.c.bf16 %v1157, %v1157
        %v1165 = vpack.c.bf16 %v1159, %v1159
        %v1166 = vpack.c.bf16 %v1161, %v1161
        %v1167 = vpack.c.bf16 %v1163, %v1163
        %1169 = vrot.lane.b32.xlu0 %v1165, 8
        %v1170 = vpop.permute.xlu0 %1169
        %1172 = vrot.lane.b32.xlu0 %v1166, 16
        %v1173 = vpop.permute.xlu0 %1172
        %1175 = vrot.lane.b32.xlu0 %v1167, 24
        %v1176 = vpop.permute.xlu0 %1175
        %v1179 = vsel %vm619, %v1164, %v1170
        %v1181 = vsel %vm808, %v1179, %v1173
        %vm1182 = vcmask 195584
        %v1184 = vsel %vm1182, %v1181, %v1176
        %v1185 = vld [vmem:[%s6] sm:$0xf]
        %v1186 = vld [vmem:[%s6 + $0x4] sm:$0xf]
        %v1187 = vld [vmem:[%s6 + $0x8] sm:$0xf]
        %v1188 = vld [vmem:[%s6 + $0xc] sm:$0xf]
        %v1189 = vld [vmem:[%s7] sm:$0x1]
        %v1191 = vlaneseq
        %v1192 = vshrl.u32 %v1191, 7
        %v1193 = vsub.s32 0, %v1192
        %v1194 = vrot.slane %v1189, %v1193
        %v1200 = vunpack.c.l.b16 %v1185
        %v1201 = vunpack.c.l.b16 %v1186
        %v1202 = vunpack.c.l.b16 %v1187
        %v1203 = vunpack.c.l.b16 %v1188
        %v1204 = vpack.c.b16 %v1201, %v1200
        %v1205 = vpack.c.b16 %v1203, %v1202
        %v1208 = vsel %vm562, %v1184, 0
        %1210 = vmatprep.subr.bf16.mxu0 0
        %1211 = vmatpush1.bf16.msra.mxu0 %v1204
        %1212 = vmatprep.subr.bf16.mxu0 0
        %1213 = vmatpush1.bf16.msra.mxu0 %v1205
        %1214 = vmatprep.subr.bf16.mxu0 0
        %1215 = vmatpush1.bf16.msra.mxu0 0
        %1216 = vmatprep.subr.bf16.mxu0 0
        %1217 = vmatpush1.bf16.msra.mxu0 0
        %1218 = vmatprep.subr.bf16.mxu0 0
        %1219 = vmatpush1.bf16.msra.mxu0 0
        %1220 = vmatprep.subr.bf16.mxu0 0
        %1221 = vmatpush1.bf16.msra.mxu0 0
        %1222 = vmatprep.subr.bf16.mxu0 0
        %1223 = vmatpush1.bf16.msra.mxu0 0
        %1224 = vmatprep.subr.bf16.mxu0 0
        %1225 = vmatpush1.bf16.msra.mxu0 0
        %1226 = vmatprep.subr.bf16.mxu0 0
        %1227 = vmatpush1.bf16.msra.mxu0 0
        %1228 = vmatprep.subr.bf16.mxu0 0
        %1229 = vmatpush1.bf16.msra.mxu0 0
        %1230 = vmatprep.subr.bf16.mxu0 0
        %1231 = vmatpush1.bf16.msra.mxu0 0
        %1232 = vmatprep.subr.bf16.mxu0 0
        %1233 = vmatpush1.bf16.msra.mxu0 0
        %1234 = vmatprep.subr.bf16.mxu0 0
        %1235 = vmatpush1.bf16.msra.mxu0 0
        %1236 = vmatprep.subr.bf16.mxu0 0
        %1237 = vmatpush1.bf16.msra.mxu0 0
        %1238 = vmatprep.subr.bf16.mxu0 0
        %1239 = vmatpush1.bf16.msra.mxu0 0
        %1240 = vmatprep.subr.bf16.mxu0 0
        %1241 = vmatpush1.bf16.msra.mxu0 0
        %1242 = vmatprep.mubr.bf16.mxu0 0
        %1243 = vmatmul.mubr.bf16.gmra.mrb[0].mxu0 %v1208
        %v1244 = vpop.f32.mrb[0].mxu0
        %v1245 = vadd.f32 %v1194, %v1244
        %v1246 = vpop.f32.mrb[0].mxu0
        %v1247 = vpop.f32.mrb[0].mxu0
        %v1248 = vpop.f32.mrb[0].mxu0
        %1249 = vdwg.mxu0
        %v1250 = vld [vmem:[%s411] sm:$0xf]
        %v1251 = vunpack.c.l.bf16 %v1250
        %v1252 = vadd.f32 %v1251, %v1245
        %v1253 = vsel %vm562, %v1252, 0.0
        %1254 = vadd.xlane.f32.xlu0 %v1253
        %v1255 = vpop.xlane.xlu0 %1254
        %v1256 = vrcp.pop 32.0
        %v1257 = vmul.f32 %v1255, %v1256
        %v1258 = vsub.f32 %v1252, %v1257
        %v1259 = vmul.f32 %v1258, %v1258
        %v1260 = vsel %vm562, %v1259, 0.0
        %1261 = vadd.xlane.f32.xlu0 %v1260
        %v1262 = vpop.xlane.xlu0 %1261
        %v1263 = vmul.f32 %v1262, %v1256
        %v1264 = vadd.f32 %v1263, 1e-05
        %v1265 = vrsqrt.pop %v1264
        %v1266 = vmul.f32 %v1258, %v1265
        %v1267 = vld [vmem:[%s8] sm:$0x1]
        %v1269 = vlaneseq
        %v1270 = vshrl.u32 %v1269, 7
        %v1271 = vsub.s32 0, %v1270
        %v1272 = vrot.slane %v1267, %v1271
        %v1274 = vmul.f32 %v1266, %v1272
        %v1275 = vld [vmem:[%s9] sm:$0x1]
        %v1277 = vlaneseq
        %v1278 = vshrl.u32 %v1277, 7
        %v1279 = vsub.s32 0, %v1278
        %v1280 = vrot.slane %v1275, %v1279
        %v1282 = vadd.f32 %v1274, %v1280
        %v1283 = vpack.c.bf16 %v1282, %v1282
        %vm1284 = vcmask 257024
        %1285 = vst.msk [vmem:[%s428] sm:$0xf] %vm1284, %v1283
      $region68: #{transformer_decoder_layer.4} parent=59 // pred_fallthru
        _
      %p1286 = scmp.lt.s32.totalorder %s26, 1
      %s1287 = scalar_select %p1286, %s26, 1
      %p1288 = scmp.lt.s32.totalorder %s27, 0
      %s1289 = scalar_select %p1288, %s27, 0
      %s1290 = sadd.s32 %s1289, %s1287
      %s1291 = smul.addr %s1290, 4
      %s1292 = scalar_lea.vmem %s10, %s1291
      // Predicated region
      $region69: #{transformer_decoder_layer.4} parent=59 // pred_check
        %p1293 = pneg %p284
      $region70: #{transformer_decoder_layer.4} parent=59 // pred_check_branch
        %1295 = sbr.rel (%p1293) target = $region72
      $region71: #{transformer_decoder_layer.4} parent=59 // pred_region
        _
      $region72: #{transformer_decoder_layer.4} parent=59 // pred_fallthru
        _
    $region60: #{transformer_decoder_layer.4} parent=5 // pred_fallthru
      _
    %p1296 = scmp.le.s32.totalorder 2, %s16
    // Predicated region
    $region73: #{transformer_decoder_layer.4} parent=5 // pred_check
      %p1297 = pneg %p1296
    $region74: #{transformer_decoder_layer.4} parent=5 // pred_check_branch
      %1299 = sbr.rel (%p1297) target = $region76
    $region75: #{transformer_decoder_layer.4} parent=5 // pred_region
      %s1300 = ssub.s32 %s16, 2
      // Predicated region
      $region77: #{transformer_decoder_layer.4} parent=75 // pred_check
        %p1301 = pneg %p290
      $region78: #{transformer_decoder_layer.4} parent=75 // pred_check_branch
        %1303 = sbr.rel (%p1301) target = $region80
      $region79: #{transformer_decoder_layer.4} parent=75 // pred_region
        %p1304 = scmp.lt.s32.totalorder %s29, 1
        %s1305 = scalar_select %p1304, %s29, 1
        %p1306 = scmp.lt.s32.totalorder %s30, 0
        %s1307 = scalar_select %p1306, %s30, 0
        %s1308 = sadd.s32 %s1307, %s1305
        %s1309 = smul.addr %s1308, 4
        %s1310 = scalar_lea.vmem %s10, %s1309
      $region80: #{transformer_decoder_layer.4} parent=75 // pred_fallthru
        _
    $region76: #{transformer_decoder_layer.4} parent=5 // pred_fallthru
      _
  $region6: #{transformer_decoder_layer.4} parent=0 // loop_footer
    %s20 = sadd.s32 1, %s16
  $region7: #{transformer_decoder_layer.4} parent=0 // loop_footer_branch
    %15 = sbr.rel target = $region3
  $region8: #{transformer_decoder_layer.4} parent=0 // loop_exit
    _

// kernel: transformer_decoder_layer.3
$region0: #{transformer_decoder_layer.3}
  #allocation0 [shape = 'u32[]', space=smem, size = 0x4, offset = 0x4, fixed_abs, tag = 'smem constant byte address 0x4 - core index']
  #allocation1 [shape = 'u32[144,128]{1,0:T(1,128)}', space=vmem, size = 0x12000, scoped, tag = 'internal scratch']
  #allocation2 [shape = 'bf16[4,8,8]{2,1,0:T(8,128)(2,1)}', space=vmem, size = 0x2000, scoped, tag = 'scratch operand']
  #allocation3 [shape = 'f32[4,8,8]{2,1,0:T(8,128)}', space=vmem, size = 0x4000, scoped, tag = 'scratch operand']
  #allocation4 [shape = 'f32[4,8,128]{2,1,0:T(8,128)}', space=vmem, size = 0x4000, scoped, tag = 'scratch operand']
  #allocation5 [shape = 'f32[4,8,128]{2,1,0:T(8,128)}', space=vmem, size = 0x4000, scoped, tag = 'scratch operand']
  %s0 = inlined_call_operand.vmem [shape: bf16[2,8,32], index: 0, kind: input, shape index: {}, may-alias: {0,1}]
  %s1 = inlined_call_operand.vmem [shape: bf16[2,8,32], index: 1, kind: input, shape index: {}, may-alias: {0,1}]
  %s2 = inlined_call_operand.vmem [shape: bf16[32,32], index: 2, kind: input, shape index: {}]
  %s3 = inlined_call_operand.vmem [shape: f32[1,32], index: 3, kind: input, shape index: {}]
  %s4 = inlined_call_operand.vmem [shape: bf16[32,64], index: 4, kind: input, shape index: {}]
  %s5 = inlined_call_operand.vmem [shape: f32[1,64], index: 5, kind: input, shape index: {}]
  %s6 = inlined_call_operand.vmem [shape: bf16[32,32], index: 6, kind: input, shape index: {}]
  %s7 = inlined_call_operand.vmem [shape: f32[1,32], index: 7, kind: input, shape index: {}]
  %s8 = inlined_call_operand.vmem [shape: f32[1,32], index: 8, kind: input, shape index: {}]
  %s9 = inlined_call_operand.vmem [shape: f32[1,32], index: 9, kind: input, shape index: {}]
  %s10 = inlined_call_operand.vmem [shape: bf16[2,8,32], index: 10, kind: output, shape index: {}]
  %s11 = sld [smem:[#allocation0]]
  $region81: #{transformer_decoder_layer.3} parent=0
    _
  %s13 = ssub.s32 1, %s11
  %s14 = scalar_select 0, %s13, %s11
  loop: start=0, step=1, limit=4
  $region2: #{transformer_decoder_layer.3} parent=0 // loop_pre_header
    _
  $region3: #{transformer_decoder_layer.3} parent=0 // loop_header
    %s16 = sphi 0, %s20
    %p17 = scmp.ge.s32.totalorder %s16, 4
    %s23 = sphi 0, %s42
    %s24 = sphi 0, %s38
    %s25 = sphi 0, %s34
    %s26 = sphi 0, %s23
    %s27 = sphi 0, %s24
    %s28 = sphi 0, %s25
    %s29 = sphi 0, %s26
    %s30 = sphi 0, %s27
    %s31 = sphi 0, %s28
    %s47 = sphi 0, %s49
    %s50 = sphi 0, %s47
    %s51 = sphi 0, %s50
    %s67 = sphi 0, %s51
    %s75 = sphi 0, %s77
    %s78 = sphi 0, %s75
    %s79 = sphi 0, %s78
    %s95 = sphi 0, %s79
    %s99 = sphi 0, %s99
    %s101 = sphi 0, %s99
    %s102 = sphi 0, %s101
    %s116 = sphi 0, %s102
    %s120 = sphi 0, %s120
    %s122 = sphi 0, %s120
    %s123 = sphi 0, %s122
    %s137 = sphi 0, %s123
    %s141 = sphi 0, %s141
    %s143 = sphi 0, %s141
    %s144 = sphi 0, %s143
    %s158 = sphi 0, %s144
    %s162 = sphi 0, %s162
    %s164 = sphi 0, %s162
    %s165 = sphi 0, %s164
    %s179 = sphi 0, %s165
    %s183 = sphi 0, %s183
    %s185 = sphi 0, %s183
    %s186 = sphi 0, %s185
    %s200 = sphi 0, %s186
    %s204 = sphi 0, %s204
    %s206 = sphi 0, %s204
    %s207 = sphi 0, %s206
    %s221 = sphi 0, %s207
    %s225 = sphi 0, %s225
    %s227 = sphi 0, %s225
    %s228 = sphi 0, %s227
    %s242 = sphi 0, %s228
    %s246 = sphi 0, %s246
    %s248 = sphi 0, %s246
    %s249 = sphi 0, %s248
    %s263 = sphi 0, %s249
    %s271 = sphi 0, %s273
    %s274 = sphi 0, %s271
    %s275 = sphi 0, %s274
    %s291 = sphi 0, %s275
  $region4: #{transformer_decoder_layer.3} parent=0 // loop_header_branch
    %19 = sbr.rel (%p17) target = $region8
  $region5: #{transformer_decoder_layer.3} parent=0 // loop_body
    %s21 = ssub.s32 %s16, 1
    %s22 = ssub.s32 %s16, 2
    %s32 = sadd.s32 1, %s25
    %p33 = scmp.ge.s32.totalorder %s32, 1
    %s34 = scalar_select %p33, 0, %s32
    %s35 = sadd.s32 1, %s24
    %s36 = scalar_select %p33, %s35, %s24
    %p37 = scmp.ge.s32.totalorder %s36, 1
    %s38 = scalar_select %p37, 0, %s36
    %s39 = sadd.s32 1, %s23
    %s40 = scalar_select %p37, %s39, %s23
    %p41 = scmp.ge.s32.totalorder %s40, 2
    %s42 = scalar_select %p41, 0, %s40
    %s43 = ssub.s32 %s23, %s42
    %s44 = ssub.s32 %s24, %s38
    %s45 = sor.u32 %s43, %s44
    %p46 = scmp.eq.s32.totalorder %s45, 0
    %s48 = sadd.s32 %s47, 1
    %s49 = scalar_select %p46, %s47, %s48
    %p52 = pneg %p46
    %p53 = scmp.eq.s32.totalorder %s16, 1
    %p54 = por %p52, %p53
    %p55 = scmp.ne.s32.totalorder %s47, %s50
    %p56 = scmp.eq.s32.totalorder %s16, 0
    %p57 = por %p55, %p56
    %p58 = scmp.ne.s32.totalorder %s47, %s50
    %p59 = scmp.eq.s32.totalorder %s21, 1
    %p60 = por %p58, %p59
    %p61 = scmp.ne.s32.totalorder %s50, %s51
    %p62 = scmp.eq.s32.totalorder %s21, 0
    %p63 = por %p61, %p62
    %p64 = scmp.ne.s32.totalorder %s50, %s51
    %p65 = scmp.eq.s32.totalorder %s22, 1
    %p66 = por %p64, %p65
    %p68 = scmp.ne.s32.totalorder %s51, %s67
    %p69 = scmp.eq.s32.totalorder %s22, 0
    %p70 = por %p68, %p69
    %s71 = ssub.s32 %s23, %s42
    %s72 = ssub.s32 %s25, %s34
    %s73 = sor.u32 %s71, %s72
    %p74 = scmp.eq.s32.totalorder %s73, 0
    %s76 = sadd.s32 %s75, 1
    %s77 = scalar_select %p74, %s75, %s76
    %p80 = pneg %p74
    %p81 = scmp.eq.s32.totalorder %s16, 1
    %p82 = por %p80, %p81
    %p83 = scmp.ne.s32.totalorder %s75, %s78
    %p84 = scmp.eq.s32.totalorder %s16, 0
    %p85 = por %p83, %p84
    %p86 = scmp.ne.s32.totalorder %s75, %s78
    %p87 = scmp.eq.s32.totalorder %s21, 1
    %p88 = por %p86, %p87
    %p89 = scmp.ne.s32.totalorder %s78, %s79
    %p90 = scmp.eq.s32.totalorder %s21, 0
    %p91 = por %p89, %p90
    %p92 = scmp.ne.s32.totalorder %s78, %s79
    %p93 = scmp.eq.s32.totalorder %s22, 1
    %p94 = por %p92, %p93
    %p96 = scmp.ne.s32.totalorder %s79, %s95
    %p97 = scmp.eq.s32.totalorder %s22, 0
    %p98 = por %p96, %p97
    %s100 = sadd.s32 %s99, 1
    %p103 = scmp.eq.s32.totalorder %s16, 1
    %p104 = scmp.ne.s32.totalorder %s99, %s101
    %p105 = scmp.eq.s32.totalorder %s16, 0
    %p106 = por %p104, %p105
    %p107 = scmp.ne.s32.totalorder %s99, %s101
    %p108 = scmp.eq.s32.totalorder %s21, 1
    %p109 = por %p107, %p108
    %p110 = scmp.ne.s32.totalorder %s101, %s102
    %p111 = scmp.eq.s32.totalorder %s21, 0
    %p112 = por %p110, %p111
    %p113 = scmp.ne.s32.totalorder %s101, %s102
    %p114 = scmp.eq.s32.totalorder %s22, 1
    %p115 = por %p113, %p114
    %p117 = scmp.ne.s32.totalorder %s102, %s116
    %p118 = scmp.eq.s32.totalorder %s22, 0
    %p119 = por %p117, %p118
    %s121 = sadd.s32 %s120, 1
    %p124 = scmp.eq.s32.totalorder %s16, 1
    %p125 = scmp.ne.s32.totalorder %s120, %s122
    %p126 = scmp.eq.s32.totalorder %s16, 0
    %p127 = por %p125, %p126
    %p128 = scmp.ne.s32.totalorder %s120, %s122
    %p129 = scmp.eq.s32.totalorder %s21, 1
    %p130 = por %p128, %p129
    %p131 = scmp.ne.s32.totalorder %s122, %s123
    %p132 = scmp.eq.s32.totalorder %s21, 0
    %p133 = por %p131, %p132
    %p134 = scmp.ne.s32.totalorder %s122, %s123
    %p135 = scmp.eq.s32.totalorder %s22, 1
    %p136 = por %p134, %p135
    %p138 = scmp.ne.s32.totalorder %s123, %s137
    %p139 = scmp.eq.s32.totalorder %s22, 0
    %p140 = por %p138, %p139
    %s142 = sadd.s32 %s141, 1
    %p145 = scmp.eq.s32.totalorder %s16, 1
    %p146 = scmp.ne.s32.totalorder %s141, %s143
    %p147 = scmp.eq.s32.totalorder %s16, 0
    %p148 = por %p146, %p147
    %p149 = scmp.ne.s32.totalorder %s141, %s143
    %p150 = scmp.eq.s32.totalorder %s21, 1
    %p151 = por %p149, %p150
    %p152 = scmp.ne.s32.totalorder %s143, %s144
    %p153 = scmp.eq.s32.totalorder %s21, 0
    %p154 = por %p152, %p153
    %p155 = scmp.ne.s32.totalorder %s143, %s144
    %p156 = scmp.eq.s32.totalorder %s22, 1
    %p157 = por %p155, %p156
    %p159 = scmp.ne.s32.totalorder %s144, %s158
    %p160 = scmp.eq.s32.totalorder %s22, 0
    %p161 = por %p159, %p160
    %s163 = sadd.s32 %s162, 1
    %p166 = scmp.eq.s32.totalorder %s16, 1
    %p167 = scmp.ne.s32.totalorder %s162, %s164
    %p168 = scmp.eq.s32.totalorder %s16, 0
    %p169 = por %p167, %p168
    %p170 = scmp.ne.s32.totalorder %s162, %s164
    %p171 = scmp.eq.s32.totalorder %s21, 1
    %p172 = por %p170, %p171
    %p173 = scmp.ne.s32.totalorder %s164, %s165
    %p174 = scmp.eq.s32.totalorder %s21, 0
    %p175 = por %p173, %p174
    %p176 = scmp.ne.s32.totalorder %s164, %s165
    %p177 = scmp.eq.s32.totalorder %s22, 1
    %p178 = por %p176, %p177
    %p180 = scmp.ne.s32.totalorder %s165, %s179
    %p181 = scmp.eq.s32.totalorder %s22, 0
    %p182 = por %p180, %p181
    %s184 = sadd.s32 %s183, 1
    %p187 = scmp.eq.s32.totalorder %s16, 1
    %p188 = scmp.ne.s32.totalorder %s183, %s185
    %p189 = scmp.eq.s32.totalorder %s16, 0
    %p190 = por %p188, %p189
    %p191 = scmp.ne.s32.totalorder %s183, %s185
    %p192 = scmp.eq.s32.totalorder %s21, 1
    %p193 = por %p191, %p192
    %p194 = scmp.ne.s32.totalorder %s185, %s186
    %p195 = scmp.eq.s32.totalorder %s21, 0
    %p196 = por %p194, %p195
    %p197 = scmp.ne.s32.totalorder %s185, %s186
    %p198 = scmp.eq.s32.totalorder %s22, 1
    %p199 = por %p197, %p198
    %p201 = scmp.ne.s32.totalorder %s186, %s200
    %p202 = scmp.eq.s32.totalorder %s22, 0
    %p203 = por %p201, %p202
    %s205 = sadd.s32 %s204, 1
    %p208 = scmp.eq.s32.totalorder %s16, 1
    %p209 = scmp.ne.s32.totalorder %s204, %s206
    %p210 = scmp.eq.s32.totalorder %s16, 0
    %p211 = por %p209, %p210
    %p212 = scmp.ne.s32.totalorder %s204, %s206
    %p213 = scmp.eq.s32.totalorder %s21, 1
    %p214 = por %p212, %p213
    %p215 = scmp.ne.s32.totalorder %s206, %s207
    %p216 = scmp.eq.s32.totalorder %s21, 0
    %p217 = por %p215, %p216
    %p218 = scmp.ne.s32.totalorder %s206, %s207
    %p219 = scmp.eq.s32.totalorder %s22, 1
    %p220 = por %p218, %p219
    %p222 = scmp.ne.s32.totalorder %s207, %s221
    %p223 = scmp.eq.s32.totalorder %s22, 0
    %p224 = por %p222, %p223
    %s226 = sadd.s32 %s225, 1
    %p229 = scmp.eq.s32.totalorder %s16, 1
    %p230 = scmp.ne.s32.totalorder %s225, %s227
    %p231 = scmp.eq.s32.totalorder %s16, 0
    %p232 = por %p230, %p231
    %p233 = scmp.ne.s32.totalorder %s225, %s227
    %p234 = scmp.eq.s32.totalorder %s21, 1
    %p235 = por %p233, %p234
    %p236 = scmp.ne.s32.totalorder %s227, %s228
    %p237 = scmp.eq.s32.totalorder %s21, 0
    %p238 = por %p236, %p237
    %p239 = scmp.ne.s32.totalorder %s227, %s228
    %p240 = scmp.eq.s32.totalorder %s22, 1
    %p241 = por %p239, %p240
    %p243 = scmp.ne.s32.totalorder %s228, %s242
    %p244 = scmp.eq.s32.totalorder %s22, 0
    %p245 = por %p243, %p244
    %s247 = sadd.s32 %s246, 1
    %p250 = scmp.eq.s32.totalorder %s16, 1
    %p251 = scmp.ne.s32.totalorder %s246, %s248
    %p252 = scmp.eq.s32.totalorder %s16, 0
    %p253 = por %p251, %p252
    %p254 = scmp.ne.s32.totalorder %s246, %s248
    %p255 = scmp.eq.s32.totalorder %s21, 1
    %p256 = por %p254, %p255
    %p257 = scmp.ne.s32.totalorder %s248, %s249
    %p258 = scmp.eq.s32.totalorder %s21, 0
    %p259 = por %p257, %p258
    %p260 = scmp.ne.s32.totalorder %s248, %s249
    %p261 = scmp.eq.s32.totalorder %s22, 1
    %p262 = por %p260, %p261
    %p264 = scmp.ne.s32.totalorder %s249, %s263
    %p265 = scmp.eq.s32.totalorder %s22, 0
    %p266 = por %p264, %p265
    %s267 = ssub.s32 %s23, %s42
    %s268 = ssub.s32 %s24, %s38
    %s269 = sor.u32 %s267, %s268
    %p270 = scmp.eq.s32.totalorder %s269, 0
    %s272 = sadd.s32 %s271, 1
    %s273 = scalar_select %p270, %s271, %s272
    %p276 = pneg %p270
    %p277 = scmp.eq.s32.totalorder %s16, 1
    %p278 = por %p276, %p277
    %p279 = scmp.ne.s32.totalorder %s271, %s274
    %p280 = scmp.eq.s32.totalorder %s16, 0
    %p281 = por %p279, %p280
    %p282 = scmp.ne.s32.totalorder %s271, %s274
    %p283 = scmp.eq.s32.totalorder %s21, 1
    %p284 = por %p282, %p283
    %p285 = scmp.ne.s32.totalorder %s274, %s275
    %p286 = scmp.eq.s32.totalorder %s21, 0
    %p287 = por %p285, %p286
    %p288 = scmp.ne.s32.totalorder %s274, %s275
    %p289 = scmp.eq.s32.totalorder %s22, 1
    %p290 = por %p288, %p289
    %p292 = scmp.ne.s32.totalorder %s275, %s291
    %p293 = scmp.eq.s32.totalorder %s22, 0
    %p294 = por %p292, %p293
    %p295 = scmp.le.s32.totalorder 1, %s16
    %p296 = scmp.lt.s32.totalorder %s16, 3
    %p297 = pnand %p295, %p296
    %p298 = pneg %p297
    // Predicated region
    $region9: #{transformer_decoder_layer.3} parent=5 // pred_check
      _
    $region10: #{transformer_decoder_layer.3} parent=5 // pred_check_branch
      %300 = sbr.rel (%p297) target = $region12
    $region11: #{transformer_decoder_layer.3} parent=5 // pred_region
      %s301 = ssub.s32 %s16, 1
      // Predicated region
      $region13: #{transformer_decoder_layer.3} parent=11 // pred_check
        %p302 = pneg %p112
      $region14: #{transformer_decoder_layer.3} parent=11 // pred_check_branch
        %304 = sbr.rel (%p302) target = $region16
      $region15: #{transformer_decoder_layer.3} parent=11 // pred_region
        _
      $region16: #{transformer_decoder_layer.3} parent=11 // pred_fallthru
        _
      // Predicated region
      $region17: #{transformer_decoder_layer.3} parent=11 // pred_check
        %p305 = pneg %p133
      $region18: #{transformer_decoder_layer.3} parent=11 // pred_check_branch
        %307 = sbr.rel (%p305) target = $region20
      $region19: #{transformer_decoder_layer.3} parent=11 // pred_region
        _
      $region20: #{transformer_decoder_layer.3} parent=11 // pred_fallthru
        _
      // Predicated region
      $region21: #{transformer_decoder_layer.3} parent=11 // pred_check
        %p308 = pneg %p154
      $region22: #{transformer_decoder_layer.3} parent=11 // pred_check_branch
        %310 = sbr.rel (%p308) target = $region24
      $region23: #{transformer_decoder_layer.3} parent=11 // pred_region
        _
      $region24: #{transformer_decoder_layer.3} parent=11 // pred_fallthru
        _
      // Predicated region
      $region25: #{transformer_decoder_layer.3} parent=11 // pred_check
        %p311 = pneg %p175
      $region26: #{transformer_decoder_layer.3} parent=11 // pred_check_branch
        %313 = sbr.rel (%p311) target = $region28
      $region27: #{transformer_decoder_layer.3} parent=11 // pred_region
        _
      $region28: #{transformer_decoder_layer.3} parent=11 // pred_fallthru
        _
      // Predicated region
      $region29: #{transformer_decoder_layer.3} parent=11 // pred_check
        %p314 = pneg %p196
      $region30: #{transformer_decoder_layer.3} parent=11 // pred_check_branch
        %316 = sbr.rel (%p314) target = $region32
      $region31: #{transformer_decoder_layer.3} parent=11 // pred_region
        _
      $region32: #{transformer_decoder_layer.3} parent=11 // pred_fallthru
        _
      // Predicated region
      $region33: #{transformer_decoder_layer.3} parent=11 // pred_check
        %p317 = pneg %p217
      $region34: #{transformer_decoder_layer.3} parent=11 // pred_check_branch
        %319 = sbr.rel (%p317) target = $region36
      $region35: #{transformer_decoder_layer.3} parent=11 // pred_region
        _
      $region36: #{transformer_decoder_layer.3} parent=11 // pred_fallthru
        _
      // Predicated region
      $region37: #{transformer_decoder_layer.3} parent=11 // pred_check
        %p320 = pneg %p238
      $region38: #{transformer_decoder_layer.3} parent=11 // pred_check_branch
        %322 = sbr.rel (%p320) target = $region40
      $region39: #{transformer_decoder_layer.3} parent=11 // pred_region
        _
      $region40: #{transformer_decoder_layer.3} parent=11 // pred_fallthru
        _
      // Predicated region
      $region41: #{transformer_decoder_layer.3} parent=11 // pred_check
        %p323 = pneg %p259
      $region42: #{transformer_decoder_layer.3} parent=11 // pred_check_branch
        %325 = sbr.rel (%p323) target = $region44
      $region43: #{transformer_decoder_layer.3} parent=11 // pred_region
        _
      $region44: #{transformer_decoder_layer.3} parent=11 // pred_fallthru
        _
    $region12: #{transformer_decoder_layer.3} parent=5 // pred_fallthru
      _
    %p326 = scmp.lt.s32.totalorder %s16, 2
    // Predicated region
    $region45: #{transformer_decoder_layer.3} parent=5 // pred_check
      %p327 = pneg %p326
    $region46: #{transformer_decoder_layer.3} parent=5 // pred_check_branch
      %329 = sbr.rel (%p327) target = $region48
    $region47: #{transformer_decoder_layer.3} parent=5 // pred_region
      // Predicated region
      $region49: #{transformer_decoder_layer.3} parent=47 // pred_check
        %p330 = pneg %p57
      $region50: #{transformer_decoder_layer.3} parent=47 // pred_check_branch
        %332 = sbr.rel (%p330) target = $region52
      $region51: #{transformer_decoder_layer.3} parent=47 // pred_region
        %p333 = scmp.lt.s32.totalorder %s23, 1
        %s334 = scalar_select %p333, %s23, 1
        %p335 = scmp.lt.s32.totalorder %s24, 0
        %s336 = scalar_select %p335, %s24, 0
        %s337 = sadd.s32 %s336, %s334
        %s338 = smul.addr %s337, 4
        %s339 = scalar_lea.vmem %s0, %s338
      $region52: #{transformer_decoder_layer.3} parent=47 // pred_fallthru
        _
      // Predicated region
      $region53: #{transformer_decoder_layer.3} parent=47 // pred_check
        %p340 = pneg %p85
      $region54: #{transformer_decoder_layer.3} parent=47 // pred_check_branch
        %342 = sbr.rel (%p340) target = $region56
      $region55: #{transformer_decoder_layer.3} parent=47 // pred_region
        %p343 = scmp.lt.s32.totalorder %s23, 1
        %s344 = scalar_select %p343, %s23, 1
        %p345 = scmp.lt.s32.totalorder %s25, 0
        %s346 = scalar_select %p345, %s25, 0
        %s347 = sadd.s32 %s346, %s344
        %s348 = smul.addr %s347, 4
        %s349 = scalar_lea.vmem %s1, %s348
      $region56: #{transformer_decoder_layer.3} parent=47 // pred_fallthru
        _
    $region48: #{transformer_decoder_layer.3} parent=5 // pred_fallthru
      _
    %p350 = scmp.le.s32.totalorder 1, %s16
    %p351 = scmp.lt.s32.totalorder %s16, 3
    %p352 = pnand %p350, %p351
    %p353 = pneg %p352
    // Predicated region
    $region57: #{transformer_decoder_layer.3} parent=5 // pred_check
      _
    $region58: #{transformer_decoder_layer.3} parent=5 // pred_check_branch
      %355 = sbr.rel (%p352) target = $region60
    $region59: #{transformer_decoder_layer.3} parent=5 // pred_region
      %s356 = ssub.s32 %s16, 1
      %p357 = scmp.lt.s32.totalorder %s26, 1
      %s358 = scalar_select %p357, %s26, 1
      %p359 = scmp.lt.s32.totalorder %s27, 0
      %s360 = scalar_select %p359, %s27, 0
      %s361 = sadd.s32 %s360, %s358
      %s362 = smul.addr %s361, 4
      %s363 = scalar_lea.vmem %s0, %s362
      %p364 = pneg %p63
      %p365 = pneg %p60
      %p366 = scmp.lt.s32.totalorder %s26, 1
      %s367 = scalar_select %p366, %s26, 1
      %p368 = scmp.lt.s32.totalorder %s28, 0
      %s369 = scalar_select %p368, %s28, 0
      %s370 = sadd.s32 %s369, %s367
      %s371 = smul.addr %s370, 4
      %s372 = scalar_lea.vmem %s1, %s371
      %p373 = pneg %p91
      %p374 = pneg %p88
      %p375 = pneg %p112
      %p376 = pneg %p109
      %p377 = pneg %p133
      %p378 = pneg %p130
      %p379 = pneg %p154
      %p380 = pneg %p151
      %p381 = pneg %p175
      %p382 = pneg %p172
      %p383 = pneg %p196
      %p384 = pneg %p193
      %p385 = pneg %p217
      %p386 = pneg %p214
      %p387 = pneg %p238
      %p388 = pneg %p235
      %p389 = pneg %p259
      %p390 = pneg %p256
      %p391 = pneg %p287
      %p392 = pneg %p284
      %p393 = scmp.lt.s32.totalorder %s26, 1
      %s394 = scalar_select %p393, %s26, 1
      %p395 = scmp.lt.s32.totalorder %s27, 0
      %s396 = scalar_select %p395, %s27, 0
      %s397 = sadd.s32 %s396, %s394
      %s398 = smul.addr %s397, 4
      %s399 = scalar_lea.vmem %s10, %s398
      %p400 = scmp.lt.s32.totalorder %s26, 1
      %s401 = scalar_select %p400, %s26, 1
      %p402 = scmp.lt.s32.totalorder %s27, 0
      %s403 = scalar_select %p402, %s27, 0
      %s404 = sadd.s32 %s403, %s401
      %s405 = smul.addr %s404, 4
      %s406 = scalar_lea.vmem %s0, %s405
      %p407 = scmp.lt.s32.totalorder %s26, 1
      %s408 = scalar_select %p407, %s26, 1
      %p409 = scmp.lt.s32.totalorder %s28, 0
      %s410 = scalar_select %p409, %s28, 0
      %s411 = sadd.s32 %s410, %s408
      %s412 = smul.addr %s411, 4
      %s413 = scalar_lea.vmem %s1, %s412
      %p414 = scmp.lt.s32.totalorder %s26, 1
      %s415 = scalar_select %p414, %s26, 1
      %p416 = scmp.lt.s32.totalorder %s27, 0
      %s417 = scalar_select %p416, %s27, 0
      %s418 = sadd.s32 %s417, %s415
      %s419 = smul.addr %s418, 4
      %s420 = scalar_lea.vmem %s10, %s419
      %p422 = scmp.eq.s32.totalorder %s28, 0
      // Predicated region
      $region61: #{transformer_decoder_layer.3} parent=59 // pred_check
        %p423 = pneg %p422
      $region62: #{transformer_decoder_layer.3} parent=59 // pred_check_branch
        %425 = sbr.rel (%p423) target = $region64
      $region63: #{transformer_decoder_layer.3} parent=59 // pred_region
        %v426 = vld [vmem:[%s406] sm:$0xf]
        %v427 = vld [vmem:[%s2] sm:$0xf]
        %v428 = vld [vmem:[%s2 + $0x4] sm:$0xf]
        %v429 = vld [vmem:[%s2 + $0x8] sm:$0xf]
        %v430 = vld [vmem:[%s2 + $0xc] sm:$0xf]
        %v431 = vld [vmem:[%s3] sm:$0x1]
        %v433 = vlaneseq
        %v434 = vshrl.u32 %v433, 7
        %v435 = vsub.s32 0, %v434
        %v436 = vrot.slane %v431, %v435
        %v442 = vunpack.c.l.b16 %v427
        %v443 = vunpack.c.l.b16 %v428
        %v444 = vunpack.c.l.b16 %v429
        %v445 = vunpack.c.l.b16 %v430
        %v446 = vpack.c.b16 %v443, %v442
        %v447 = vpack.c.b16 %v445, %v444
        %vm450 = vcmask 261120
        %v452 = vsel %vm450, %v426, 0
        %454 = vmatprep.subr.bf16.mxu0 0
        %455 = vmatpush1.bf16.msra.mxu0 %v446
        %456 = vmatprep.subr.bf16.mxu0 0
        %457 = vmatpush1.bf16.msra.mxu0 %v447
        %458 = vmatprep.subr.bf16.mxu0 0
        %459 = vmatpush1.bf16.msra.mxu0 0
        %460 = vmatprep.subr.bf16.mxu0 0
        %461 = vmatpush1.bf16.msra.mxu0 0
        %462 = vmatprep.subr.bf16.mxu0 0
        %463 = vmatpush1.bf16.msra.mxu0 0
        %464 = vmatprep.subr.bf16.mxu0 0
        %465 = vmatpush1.bf16.msra.mxu0 0
        %466 = vmatprep.subr.bf16.mxu0 0
        %467 = vmatpush1.bf16.msra.mxu0 0
        %468 = vmatprep.subr.bf16.mxu0 0
        %469 = vmatpush1.bf16.msra.mxu0 0
        %470 = vmatprep.subr.bf16.mxu0 0
        %471 = vmatpush1.bf16.msra.mxu0 0
        %472 = vmatprep.subr.bf16.mxu0 0
        %473 = vmatpush1.bf16.msra.mxu0 0
        %474 = vmatprep.subr.bf16.mxu0 0
        %475 = vmatpush1.bf16.msra.mxu0 0
        %476 = vmatprep.subr.bf16.mxu0 0
        %477 = vmatpush1.bf16.msra.mxu0 0
        %478 = vmatprep.subr.bf16.mxu0 0
        %479 = vmatpush1.bf16.msra.mxu0 0
        %480 = vmatprep.subr.bf16.mxu0 0
        %481 = vmatpush1.bf16.msra.mxu0 0
        %482 = vmatprep.subr.bf16.mxu0 0
        %483 = vmatpush1.bf16.msra.mxu0 0
        %484 = vmatprep.subr.bf16.mxu0 0
        %485 = vmatpush1.bf16.msra.mxu0 0
        %486 = vmatprep.mubr.bf16.mxu0 0
        %487 = vmatmul.mubr.bf16.gmra.mrb[0].mxu0 %v452
        %v488 = vpop.f32.mrb[0].mxu0
        %v489 = vadd.f32 %v436, %v488
        %v490 = vpop.f32.mrb[0].mxu0
        %v491 = vpop.f32.mrb[0].mxu0
        %v492 = vpop.f32.mrb[0].mxu0
        %493 = vdwg.mxu0
        %v494 = vmul.f32 %v489, 0.35355338
        %v495 = vpack.c.bf16 %v494, %v494
        %497 = vrot.lane.b32.xlu0 %v495, 120
        %v498 = vpop.permute.xlu0 %497
        %500 = vrot.lane.b32.xlu0 %v495, 112
        %v501 = vpop.permute.xlu0 %500
        %503 = vrot.lane.b32.xlu0 %v495, 104
        %v504 = vpop.permute.xlu0 %503
        %vm506 = vcmask 60416
        %507 = vst.msk [vmem:[#allocation2] sm:$0xf] %vm506, %v495
        %508 = vst.msk [vmem:[#allocation2 + $0x4] sm:$0xf] %vm506, %v498
        %509 = vst.msk [vmem:[#allocation2 + $0x8] sm:$0xf] %vm506, %v501
        %510 = vst.msk [vmem:[#allocation2 + $0xc] sm:$0xf] %vm506, %v504
        %vm511 = vcmask 64512
        %512 = vst.msk [vmem:[#allocation3] sm:$0xff] %vm511, 0.0
        %513 = vst.msk [vmem:[#allocation3 + $0x8] sm:$0xff] %vm511, 0.0
        %514 = vst.msk [vmem:[#allocation3 + $0x10] sm:$0xff] %vm511, 0.0
        %515 = vst.msk [vmem:[#allocation3 + $0x18] sm:$0xff] %vm511, 0.0
        %516 = vst [vmem:[#allocation4] sm:$0xff] -inf
        %517 = vst [vmem:[#allocation4 + $0x8] sm:$0xff] -inf
        %518 = vst [vmem:[#allocation4 + $0x10] sm:$0xff] -inf
        %519 = vst [vmem:[#allocation4 + $0x18] sm:$0xff] -inf
        %520 = vst [vmem:[#allocation5] sm:$0xff] 0.0
        %521 = vst [vmem:[#allocation5 + $0x8] sm:$0xff] 0.0
        %522 = vst [vmem:[#allocation5 + $0x10] sm:$0xff] 0.0
        %523 = vst [vmem:[#allocation5 + $0x18] sm:$0xff] 0.0
      $region64: #{transformer_decoder_layer.3} parent=59 // pred_fallthru
        _
      %v524 = vld [vmem:[%s413] sm:$0xf]
      %v525 = vld [vmem:[%s4] sm:$0xf]
      %v526 = vld [vmem:[%s4 + $0x4] sm:$0xf]
      %v527 = vld [vmem:[%s4 + $0x8] sm:$0xf]
      %v528 = vld [vmem:[%s4 + $0xc] sm:$0xf]
      %v529 = vld [vmem:[%s5] sm:$0x1]
      %v531 = vlaneseq
      %v532 = vshrl.u32 %v531, 7
      %v533 = vsub.s32 0, %v532
      %v534 = vrot.slane %v529, %v533
      %v540 = vunpack.c.l.b16 %v525
      %v541 = vunpack.c.l.b16 %v526
      %v542 = vunpack.c.l.b16 %v527
      %v543 = vunpack.c.l.b16 %v528
      %v544 = vpack.c.b16 %v541, %v540
      %v545 = vpack.c.b16 %v543, %v542
      %vm548 = vcmask 261120
      %v550 = vsel %vm548, %v524, 0
      %552 = vmatprep.subr.bf16.mxu0 0
      %553 = vmatpush1.bf16.msra.mxu0 %v544
      %554 = vmatprep.subr.bf16.mxu0 0
      %555 = vmatpush1.bf16.msra.mxu0 %v545
      %556 = vmatprep.subr.bf16.mxu0 0
      %557 = vmatpush1.bf16.msra.mxu0 0
      %558 = vmatprep.subr.bf16.mxu0 0
      %559 = vmatpush1.bf16.msra.mxu0 0
      %560 = vmatprep.subr.bf16.mxu0 0
      %561 = vmatpush1.bf16.msra.mxu0 0
      %562 = vmatprep.subr.bf16.mxu0 0
      %563 = vmatpush1.bf16.msra.mxu0 0
      %564 = vmatprep.subr.bf16.mxu0 0
      %565 = vmatpush1.bf16.msra.mxu0 0
      %566 = vmatprep.subr.bf16.mxu0 0
      %567 = vmatpush1.bf16.msra.mxu0 0
      %568 = vmatprep.subr.bf16.mxu0 0
      %569 = vmatpush1.bf16.msra.mxu0 0
      %570 = vmatprep.subr.bf16.mxu0 0
      %571 = vmatpush1.bf16.msra.mxu0 0
      %572 = vmatprep.subr.bf16.mxu0 0
      %573 = vmatpush1.bf16.msra.mxu0 0
      %574 = vmatprep.subr.bf16.mxu0 0
      %575 = vmatpush1.bf16.msra.mxu0 0
      %576 = vmatprep.subr.bf16.mxu0 0
      %577 = vmatpush1.bf16.msra.mxu0 0
      %578 = vmatprep.subr.bf16.mxu0 0
      %579 = vmatpush1.bf16.msra.mxu0 0
      %580 = vmatprep.subr.bf16.mxu0 0
      %581 = vmatpush1.bf16.msra.mxu0 0
      %582 = vmatprep.subr.bf16.mxu0 0
      %583 = vmatpush1.bf16.msra.mxu0 0
      %584 = vmatprep.mubr.bf16.mxu0 0
      %585 = vmatmul.mubr.bf16.gmra.mrb[0].mxu0 %v550
      %v586 = vpop.f32.mrb[0].mxu0
      %v587 = vadd.f32 %v534, %v586
      %v588 = vpop.f32.mrb[0].mxu0
      %v589 = vpop.f32.mrb[0].mxu0
      %v590 = vpop.f32.mrb[0].mxu0
      %591 = vdwg.mxu0
      %v592 = vpack.c.bf16 %v587, %v587
      %594 = vrot.lane.b32.xlu0 %v592, 120
      %v595 = vpop.permute.xlu0 %594
      %596 = vrot.lane.b32.xlu0 %v592, 112
      %v597 = vpop.permute.xlu0 %596
      %598 = vrot.lane.b32.xlu0 %v592, 104
      %v599 = vpop.permute.xlu0 %598
      %v600 = vld [vmem:[#allocation2] sm:$0xf]
      %v601 = vld [vmem:[#allocation2 + $0x4] sm:$0xf]
      %v602 = vld [vmem:[#allocation2 + $0x8] sm:$0xf]
      %v603 = vld [vmem:[#allocation2 + $0xc] sm:$0xf]
      %vm604 = vcmask 64512
      %v606 = vsel %vm604, %v600, 0
      %v609 = vsel %vm604, %v592, 0
      %611 = vmatprep.subr.bf16.mxu0 0
      %612 = vmatpush1.bf16.xpose.msra.mxu0 %v609
      %613 = vmatprep.subr.bf16.mxu0 0
      %614 = vmatpush1.bf16.xpose.msra.mxu0 0
      %615 = vmatprep.subr.bf16.mxu0 0
      %616 = vmatpush1.bf16.xpose.msra.mxu0 0
      %617 = vmatprep.subr.bf16.mxu0 0
      %618 = vmatpush1.bf16.xpose.msra.mxu0 0
      %619 = vmatprep.subr.bf16.mxu0 0
      %620 = vmatpush1.bf16.xpose.msra.mxu0 0
      %621 = vmatprep.subr.bf16.mxu0 0
      %622 = vmatpush1.bf16.xpose.msra.mxu0 0
      %623 = vmatprep.subr.bf16.mxu0 0
      %624 = vmatpush1.bf16.xpose.msra.mxu0 0
      %625 = vmatprep.subr.bf16.mxu0 0
      %626 = vmatpush1.bf16.xpose.msra.mxu0 0
      %627 = vmatprep.subr.bf16.mxu0 0
      %628 = vmatpush1.bf16.xpose.msra.mxu0 0
      %629 = vmatprep.subr.bf16.mxu0 0
      %630 = vmatpush1.bf16.xpose.msra.mxu0 0
      %631 = vmatprep.subr.bf16.mxu0 0
      %632 = vmatpush1.bf16.xpose.msra.mxu0 0
      %633 = vmatprep.subr.bf16.mxu0 0
      %634 = vmatpush1.bf16.xpose.msra.mxu0 0
      %635 = vmatprep.subr.bf16.mxu0 0
      %636 = vmatpush1.bf16.xpose.msra.mxu0 0
      %637 = vmatprep.subr.bf16.mxu0 0
      %638 = vmatpush1.bf16.xpose.msra.mxu0 0
      %639 = vmatprep.subr.bf16.mxu0 0
      %640 = vmatpush1.bf16.xpose.msra.mxu0 0
      %641 = vmatprep.subr.bf16.mxu0 0
      %642 = vmatpush1.bf16.xpose.msra.mxu0 0
      %643 = vmatprep.mubr.bf16.mxu0 0
      %644 = vmatmul.mubr.bf16.gmra.mrb[0].mxu0 %v606
      %v645 = vpop.f32.mrb[0].mxu0
      %v646 = vadd.f32 0.0, %v645
      %v647 = vpop.f32.mrb[0].mxu0
      %v648 = vpop.f32.mrb[0].mxu0
      %v649 = vpop.f32.mrb[0].mxu0
      %650 = vdwg.mxu0
      %v652 = vsel %vm604, %v601, 0
      %v655 = vsel %vm604, %v595, 0
      %657 = vmatprep.subr.bf16.mxu0 0
      %658 = vmatpush1.bf16.xpose.msra.mxu0 %v655
      %659 = vmatprep.subr.bf16.mxu0 0
      %660 = vmatpush1.bf16.xpose.msra.mxu0 0
      %661 = vmatprep.subr.bf16.mxu0 0
      %662 = vmatpush1.bf16.xpose.msra.mxu0 0
      %663 = vmatprep.subr.bf16.mxu0 0
      %664 = vmatpush1.bf16.xpose.msra.mxu0 0
      %665 = vmatprep.subr.bf16.mxu0 0
      %666 = vmatpush1.bf16.xpose.msra.mxu0 0
      %667 = vmatprep.subr.bf16.mxu0 0
      %668 = vmatpush1.bf16.xpose.msra.mxu0 0
      %669 = vmatprep.subr.bf16.mxu0 0
      %670 = vmatpush1.bf16.xpose.msra.mxu0 0
      %671 = vmatprep.subr.bf16.mxu0 0
      %672 = vmatpush1.bf16.xpose.msra.mxu0 0
      %673 = vmatprep.subr.bf16.mxu0 0
      %674 = vmatpush1.bf16.xpose.msra.mxu0 0
      %675 = vmatprep.subr.bf16.mxu0 0
      %676 = vmatpush1.bf16.xpose.msra.mxu0 0
      %677 = vmatprep.subr.bf16.mxu0 0
      %678 = vmatpush1.bf16.xpose.msra.mxu0 0
      %679 = vmatprep.subr.bf16.mxu0 0
      %680 = vmatpush1.bf16.xpose.msra.mxu0 0
      %681 = vmatprep.subr.bf16.mxu0 0
      %682 = vmatpush1.bf16.xpose.msra.mxu0 0
      %683 = vmatprep.subr.bf16.mxu0 0
      %684 = vmatpush1.bf16.xpose.msra.mxu0 0
      %685 = vmatprep.subr.bf16.mxu0 0
      %686 = vmatpush1.bf16.xpose.msra.mxu0 0
      %687 = vmatprep.subr.bf16.mxu0 0
      %688 = vmatpush1.bf16.xpose.msra.mxu0 0
      %689 = vmatprep.mubr.bf16.mxu0 0
      %690 = vmatmul.mubr.bf16.gmra.mrb[0].mxu0 %v652
      %v691 = vpop.f32.mrb[0].mxu0
      %v692 = vadd.f32 0.0, %v691
      %v693 = vpop.f32.mrb[0].mxu0
      %v694 = vpop.f32.mrb[0].mxu0
      %v695 = vpop.f32.mrb[0].mxu0
      %696 = vdwg.mxu0
      %v698 = vsel %vm604, %v602, 0
      %v701 = vsel %vm604, %v597, 0
      %703 = vmatprep.subr.bf16.mxu0 0
      %704 = vmatpush1.bf16.xpose.msra.mxu0 %v701
      %705 = vmatprep.subr.bf16.mxu0 0
      %706 = vmatpush1.bf16.xpose.msra.mxu0 0
      %707 = vmatprep.subr.bf16.mxu0 0
      %708 = vmatpush1.bf16.xpose.msra.mxu0 0
      %709 = vmatprep.subr.bf16.mxu0 0
      %710 = vmatpush1.bf16.xpose.msra.mxu0 0
      %711 = vmatprep.subr.bf16.mxu0 0
      %712 = vmatpush1.bf16.xpose.msra.mxu0 0
      %713 = vmatprep.subr.bf16.mxu0 0
      %714 = vmatpush1.bf16.xpose.msra.mxu0 0
      %715 = vmatprep.subr.bf16.mxu0 0
      %716 = vmatpush1.bf16.xpose.msra.mxu0 0
      %717 = vmatprep.subr.bf16.mxu0 0
      %718 = vmatpush1.bf16.xpose.msra.mxu0 0
      %719 = vmatprep.subr.bf16.mxu0 0
      %720 = vmatpush1.bf16.xpose.msra.mxu0 0
      %721 = vmatprep.subr.bf16.mxu0 0
      %722 = vmatpush1.bf16.xpose.msra.mxu0 0
      %723 = vmatprep.subr.bf16.mxu0 0
      %724 = vmatpush1.bf16.xpose.msra.mxu0 0
      %725 = vmatprep.subr.bf16.mxu0 0
      %726 = vmatpush1.bf16.xpose.msra.mxu0 0
      %727 = vmatprep.subr.bf16.mxu0 0
      %728 = vmatpush1.bf16.xpose.msra.mxu0 0
      %729 = vmatprep.subr.bf16.mxu0 0
      %730 = vmatpush1.bf16.xpose.msra.mxu0 0
      %731 = vmatprep.subr.bf16.mxu0 0
      %732 = vmatpush1.bf16.xpose.msra.mxu0 0
      %733 = vmatprep.subr.bf16.mxu0 0
      %734 = vmatpush1.bf16.xpose.msra.mxu0 0
      %735 = vmatprep.mubr.bf16.mxu0 0
      %736 = vmatmul.mubr.bf16.gmra.mrb[0].mxu0 %v698
      %v737 = vpop.f32.mrb[0].mxu0
      %v738 = vadd.f32 0.0, %v737
      %v739 = vpop.f32.mrb[0].mxu0
      %v740 = vpop.f32.mrb[0].mxu0
      %v741 = vpop.f32.mrb[0].mxu0
      %742 = vdwg.mxu0
      %v744 = vsel %vm604, %v603, 0
      %v747 = vsel %vm604, %v599, 0
      %749 = vmatprep.subr.bf16.mxu0 0
      %750 = vmatpush1.bf16.xpose.msra.mxu0 %v747
      %751 = vmatprep.subr.bf16.mxu0 0
      %752 = vmatpush1.bf16.xpose.msra.mxu0 0
      %753 = vmatprep.subr.bf16.mxu0 0
      %754 = vmatpush1.bf16.xpose.msra.mxu0 0
      %755 = vmatprep.subr.bf16.mxu0 0
      %756 = vmatpush1.bf16.xpose.msra.mxu0 0
      %757 = vmatprep.subr.bf16.mxu0 0
      %758 = vmatpush1.bf16.xpose.msra.mxu0 0
      %759 = vmatprep.subr.bf16.mxu0 0
      %760 = vmatpush1.bf16.xpose.msra.mxu0 0
      %761 = vmatprep.subr.bf16.mxu0 0
      %762 = vmatpush1.bf16.xpose.msra.mxu0 0
      %763 = vmatprep.subr.bf16.mxu0 0
      %764 = vmatpush1.bf16.xpose.msra.mxu0 0
      %765 = vmatprep.subr.bf16.mxu0 0
      %766 = vmatpush1.bf16.xpose.msra.mxu0 0
      %767 = vmatprep.subr.bf16.mxu0 0
      %768 = vmatpush1.bf16.xpose.msra.mxu0 0
      %769 = vmatprep.subr.bf16.mxu0 0
      %770 = vmatpush1.bf16.xpose.msra.mxu0 0
      %771 = vmatprep.subr.bf16.mxu0 0
      %772 = vmatpush1.bf16.xpose.msra.mxu0 0
      %773 = vmatprep.subr.bf16.mxu0 0
      %774 = vmatpush1.bf16.xpose.msra.mxu0 0
      %775 = vmatprep.subr.bf16.mxu0 0
      %776 = vmatpush1.bf16.xpose.msra.mxu0 0
      %777 = vmatprep.subr.bf16.mxu0 0
      %778 = vmatpush1.bf16.xpose.msra.mxu0 0
      %779 = vmatprep.subr.bf16.mxu0 0
      %780 = vmatpush1.bf16.xpose.msra.mxu0 0
      %781 = vmatprep.mubr.bf16.mxu0 0
      %782 = vmatmul.mubr.bf16.gmra.mrb[0].mxu0 %v744
      %v783 = vpop.f32.mrb[0].mxu0
      %v784 = vadd.f32 0.0, %v783
      %v785 = vpop.f32.mrb[0].mxu0
      %v786 = vpop.f32.mrb[0].mxu0
      %v787 = vpop.f32.mrb[0].mxu0
      %788 = vdwg.mxu0
      %v789 = vld [vmem:[#allocation4] sm:$0xff]
      %v790 = vld [vmem:[#allocation4 + $0x8] sm:$0xff]
      %v791 = vld [vmem:[#allocation4 + $0x10] sm:$0xff]
      %v792 = vld [vmem:[#allocation4 + $0x18] sm:$0xff]
      %v793 = vsel %vm604, %v646, -inf
      %794 = vmax.xlane.f32.xlu0 %v793
      %v795 = vpop.xlane.xlu0 %794
      %v796 = vsel %vm604, %v692, -inf
      %797 = vmax.xlane.f32.xlu0 %v796
      %v798 = vpop.xlane.xlu0 %797
      %v799 = vsel %vm604, %v738, -inf
      %800 = vmax.xlane.f32.xlu0 %v799
      %v801 = vpop.xlane.xlu0 %800
      %v802 = vsel %vm604, %v784, -inf
      %803 = vmax.xlane.f32.xlu0 %v802
      %v804 = vpop.xlane.xlu0 %803
      %v805 = vmax.f32 %v789, %v795
      %v806 = vmax.f32 %v790, %v798
      %v807 = vmax.f32 %v791, %v801
      %v808 = vmax.f32 %v792, %v804
      %v809 = vsub.f32 %v789, %v805
      %v810 = vsub.f32 %v790, %v806
      %v811 = vsub.f32 %v791, %v807
      %v812 = vsub.f32 %v792, %v808
      %v813 = vmul.f32 %v809, 1.442695
      %v814 = vpow.pop %v813
      %v815 = vmul.f32 %v810, 1.442695
      %v816 = vpow.pop %v815
      %v817 = vmul.f32 %v811, 1.442695
      %v818 = vpow.pop %v817
      %v819 = vmul.f32 %v812, 1.442695
      %v820 = vpow.pop %v819
      %822 = vset.pattern.permute.xlu0 0
      %823 = vperm.xlu0 %822, %v805
      %v824 = vpop.permute.xlu0 %823
      %827 = vset.pattern.permute.xlu0 0
      %828 = vperm.xlu0 %827, %v806
      %v829 = vpop.permute.xlu0 %828
      %832 = vset.pattern.permute.xlu0 0
      %833 = vperm.xlu0 %832, %v807
      %v834 = vpop.permute.xlu0 %833
      %837 = vset.pattern.permute.xlu0 0
      %838 = vperm.xlu0 %837, %v808
      %v839 = vpop.permute.xlu0 %838
      %v841 = vsub.f32 %v646, %v824
      %v842 = vsub.f32 %v692, %v829
      %v843 = vsub.f32 %v738, %v834
      %v844 = vsub.f32 %v784, %v839
      %v845 = vmul.f32 %v841, 1.442695
      %v846 = vpow.pop %v845
      %v847 = vmul.f32 %v842, 1.442695
      %v848 = vpow.pop %v847
      %v849 = vmul.f32 %v843, 1.442695
      %v850 = vpow.pop %v849
      %v851 = vmul.f32 %v844, 1.442695
      %v852 = vpow.pop %v851
      %v853 = vld [vmem:[#allocation5] sm:$0xff]
      %v854 = vld [vmem:[#allocation5 + $0x8] sm:$0xff]
      %v855 = vld [vmem:[#allocation5 + $0x10] sm:$0xff]
      %v856 = vld [vmem:[#allocation5 + $0x18] sm:$0xff]
      %858 = vset.pattern.permute.xlu0 0
      %859 = vperm.xlu0 %858, %v814
      %v860 = vpop.permute.xlu0 %859
      %863 = vset.pattern.permute.xlu0 0
      %864 = vperm.xlu0 %863, %v816
      %v865 = vpop.permute.xlu0 %864
      %868 = vset.pattern.permute.xlu0 0
      %869 = vperm.xlu0 %868, %v818
      %v870 = vpop.permute.xlu0 %869
      %873 = vset.pattern.permute.xlu0 0
      %874 = vperm.xlu0 %873, %v820
      %v875 = vpop.permute.xlu0 %874
      %v877 = vmul.f32 %v860, %v853
      %v878 = vmul.f32 %v865, %v854
      %v879 = vmul.f32 %v870, %v855
      %v880 = vmul.f32 %v875, %v856
      %v881 = vsel %vm604, %v846, 0.0
      %882 = vadd.xlane.f32.xlu0 %v881
      %v883 = vpop.xlane.xlu0 %882
      %v884 = vsel %vm604, %v848, 0.0
      %885 = vadd.xlane.f32.xlu0 %v884
      %v886 = vpop.xlane.xlu0 %885
      %v887 = vsel %vm604, %v850, 0.0
      %888 = vadd.xlane.f32.xlu0 %v887
      %v889 = vpop.xlane.xlu0 %888
      %v890 = vsel %vm604, %v852, 0.0
      %891 = vadd.xlane.f32.xlu0 %v890
      %v892 = vpop.xlane.xlu0 %891
      %v893 = vadd.f32 %v877, %v883
      %v894 = vadd.f32 %v878, %v886
      %v895 = vadd.f32 %v879, %v889
      %v896 = vadd.f32 %v880, %v892
      %897 = vst [vmem:[#allocation5] sm:$0xff] %v893
      %898 = vst [vmem:[#allocation5 + $0x8] sm:$0xff] %v894
      %899 = vst [vmem:[#allocation5 + $0x10] sm:$0xff] %v895
      %900 = vst [vmem:[#allocation5 + $0x18] sm:$0xff] %v896
      %901 = vst [vmem:[#allocation4] sm:$0xff] %v805
      %902 = vst [vmem:[#allocation4 + $0x8] sm:$0xff] %v806
      %903 = vst [vmem:[#allocation4 + $0x10] sm:$0xff] %v807
      %904 = vst [vmem:[#allocation4 + $0x18] sm:$0xff] %v808
      %v905 = vpack.c.bf16 %v846, %v846
      %v906 = vpack.c.bf16 %v848, %v848
      %v907 = vpack.c.bf16 %v850, %v850
      %v908 = vpack.c.bf16 %v852, %v852
      %909 = vrot.lane.b32.xlu0 %v592, 96
      %v910 = vpop.permute.xlu0 %909
      %v912 = vsel %vm604, %v905, 0
      %vm914 = vcmask 1043456
      %v916 = vsel %vm914, %v910, 0
      %918 = vmatprep.subr.bf16.mxu0 0
      %919 = vmatpush1.bf16.msra.mxu0 %v916
      %920 = vmatprep.subr.bf16.mxu0 0
      %921 = vmatpush1.bf16.msra.mxu0 0
      %922 = vmatprep.subr.bf16.mxu0 0
      %923 = vmatpush1.bf16.msra.mxu0 0
      %924 = vmatprep.subr.bf16.mxu0 0
      %925 = vmatpush1.bf16.msra.mxu0 0
      %926 = vmatprep.subr.bf16.mxu0 0
      %927 = vmatpush1.bf16.msra.mxu0 0
      %928 = vmatprep.subr.bf16.mxu0 0
      %929 = vmatpush1.bf16.msra.mxu0 0
      %930 = vmatprep.subr.bf16.mxu0 0
      %931 = vmatpush1.bf16.msra.mxu0 0
      %932 = vmatprep.subr.bf16.mxu0 0
      %933 = vmatpush1.bf16.msra.mxu0 0
      %934 = vmatprep.subr.bf16.mxu0 0
      %935 = vmatpush1.bf16.msra.mxu0 0
      %936 = vmatprep.subr.bf16.mxu0 0
      %937 = vmatpush1.bf16.msra.mxu0 0
      %938 = vmatprep.subr.bf16.mxu0 0
      %939 = vmatpush1.bf16.msra.mxu0 0
      %940 = vmatprep.subr.bf16.mxu0 0
      %941 = vmatpush1.bf16.msra.mxu0 0
      %942 = vmatprep.subr.bf16.mxu0 0
      %943 = vmatpush1.bf16.msra.mxu0 0
      %944 = vmatprep.subr.bf16.mxu0 0
      %945 = vmatpush1.bf16.msra.mxu0 0
      %946 = vmatprep.subr.bf16.mxu0 0
      %947 = vmatpush1.bf16.msra.mxu0 0
      %948 = vmatprep.subr.bf16.mxu0 0
      %949 = vmatpush1.bf16.msra.mxu0 0
      %950 = vmatprep.mubr.bf16.mxu0 0
      %951 = vmatmul.mubr.bf16.gmra.mrb[0].mxu0 %v912
      %v952 = vpop.f32.mrb[0].mxu0
      %v953 = vadd.f32 0.0, %v952
      %v954 = vpop.f32.mrb[0].mxu0
      %v955 = vpop.f32.mrb[0].mxu0
      %v956 = vpop.f32.mrb[0].mxu0
      %957 = vdwg.mxu0
      %958 = vrot.lane.b32.xlu0 %v595, 96
      %v959 = vpop.permute.xlu0 %958
      %v961 = vsel %vm604, %v906, 0
      %v964 = vsel %vm914, %v959, 0
      %966 = vmatprep.subr.bf16.mxu0 0
      %967 = vmatpush1.bf16.msra.mxu0 %v964
      %968 = vmatprep.subr.bf16.mxu0 0
      %969 = vmatpush1.bf16.msra.mxu0 0
      %970 = vmatprep.subr.bf16.mxu0 0
      %971 = vmatpush1.bf16.msra.mxu0 0
      %972 = vmatprep.subr.bf16.mxu0 0
      %973 = vmatpush1.bf16.msra.mxu0 0
      %974 = vmatprep.subr.bf16.mxu0 0
      %975 = vmatpush1.bf16.msra.mxu0 0
      %976 = vmatprep.subr.bf16.mxu0 0
      %977 = vmatpush1.bf16.msra.mxu0 0
      %978 = vmatprep.subr.bf16.mxu0 0
      %979 = vmatpush1.bf16.msra.mxu0 0
      %980 = vmatprep.subr.bf16.mxu0 0
      %981 = vmatpush1.bf16.msra.mxu0 0
      %982 = vmatprep.subr.bf16.mxu0 0
      %983 = vmatpush1.bf16.msra.mxu0 0
      %984 = vmatprep.subr.bf16.mxu0 0
      %985 = vmatpush1.bf16.msra.mxu0 0
      %986 = vmatprep.subr.bf16.mxu0 0
      %987 = vmatpush1.bf16.msra.mxu0 0
      %988 = vmatprep.subr.bf16.mxu0 0
      %989 = vmatpush1.bf16.msra.mxu0 0
      %990 = vmatprep.subr.bf16.mxu0 0
      %991 = vmatpush1.bf16.msra.mxu0 0
      %992 = vmatprep.subr.bf16.mxu0 0
      %993 = vmatpush1.bf16.msra.mxu0 0
      %994 = vmatprep.subr.bf16.mxu0 0
      %995 = vmatpush1.bf16.msra.mxu0 0
      %996 = vmatprep.subr.bf16.mxu0 0
      %997 = vmatpush1.bf16.msra.mxu0 0
      %998 = vmatprep.mubr.bf16.mxu0 0
      %999 = vmatmul.mubr.bf16.gmra.mrb[0].mxu0 %v961
      %v1000 = vpop.f32.mrb[0].mxu0
      %v1001 = vadd.f32 0.0, %v1000
      %v1002 = vpop.f32.mrb[0].mxu0
      %v1003 = vpop.f32.mrb[0].mxu0
      %v1004 = vpop.f32.mrb[0].mxu0
      %1005 = vdwg.mxu0
      %1006 = vrot.lane.b32.xlu0 %v597, 96
      %v1007 = vpop.permute.xlu0 %1006
      %v1009 = vsel %vm604, %v907, 0
      %v1012 = vsel %vm914, %v1007, 0
      %1014 = vmatprep.subr.bf16.mxu0 0
      %1015 = vmatpush1.bf16.msra.mxu0 %v1012
      %1016 = vmatprep.subr.bf16.mxu0 0
      %1017 = vmatpush1.bf16.msra.mxu0 0
      %1018 = vmatprep.subr.bf16.mxu0 0
      %1019 = vmatpush1.bf16.msra.mxu0 0
      %1020 = vmatprep.subr.bf16.mxu0 0
      %1021 = vmatpush1.bf16.msra.mxu0 0
      %1022 = vmatprep.subr.bf16.mxu0 0
      %1023 = vmatpush1.bf16.msra.mxu0 0
      %1024 = vmatprep.subr.bf16.mxu0 0
      %1025 = vmatpush1.bf16.msra.mxu0 0
      %1026 = vmatprep.subr.bf16.mxu0 0
      %1027 = vmatpush1.bf16.msra.mxu0 0
      %1028 = vmatprep.subr.bf16.mxu0 0
      %1029 = vmatpush1.bf16.msra.mxu0 0
      %1030 = vmatprep.subr.bf16.mxu0 0
      %1031 = vmatpush1.bf16.msra.mxu0 0
      %1032 = vmatprep.subr.bf16.mxu0 0
      %1033 = vmatpush1.bf16.msra.mxu0 0
      %1034 = vmatprep.subr.bf16.mxu0 0
      %1035 = vmatpush1.bf16.msra.mxu0 0
      %1036 = vmatprep.subr.bf16.mxu0 0
      %1037 = vmatpush1.bf16.msra.mxu0 0
      %1038 = vmatprep.subr.bf16.mxu0 0
      %1039 = vmatpush1.bf16.msra.mxu0 0
      %1040 = vmatprep.subr.bf16.mxu0 0
      %1041 = vmatpush1.bf16.msra.mxu0 0
      %1042 = vmatprep.subr.bf16.mxu0 0
      %1043 = vmatpush1.bf16.msra.mxu0 0
      %1044 = vmatprep.subr.bf16.mxu0 0
      %1045 = vmatpush1.bf16.msra.mxu0 0
      %1046 = vmatprep.mubr.bf16.mxu0 0
      %1047 = vmatmul.mubr.bf16.gmra.mrb[0].mxu0 %v1009
      %v1048 = vpop.f32.mrb[0].mxu0
      %v1049 = vadd.f32 0.0, %v1048
      %v1050 = vpop.f32.mrb[0].mxu0
      %v1051 = vpop.f32.mrb[0].mxu0
      %v1052 = vpop.f32.mrb[0].mxu0
      %1053 = vdwg.mxu0
      %1054 = vrot.lane.b32.xlu0 %v599, 96
      %v1055 = vpop.permute.xlu0 %1054
      %v1057 = vsel %vm604, %v908, 0
      %v1060 = vsel %vm914, %v1055, 0
      %1062 = vmatprep.subr.bf16.mxu0 0
      %1063 = vmatpush1.bf16.msra.mxu0 %v1060
      %1064 = vmatprep.subr.bf16.mxu0 0
      %1065 = vmatpush1.bf16.msra.mxu0 0
      %1066 = vmatprep.subr.bf16.mxu0 0
      %1067 = vmatpush1.bf16.msra.mxu0 0
      %1068 = vmatprep.subr.bf16.mxu0 0
      %1069 = vmatpush1.bf16.msra.mxu0 0
      %1070 = vmatprep.subr.bf16.mxu0 0
      %1071 = vmatpush1.bf16.msra.mxu0 0
      %1072 = vmatprep.subr.bf16.mxu0 0
      %1073 = vmatpush1.bf16.msra.mxu0 0
      %1074 = vmatprep.subr.bf16.mxu0 0
      %1075 = vmatpush1.bf16.msra.mxu0 0
      %1076 = vmatprep.subr.bf16.mxu0 0
      %1077 = vmatpush1.bf16.msra.mxu0 0
      %1078 = vmatprep.subr.bf16.mxu0 0
      %1079 = vmatpush1.bf16.msra.mxu0 0
      %1080 = vmatprep.subr.bf16.mxu0 0
      %1081 = vmatpush1.bf16.msra.mxu0 0
      %1082 = vmatprep.subr.bf16.mxu0 0
      %1083 = vmatpush1.bf16.msra.mxu0 0
      %1084 = vmatprep.subr.bf16.mxu0 0
      %1085 = vmatpush1.bf16.msra.mxu0 0
      %1086 = vmatprep.subr.bf16.mxu0 0
      %1087 = vmatpush1.bf16.msra.mxu0 0
      %1088 = vmatprep.subr.bf16.mxu0 0
      %1089 = vmatpush1.bf16.msra.mxu0 0
      %1090 = vmatprep.subr.bf16.mxu0 0
      %1091 = vmatpush1.bf16.msra.mxu0 0
      %1092 = vmatprep.subr.bf16.mxu0 0
      %1093 = vmatpush1.bf16.msra.mxu0 0
      %1094 = vmatprep.mubr.bf16.mxu0 0
      %1095 = vmatmul.mubr.bf16.gmra.mrb[0].mxu0 %v1057
      %v1096 = vpop.f32.mrb[0].mxu0
      %v1097 = vadd.f32 0.0, %v1096
      %v1098 = vpop.f32.mrb[0].mxu0
      %v1099 = vpop.f32.mrb[0].mxu0
      %v1100 = vpop.f32.mrb[0].mxu0
      %1101 = vdwg.mxu0
      %v1102 = vld [vmem:[#allocation3] sm:$0xff]
      %v1103 = vld [vmem:[#allocation3 + $0x8] sm:$0xff]
      %v1104 = vld [vmem:[#allocation3 + $0x10] sm:$0xff]
      %v1105 = vld [vmem:[#allocation3 + $0x18] sm:$0xff]
      %v1106 = vmul.f32 %v860, %v1102
      %v1107 = vmul.f32 %v865, %v1103
      %v1108 = vmul.f32 %v870, %v1104
      %v1109 = vmul.f32 %v875, %v1105
      %v1110 = vadd.f32 %v1106, %v953
      %v1111 = vadd.f32 %v1107, %v1001
      %v1112 = vadd.f32 %v1108, %v1049
      %v1113 = vadd.f32 %v1109, %v1097
      %1114 = vst.msk [vmem:[#allocation3] sm:$0xff] %vm604, %v1110
      %1115 = vst.msk [vmem:[#allocation3 + $0x8] sm:$0xff] %vm604, %v1111
      %1116 = vst.msk [vmem:[#allocation3 + $0x10] sm:$0xff] %vm604, %v1112
      %1117 = vst.msk [vmem:[#allocation3 + $0x18] sm:$0xff] %vm604, %v1113
      // Predicated region
      $region65: #{transformer_decoder_layer.3} parent=59 // pred_check
        %p1118 = pneg %p422
      $region66: #{transformer_decoder_layer.3} parent=59 // pred_check_branch
        %1120 = sbr.rel (%p1118) target = $region68
      $region67: #{transformer_decoder_layer.3} parent=59 // pred_region
        %v1121 = vld [vmem:[#allocation3] sm:$0xff]
        %v1122 = vld [vmem:[#allocation3 + $0x8] sm:$0xff]
        %v1123 = vld [vmem:[#allocation3 + $0x10] sm:$0xff]
        %v1124 = vld [vmem:[#allocation3 + $0x18] sm:$0xff]
        %v1125 = vld [vmem:[#allocation5] sm:$0xff]
        %v1126 = vld [vmem:[#allocation5 + $0x8] sm:$0xff]
        %v1127 = vld [vmem:[#allocation5 + $0x10] sm:$0xff]
        %v1128 = vld [vmem:[#allocation5 + $0x18] sm:$0xff]
        %1130 = vset.pattern.permute.xlu0 0
        %1131 = vperm.xlu0 %1130, %v1125
        %v1132 = vpop.permute.xlu0 %1131
        %1135 = vset.pattern.permute.xlu0 0
        %1136 = vperm.xlu0 %1135, %v1126
        %v1137 = vpop.permute.xlu0 %1136
        %1140 = vset.pattern.permute.xlu0 0
        %1141 = vperm.xlu0 %1140, %v1127
        %v1142 = vpop.permute.xlu0 %1141
        %1145 = vset.pattern.permute.xlu0 0
        %1146 = vperm.xlu0 %1145, %v1128
        %v1147 = vpop.permute.xlu0 %1146
        %v1149 = vrcp.pop %v1132
        %v1150 = vmul.f32 %v1121, %v1149
        %v1151 = vrcp.pop %v1137
        %v1152 = vmul.f32 %v1122, %v1151
        %v1153 = vrcp.pop %v1142
        %v1154 = vmul.f32 %v1123, %v1153
        %v1155 = vrcp.pop %v1147
        %v1156 = vmul.f32 %v1124, %v1155
        %v1157 = vpack.c.bf16 %v1150, %v1150
        %v1158 = vpack.c.bf16 %v1152, %v1152
        %v1159 = vpack.c.bf16 %v1154, %v1154
        %v1160 = vpack.c.bf16 %v1156, %v1156
        %1162 = vrot.lane.b32.xlu0 %v1158, 8
        %v1163 = vpop.permute.xlu0 %1162
        %1165 = vrot.lane.b32.xlu0 %v1159, 16
        %v1166 = vpop.permute.xlu0 %1165
        %1168 = vrot.lane.b32.xlu0 %v1160, 24
        %v1169 = vpop.permute.xlu0 %1168
        %v1172 = vsel %vm604, %v1157, %v1163
        %vm1173 = vcmask 130048
        %v1175 = vsel %vm1173, %v1172, %v1166
        %vm1176 = vcmask 195584
        %v1178 = vsel %vm1176, %v1175, %v1169
        %v1179 = vld [vmem:[%s6] sm:$0xf]
        %v1180 = vld [vmem:[%s6 + $0x4] sm:$0xf]
        %v1181 = vld [vmem:[%s6 + $0x8] sm:$0xf]
        %v1182 = vld [vmem:[%s6 + $0xc] sm:$0xf]
        %v1183 = vld [vmem:[%s7] sm:$0x1]
        %v1185 = vlaneseq
        %v1186 = vshrl.u32 %v1185, 7
        %v1187 = vsub.s32 0, %v1186
        %v1188 = vrot.slane %v1183, %v1187
        %v1194 = vunpack.c.l.b16 %v1179
        %v1195 = vunpack.c.l.b16 %v1180
        %v1196 = vunpack.c.l.b16 %v1181
        %v1197 = vunpack.c.l.b16 %v1182
        %v1198 = vpack.c.b16 %v1195, %v1194
        %v1199 = vpack.c.b16 %v1197, %v1196
        %v1202 = vsel %vm548, %v1178, 0
        %1204 = vmatprep.subr.bf16.mxu0 0
        %1205 = vmatpush1.bf16.msra.mxu0 %v1198
        %1206 = vmatprep.subr.bf16.mxu0 0
        %1207 = vmatpush1.bf16.msra.mxu0 %v1199
        %1208 = vmatprep.subr.bf16.mxu0 0
        %1209 = vmatpush1.bf16.msra.mxu0 0
        %1210 = vmatprep.subr.bf16.mxu0 0
        %1211 = vmatpush1.bf16.msra.mxu0 0
        %1212 = vmatprep.subr.bf16.mxu0 0
        %1213 = vmatpush1.bf16.msra.mxu0 0
        %1214 = vmatprep.subr.bf16.mxu0 0
        %1215 = vmatpush1.bf16.msra.mxu0 0
        %1216 = vmatprep.subr.bf16.mxu0 0
        %1217 = vmatpush1.bf16.msra.mxu0 0
        %1218 = vmatprep.subr.bf16.mxu0 0
        %1219 = vmatpush1.bf16.msra.mxu0 0
        %1220 = vmatprep.subr.bf16.mxu0 0
        %1221 = vmatpush1.bf16.msra.mxu0 0
        %1222 = vmatprep.subr.bf16.mxu0 0
        %1223 = vmatpush1.bf16.msra.mxu0 0
        %1224 = vmatprep.subr.bf16.mxu0 0
        %1225 = vmatpush1.bf16.msra.mxu0 0
        %1226 = vmatprep.subr.bf16.mxu0 0
        %1227 = vmatpush1.bf16.msra.mxu0 0
        %1228 = vmatprep.subr.bf16.mxu0 0
        %1229 = vmatpush1.bf16.msra.mxu0 0
        %1230 = vmatprep.subr.bf16.mxu0 0
        %1231 = vmatpush1.bf16.msra.mxu0 0
        %1232 = vmatprep.subr.bf16.mxu0 0
        %1233 = vmatpush1.bf16.msra.mxu0 0
        %1234 = vmatprep.subr.bf16.mxu0 0
        %1235 = vmatpush1.bf16.msra.mxu0 0
        %1236 = vmatprep.mubr.bf16.mxu0 0
        %1237 = vmatmul.mubr.bf16.gmra.mrb[0].mxu0 %v1202
        %v1238 = vpop.f32.mrb[0].mxu0
        %v1239 = vadd.f32 %v1188, %v1238
        %v1240 = vpop.f32.mrb[0].mxu0
        %v1241 = vpop.f32.mrb[0].mxu0
        %v1242 = vpop.f32.mrb[0].mxu0
        %1243 = vdwg.mxu0
        %v1244 = vld [vmem:[%s406] sm:$0xf]
        %v1245 = vunpack.c.l.bf16 %v1244
        %v1246 = vadd.f32 %v1245, %v1239
        %v1247 = vsel %vm548, %v1246, 0.0
        %1248 = vadd.xlane.f32.xlu0 %v1247
        %v1249 = vpop.xlane.xlu0 %1248
        %v1250 = vrcp.pop 32.0
        %v1251 = vmul.f32 %v1249, %v1250
        %v1252 = vsub.f32 %v1246, %v1251
        %v1253 = vmul.f32 %v1252, %v1252
        %v1254 = vsel %vm548, %v1253, 0.0
        %1255 = vadd.xlane.f32.xlu0 %v1254
        %v1256 = vpop.xlane.xlu0 %1255
        %v1257 = vmul.f32 %v1256, %v1250
        %v1258 = vadd.f32 %v1257, 1e-05
        %v1259 = vrsqrt.pop %v1258
        %v1260 = vmul.f32 %v1252, %v1259
        %v1261 = vld [vmem:[%s8] sm:$0x1]
        %v1263 = vlaneseq
        %v1264 = vshrl.u32 %v1263, 7
        %v1265 = vsub.s32 0, %v1264
        %v1266 = vrot.slane %v1261, %v1265
        %v1268 = vmul.f32 %v1260, %v1266
        %v1269 = vld [vmem:[%s9] sm:$0x1]
        %v1271 = vlaneseq
        %v1272 = vshrl.u32 %v1271, 7
        %v1273 = vsub.s32 0, %v1272
        %v1274 = vrot.slane %v1269, %v1273
        %v1276 = vadd.f32 %v1268, %v1274
        %v1277 = vpack.c.bf16 %v1276, %v1276
        %vm1278 = vcmask 257024
        %1279 = vst.msk [vmem:[%s420] sm:$0xf] %vm1278, %v1277
      $region68: #{transformer_decoder_layer.3} parent=59 // pred_fallthru
        _
      %p1280 = scmp.lt.s32.totalorder %s26, 1
      %s1281 = scalar_select %p1280, %s26, 1
      %p1282 = scmp.lt.s32.totalorder %s27, 0
      %s1283 = scalar_select %p1282, %s27, 0
      %s1284 = sadd.s32 %s1283, %s1281
      %s1285 = smul.addr %s1284, 4
      %s1286 = scalar_lea.vmem %s10, %s1285
      // Predicated region
      $region69: #{transformer_decoder_layer.3} parent=59 // pred_check
        %p1287 = pneg %p284
      $region70: #{transformer_decoder_layer.3} parent=59 // pred_check_branch
        %1289 = sbr.rel (%p1287) target = $region72
      $region71: #{transformer_decoder_layer.3} parent=59 // pred_region
        _
      $region72: #{transformer_decoder_layer.3} parent=59 // pred_fallthru
        _
    $region60: #{transformer_decoder_layer.3} parent=5 // pred_fallthru
      _
    %p1290 = scmp.le.s32.totalorder 2, %s16
    // Predicated region
    $region73: #{transformer_decoder_layer.3} parent=5 // pred_check
      %p1291 = pneg %p1290
    $region74: #{transformer_decoder_layer.3} parent=5 // pred_check_branch
      %1293 = sbr.rel (%p1291) target = $region76
    $region75: #{transformer_decoder_layer.3} parent=5 // pred_region
      %s1294 = ssub.s32 %s16, 2
      // Predicated region
      $region77: #{transformer_decoder_layer.3} parent=75 // pred_check
        %p1295 = pneg %p290
      $region78: #{transformer_decoder_layer.3} parent=75 // pred_check_branch
        %1297 = sbr.rel (%p1295) target = $region80
      $region79: #{transformer_decoder_layer.3} parent=75 // pred_region
        %p1298 = scmp.lt.s32.totalorder %s29, 1
        %s1299 = scalar_select %p1298, %s29, 1
        %p1300 = scmp.lt.s32.totalorder %s30, 0
        %s1301 = scalar_select %p1300, %s30, 0
        %s1302 = sadd.s32 %s1301, %s1299
        %s1303 = smul.addr %s1302, 4
        %s1304 = scalar_lea.vmem %s10, %s1303
      $region80: #{transformer_decoder_layer.3} parent=75 // pred_fallthru
        _
    $region76: #{transformer_decoder_layer.3} parent=5 // pred_fallthru
      _
  $region6: #{transformer_decoder_layer.3} parent=0 // loop_footer
    %s20 = sadd.s32 1, %s16
  $region7: #{transformer_decoder_layer.3} parent=0 // loop_footer_branch
    %15 = sbr.rel target = $region3
  $region8: #{transformer_decoder_layer.3} parent=0 // loop_exit
    _

</llo_original>
